<compile_context>
chip_gen: v7x
topology: tpu7x:2x2x1
jax: 0.10.0
libtpu: 0.0.40
codegen_flags: <defaults>
</compile_context>

<pallas_src>
import functools

import numpy as np
import jax
import jax.numpy as jnp
from jax import lax
from jax.experimental import pallas as pl
from jax.experimental.pallas import tpu as pltpu


# --------------------------------------------------------------------------
# Pallas kernel 1: fused GEMM + bias + optional ReLU (full-K, full-N tile).
# --------------------------------------------------------------------------
def _mm_bias_act_kernel(x_ref, w_ref, b_ref, o_ref, *, relu):
    y = jnp.dot(x_ref[...], w_ref[...], preferred_element_type=jnp.float32)
    y = y + b_ref[...]
    if relu:
        y = jnp.maximum(y, 0.0)
    o_ref[...] = y.astype(o_ref.dtype)


def _pick_tm(m, max_tm=1024):
    """Row tile: full M when small, else the largest multiple-of-8 divisor."""
    if m <= max_tm:
        return m
    for tm in range(max_tm, 7, -8):
        if m % tm == 0:
            return tm
    return 256  # fallback: pad rows


def matmul_bias(x, w, b, relu=True):
    """x:(M,K) bf16, w:(K,N) bf16, b:(1,N) f32 -> (M,N) bf16.

    Single full-K / full-N block (no HBM padding); the grid only walks row
    tiles, so the weight and bias blocks are fetched once and stay resident.
    """
    m, k = x.shape
    n = w.shape[1]
    tm = _pick_tm(m)
    mp = (m + tm - 1) // tm * tm
    if mp != m:
        x = jnp.pad(x, ((0, mp - m), (0, 0)))
    out = pl.pallas_call(
        functools.partial(_mm_bias_act_kernel, relu=relu),
        out_shape=jax.ShapeDtypeStruct((mp, n), jnp.bfloat16),
        grid_spec=pltpu.PrefetchScalarGridSpec(
            num_scalar_prefetch=0,
            grid=(mp // tm,),
            in_specs=[
                pl.BlockSpec((tm, k), lambda i: (i, 0)),
                pl.BlockSpec((k, n), lambda i: (0, 0)),
                pl.BlockSpec((1, n), lambda i: (0, 0)),
            ],
            out_specs=pl.BlockSpec((tm, n), lambda i: (i, 0)),
        ),
        compiler_params=pltpu.CompilerParams(
            dimension_semantics=("parallel",)),
    )(x, w, b)
    return out[:m] if mp != m else out


# --------------------------------------------------------------------------
# Pallas kernel 2: stride-1 KxK conv with in-kernel im2col.
#
# The image is padded along H by (pad+1) zero rows on each side and flattened
# to (Hp*W, Cin).  For output flat row m = r*W + c, the (kh, kw) tap reads
# padded flat row  m + (kh+1)*W + (kw-pad)  -- a *static* shift, so each tap
# is a statically shifted slice of the VMEM-resident image.  H borders are
# handled by the zero rows; W borders by a per-tap column mask.
# --------------------------------------------------------------------------
def _conv_kxk_kernel(x_ref, w_ref, b_ref, o_ref, *, kz, pad, width, cin, relu):
    m = o_ref.shape[0]
    col = lax.broadcasted_iota(jnp.int32, (m, 1), 0) % width
    acc = jnp.broadcast_to(b_ref[...], o_ref.shape).astype(jnp.float32)
    for kh in range(kz):
        for kw in range(kz):
            dw = kw - pad
            xs = x_ref[pl.ds((kh + 1) * width + dw, m), :]
            if dw != 0:
                valid = (col >= max(0, -dw)) & (col < width - max(0, dw))
                xs = jnp.where(valid, xs, jnp.zeros_like(xs))
            wk = w_ref[pl.ds((kh * kz + kw) * cin, cin), :]
            acc = acc + jnp.dot(xs, wk, preferred_element_type=jnp.float32)
    if relu:
        acc = jnp.maximum(acc, 0.0)
    o_ref[...] = acc.astype(o_ref.dtype)


def conv2d_same(x, packed, kz, pad, relu=True):
    """NHWC bf16, stride-1 'same' KxK conv, fused bias+ReLU, one image/step."""
    n, h, w, cin = x.shape
    cout = packed["b"].shape[-1]
    m = h * w
    hp = h + 2 * (pad + 1)
    xp = jnp.pad(x, ((0, 0), (pad + 1, pad + 1), (0, 0), (0, 0)))
    xp = xp.reshape(n, hp * w, cin)
    out = pl.pallas_call(
        functools.partial(_conv_kxk_kernel, kz=kz, pad=pad, width=w,
                          cin=cin, relu=relu),
        out_shape=jax.ShapeDtypeStruct((n, m, cout), jnp.bfloat16),
        grid_spec=pltpu.PrefetchScalarGridSpec(
            num_scalar_prefetch=0,
            grid=(n,),
            in_specs=[
                pl.BlockSpec((None, hp * w, cin), lambda b: (b, 0, 0)),
                pl.BlockSpec((kz * kz * cin, cout), lambda b: (0, 0)),
                pl.BlockSpec((1, cout), lambda b: (0, 0)),
            ],
            out_specs=pl.BlockSpec((None, m, cout), lambda b: (b, 0, 0)),
        ),
        compiler_params=pltpu.CompilerParams(
            dimension_semantics=("parallel",),
            vmem_limit_bytes=32 * 1024 * 1024),
    )(xp, packed["w"], packed["b"])
    return out.reshape(n, h, w, cout)


def conv1x1(x, packed, relu=True):
    n, h, w, cin = x.shape
    cout = packed["b"].shape[-1]
    y = matmul_bias(x.reshape(n * h * w, cin), packed["w"], packed["b"], relu)
    return y.reshape(n, h, w, cout)


def conv2d_im2col(x, packed, kz, stride, pad, relu=True):
    """General conv via bf16 im2col + GEMM (only used for the 7x7 s2 stem)."""
    n, h, w, cin = x.shape
    cout = packed["b"].shape[-1]
    xp = jnp.pad(x, ((0, 0), (pad, pad), (pad, pad), (0, 0)))
    oh = (h + 2 * pad - kz) // stride + 1
    ow = (w + 2 * pad - kz) // stride + 1
    cols = []
    for kh in range(kz):
        for kw in range(kz):
            cols.append(lax.slice(
                xp, (0, kh, kw, 0),
                (n, kh + (oh - 1) * stride + 1, kw + (ow - 1) * stride + 1, cin),
                (1, stride, stride, 1)))
    patches = jnp.concatenate(cols, axis=-1).reshape(n * oh * ow, kz * kz * cin)
    y = matmul_bias(patches, packed["w"], packed["b"], relu)
    return y.reshape(n, oh, ow, cout)


# --------------------------------------------------------------------------
# Cheap glue kept in plain JAX (bf16 in/out).
# --------------------------------------------------------------------------
def max_pool(x, k, s, p):
    return lax.reduce_window(
        x, jnp.asarray(-jnp.inf, x.dtype), lax.max,
        (1, k, k, 1), (1, s, s, 1),
        ((0, 0), (p, p), (p, p), (0, 0)))


def avg_pool(x, k, s):
    out = lax.reduce_window(
        x.astype(jnp.float32), 0.0, lax.add,
        (1, k, k, 1), (1, s, s, 1),
        ((0, 0), (0, 0), (0, 0), (0, 0)))
    return out / float(k * k)


def lrn_size2(x, alpha=1e-4, beta=0.75, k=1.0):
    # PyTorch LocalResponseNorm(size=2): mean of x^2 over channels [c-1, c]
    # (zero pad below), then x / (k + alpha * mean)^beta.  Computed in f32
    # (the 1 + 1e-4*x^2 term underflows bf16 precision); IO stays bf16.
    xf = x.astype(jnp.float32)
    sq = xf * xf
    prev = jnp.pad(sq, ((0, 0), (0, 0), (0, 0), (1, 0)))[..., :-1]
    div = (sq + prev) * 0.5
    return (xf / jnp.power(k + alpha * div, beta)).astype(x.dtype)


# --------------------------------------------------------------------------
# Deterministic parameter construction (mimics spectral_norm(Conv2d)),
# followed by one-time bf16 weight packing (no padding).
# --------------------------------------------------------------------------
def spectral_normalize(w, key, n_iter=1, eps=1e-12):
    cout = w.shape[0]
    wmat = w.reshape(cout, -1)
    u = jax.random.normal(key, (cout,), jnp.float32)
    u = u / (jnp.linalg.norm(u) + eps)
    v = None
    for _ in range(n_iter):
        v = wmat.T @ u
        v = v / (jnp.linalg.norm(v) + eps)
        u = wmat @ v
        u = u / (jnp.linalg.norm(u) + eps)
    sigma = jnp.dot(u, wmat @ v)
    return w / sigma


def _raw_conv(key, cin, cout, kz):
    kw_, kb_, ku_ = jax.random.split(key, 3)
    w = jax.random.normal(kw_, (cout, cin, kz, kz), jnp.float32) / np.sqrt(cin * kz * kz)
    b = jax.random.normal(kb_, (cout,), jnp.float32) * 0.01
    return spectral_normalize(w, ku_), b


def _wmat(w):
    cout, cin, kh, kw = w.shape
    return jnp.transpose(w, (2, 3, 1, 0)).reshape(kh * kw * cin, cout)


def _pack(wmat, b):
    return {"w": wmat.astype(jnp.bfloat16),
            "b": b.reshape(1, -1).astype(jnp.float32)}


def make_conv(key, cin, cout, kz):
    w, b = _raw_conv(key, cin, cout, kz)
    return _pack(_wmat(w), b)


INCEPTION_CFG = {
    "in_3a": (192, 64, 96, 128, 16, 32, 32),
    "in_3b": (256, 128, 128, 192, 32, 96, 64),
    "in_4a": (480, 192, 96, 208, 16, 48, 64),
    "in_4b": (512, 160, 112, 224, 24, 64, 64),
    "in_4c": (512, 128, 128, 256, 24, 64, 64),
    "in_4d": (512, 112, 144, 288, 32, 64, 64),
    "in_4e": (528, 256, 160, 320, 32, 128, 128),
    "in_5a": (832, 256, 160, 320, 32, 128, 128),
    "in_5b": (832, 384, 192, 384, 48, 128, 128),
}


def make_inception(key, cfg):
    ch_in, c1, c3r, c3, c5r, c5, cp = cfg
    ks = jax.random.split(key, 6)
    w1, b1 = _raw_conv(ks[0], ch_in, c1, 1)
    w2a, b2a = _raw_conv(ks[1], ch_in, c3r, 1)
    w2b, b2b = _raw_conv(ks[2], c3r, c3, 3)
    w3a, b3a = _raw_conv(ks[3], ch_in, c5r, 1)
    w3b, b3b = _raw_conv(ks[4], c5r, c5, 5)
    w4, b4 = _raw_conv(ks[5], ch_in, cp, 1)
    # Fuse the three 1x1 branches that read the same input into one GEMM.
    head_w = jnp.concatenate([_wmat(w1), _wmat(w2a), _wmat(w3a)], axis=1)
    head_b = jnp.concatenate([b1, b2a, b3a])
    return {
        "head": _pack(head_w, head_b),
        "b2b": _pack(_wmat(w2b), b2b),
        "b3b": _pack(_wmat(w3b), b3b),
        "b4": _pack(_wmat(w4), b4),
    }


def make_params(key, num_class):
    ks = jax.random.split(key, 16)
    p = {
        "init1": make_conv(ks[0], 3, 64, 7),
        "init2": make_conv(ks[1], 64, 192, 1),
        "init3": make_conv(ks[2], 192, 192, 3),
    }
    for i, name in enumerate(INCEPTION_CFG):
        p[name] = make_inception(ks[3 + i], INCEPTION_CFG[name])
    # EndBlock Linear(1024, num_class) is NOT spectral-normalized in the reference.
    kfw, kfb = jax.random.split(ks[12], 2)
    p["fc_w"] = jax.random.normal(kfw, (num_class, 1024), jnp.float32) / np.sqrt(1024.0)
    p["fc_b"] = jax.random.normal(kfb, (num_class,), jnp.float32) * 0.01
    # TODO(synk): softmax_0 / softmax_1 aux heads are dead code for
    # state_train=False and are not built.
    return p


# --------------------------------------------------------------------------
# Forward pass
# --------------------------------------------------------------------------
def inception_fwd(x, p, cfg):
    ch_in, c1, c3r, c3, c5r, c5, cp = cfg
    n, h, w, _ = x.shape
    # Fused 1x1 head: only_1x1 + reduce3[0] + reduce5[0] in one Pallas GEMM.
    head = matmul_bias(x.reshape(n * h * w, ch_in),
                       p["head"]["w"], p["head"]["b"], relu=True)
    head = head.reshape(n, h, w, c1 + c3r + c5r)
    y1 = head[..., :c1]
    y2 = conv2d_same(head[..., c1:c1 + c3r], p["b2b"], 3, 1)
    y3 = conv2d_same(head[..., c1 + c3r:], p["b3b"], 5, 2)
    y4 = conv1x1(max_pool(x, 3, 1, 1), p["b4"])
    # TODO(synk): branch outputs could be written straight into their channel
    # slice of one preallocated buffer (aliased out BlockSpec) to skip this
    # concat pass; kept as a cheap bf16 concat for simplicity.
    return jnp.concatenate([y1, y2, y3, y4], axis=-1)  # == torch.cat(dim=1)


@jax.jit
def googlenet_forward(x_nchw, params):
    x = jnp.transpose(x_nchw, (0, 2, 3, 1)).astype(jnp.bfloat16)  # NCHW -> NHWC
    # InitBlock
    x = conv2d_im2col(x, params["init1"], 7, 2, 3)      # 112x112x64
    x = max_pool(x, 3, 2, 1)                             # 56x56
    x = lrn_size2(x)
    x = conv1x1(x, params["init2"])                      # 56x56x192
    x = conv2d_same(x, params["init3"], 3, 1)            # 56x56x192
    x = lrn_size2(x)
    x = max_pool(x, 3, 2, 1)                             # 28x28
    # Inception 3
    x = inception_fwd(x, params["in_3a"], INCEPTION_CFG["in_3a"])
    x = inception_fwd(x, params["in_3b"], INCEPTION_CFG["in_3b"])
    x = max_pool(x, 3, 2, 1)                             # 14x14
    # Inception 4
    for name in ("in_4a", "in_4b", "in_4c", "in_4d", "in_4e"):
        x = inception_fwd(x, params[name], INCEPTION_CFG[name])
    # EndBlock
    x = max_pool(x, 3, 2, 1)                             # 7x7
    x = inception_fwd(x, params["in_5a"], INCEPTION_CFG["in_5a"])
    x = inception_fwd(x, params["in_5b"], INCEPTION_CFG["in_5b"])
    x = avg_pool(x, 7, 1)                                # (N, 1, 1, 1024) f32
    x = x.reshape(x.shape[0], -1)                        # flatten (H=W=1)
    # TODO(synk): nn.Dropout(0.4) applied as identity (inference semantics).
    logits = x @ params["fc_w"].T + params["fc_b"]       # tiny FC: plain JAX
    return jax.nn.softmax(logits, axis=1)


# --------------------------------------------------------------------------
# Numerical self-test of the Pallas conv paths against f32 lax.conv refs.
# --------------------------------------------------------------------------
def _conv_ref(x, w, b, stride, pad):
    y = lax.conv_general_dilated(
        x, jnp.transpose(w, (2, 3, 1, 0)),
        window_strides=(stride, stride),
        padding=((pad, pad), (pad, pad)),
        dimension_numbers=("NHWC", "HWIO", "NHWC"))
    return jnp.maximum(y + b, 0.0)


def _self_test():
    key = jax.random.PRNGKey(0)

    def check(cin, cout, kz, stride, pad, hw, fn):
        k1, k2, k3 = jax.random.split(jax.random.fold_in(key, cin * kz + cout), 3)
        x = jax.random.normal(k1, (1, hw, hw, cin), jnp.float32)
        w = jax.random.normal(k2, (cout, cin, kz, kz), jnp.float32) / np.sqrt(cin * kz * kz)
        b = jax.random.normal(k3, (cout,), jnp.float32) * 0.01
        ref = _conv_ref(x, w, b, stride, pad)
        got = fn(x.astype(jnp.bfloat16), _pack(_wmat(w), b)).astype(jnp.float32)
        np.testing.assert_allclose(np.asarray(got), np.asarray(ref),
                                   atol=0.1, rtol=0.1)

    check(32, 48, 3, 1, 1, 14, lambda x, p: conv2d_same(x, p, 3, 1))
    check(16, 32, 5, 1, 2, 14, lambda x, p: conv2d_same(x, p, 5, 2))
    check(32, 64, 1, 1, 0, 14, lambda x, p: conv1x1(x, p))
    check(3, 16, 7, 2, 3, 28, lambda x, p: conv2d_im2col(x, p, 7, 2, 3))


if __name__ == "__main__":
    _self_test()   # bf16 Pallas conv kernels vs f32 lax.conv references
    num_class = 10
    key = jax.random.PRNGKey(0)
    kp, kx = jax.random.split(key)
    params = make_params(kp, num_class)
    # The architecture hardcodes the input geometry: AvgPool2d(7) + Linear(1024)
    # in the EndBlock require 7x7x1024 maps there, i.e. a 224x224 RGB input.
    x = jax.random.normal(kx, (1, 3, 224, 224), jnp.float32)
    out = jax.block_until_ready(googlenet_forward(x, params))
    assert out.shape == (1, num_class), out.shape
    assert bool(jnp.all(jnp.isfinite(out)))
    assert abs(float(jnp.sum(out)) - 1.0) < 1e-3  # softmax over classes
    print("KERNEL_OK")
</pallas_src>

<mosaic_0001>
module attributes {stable_mosaic.version = 11 : i64} {
  func.func @_conv_kxk_kernel(%arg0: i32, %arg1: memref<1x252x32xbf16, #tpu.memory_space<vmem>>, %arg2: memref<288x48xbf16, #tpu.memory_space<vmem>>, %arg3: memref<1x48xf32, #tpu.memory_space<vmem>>, %arg4: memref<1x196x48xbf16, #tpu.memory_space<vmem>>) attributes {dimension_semantics = [#tpu.dimension_semantics<parallel>], iteration_bounds = array<i64: 1>, scalar_prefetch = 0 : i64, scratch_operands = 0 : i64, tpu.core_type = #tpu.core_type<tc>, window_params = [{transform_indices = @transform_0, window_bounds = array<i64: 1, 252, 32>}, {pipeline_mode = #tpu.pipeline_mode<synchronous>, transform_indices = @transform_1, window_bounds = array<i64: 288, 48>}, {pipeline_mode = #tpu.pipeline_mode<synchronous>, transform_indices = @transform_2, window_bounds = array<i64: 1, 48>}, {transform_indices = @transform_3, window_bounds = array<i64: 1, 196, 48>}]} {
    %0 = tpu.iota {dimensions = array<i32: 0>} : vector<196x1xi32>
    %c14_i32 = arith.constant 14 : i32
    %c0_i32 = arith.constant 0 : i32
    %1 = arith.cmpi eq, %c14_i32, %c0_i32 : i32
    %c1_i32 = arith.constant 1 : i32
    %2 = arith.select %1, %c1_i32, %c14_i32 : i32
    %3 = vector.broadcast %2 : i32 to vector<196x1xi32>
    %4 = arith.remsi %0, %3 : vector<196x1xi32>
    %c0_i32_0 = arith.constant 0 : i32
    %5 = vector.broadcast %c0_i32_0 : i32 to vector<196x1xi32>
    %6 = arith.cmpi ne, %4, %5 : vector<196x1xi32>
    %c0_i32_1 = arith.constant 0 : i32
    %7 = vector.broadcast %c0_i32_1 : i32 to vector<196x1xi32>
    %8 = arith.cmpi slt, %4, %7 : vector<196x1xi32>
    %c0_i32_2 = arith.constant 0 : i32
    %9 = arith.cmpi slt, %2, %c0_i32_2 : i32
    %10 = vector.broadcast %9 : i1 to vector<196x1xi1>
    %11 = vector.broadcast %10 : vector<196x1xi1> to vector<196x1xi1>
    %12 = arith.xori %8, %11 : vector<196x1xi1>
    %13 = arith.andi %12, %6 : vector<196x1xi1>
    %14 = vector.broadcast %2 : i32 to vector<196x1xi32>
    %15 = arith.addi %4, %14 : vector<196x1xi32>
    %16 = arith.select %13, %15, %4 : vector<196x1xi1>, vector<196x1xi32>
    %c0 = arith.constant 0 : index
    %c0_3 = arith.constant 0 : index
    %17 = vector.load %arg3[%c0, %c0_3] : memref<1x48xf32, #tpu.memory_space<vmem>>, vector<1x48xf32>
    %18 = vector.shape_cast %17 : vector<1x48xf32> to vector<1x48xf32>
    %19 = vector.broadcast %18 : vector<1x48xf32> to vector<196x48xf32>
    %c0_4 = arith.constant 0 : index
    %c13 = arith.constant 13 : index
    %c0_5 = arith.constant 0 : index
    %20 = vector.load %arg1[%c0_4, %c13, %c0_5] : memref<1x252x32xbf16, #tpu.memory_space<vmem>>, vector<1x196x32xbf16>
    %21 = vector.shape_cast %20 : vector<1x196x32xbf16> to vector<196x32xbf16>
    %c1_i32_6 = arith.constant 1 : i32
    %22 = vector.broadcast %c1_i32_6 : i32 to vector<196x1xi32>
    %23 = arith.cmpi sge, %16, %22 : vector<196x1xi32>
    %c14_i32_7 = arith.constant 14 : i32
    %24 = vector.broadcast %c14_i32_7 : i32 to vector<196x1xi32>
    %25 = arith.cmpi slt, %16, %24 : vector<196x1xi32>
    %26 = arith.andi %23, %25 : vector<196x1xi1>
    %cst = arith.constant 0.000000e+00 : bf16
    %27 = vector.broadcast %cst : bf16 to vector<196x32xbf16>
    %28 = vector.shape_cast %26 : vector<196x1xi1> to vector<196x1xi1>
    %29 = vector.broadcast %28 : vector<196x1xi1> to vector<196x32xi1>
    %30 = arith.select %29, %21, %27 : vector<196x32xi1>, vector<196x32xbf16>
    %c0_8 = arith.constant 0 : index
    %c0_9 = arith.constant 0 : index
    %31 = vector.load %arg2[%c0_8, %c0_9] : memref<288x48xbf16, #tpu.memory_space<vmem>>, vector<32x48xbf16>
    %cst_10 = arith.constant dense<0.000000e+00> : vector<196x48xf32>
    %32 = tpu.matmul %30, %31, %cst_10 {dimension_numbers = #tpu.dot_dimension_numbers<[1], [0], [0], [1], [0, 0, 1, 1], [], []>} : vector<196x32xbf16>, vector<32x48xbf16>, vector<196x48xf32> -> vector<196x48xf32>
    %33 = arith.addf %19, %32 : vector<196x48xf32>
    %c0_11 = arith.constant 0 : index
    %c14 = arith.constant 14 : index
    %c0_12 = arith.constant 0 : index
    %34 = vector.load %arg1[%c0_11, %c14, %c0_12] : memref<1x252x32xbf16, #tpu.memory_space<vmem>>, vector<1x196x32xbf16>
    %35 = vector.shape_cast %34 : vector<1x196x32xbf16> to vector<196x32xbf16>
    %c32 = arith.constant 32 : index
    %c0_13 = arith.constant 0 : index
    %36 = vector.load %arg2[%c32, %c0_13] : memref<288x48xbf16, #tpu.memory_space<vmem>>, vector<32x48xbf16>
    %cst_14 = arith.constant dense<0.000000e+00> : vector<196x48xf32>
    %37 = tpu.matmul %35, %36, %cst_14 {dimension_numbers = #tpu.dot_dimension_numbers<[1], [0], [0], [1], [0, 0, 1, 1], [], []>} : vector<196x32xbf16>, vector<32x48xbf16>, vector<196x48xf32> -> vector<196x48xf32>
    %38 = arith.addf %33, %37 : vector<196x48xf32>
    %c0_15 = arith.constant 0 : index
    %c15 = arith.constant 15 : index
    %c0_16 = arith.constant 0 : index
    %39 = vector.load %arg1[%c0_15, %c15, %c0_16] : memref<1x252x32xbf16, #tpu.memory_space<vmem>>, vector<1x196x32xbf16>
    %40 = vector.shape_cast %39 : vector<1x196x32xbf16> to vector<196x32xbf16>
    %c0_i32_17 = arith.constant 0 : i32
    %41 = vector.broadcast %c0_i32_17 : i32 to vector<196x1xi32>
    %42 = arith.cmpi sge, %16, %41 : vector<196x1xi32>
    %c13_i32 = arith.constant 13 : i32
    %43 = vector.broadcast %c13_i32 : i32 to vector<196x1xi32>
    %44 = arith.cmpi slt, %16, %43 : vector<196x1xi32>
    %45 = arith.andi %42, %44 : vector<196x1xi1>
    %cst_18 = arith.constant 0.000000e+00 : bf16
    %46 = vector.broadcast %cst_18 : bf16 to vector<196x32xbf16>
    %47 = vector.shape_cast %45 : vector<196x1xi1> to vector<196x1xi1>
    %48 = vector.broadcast %47 : vector<196x1xi1> to vector<196x32xi1>
    %49 = arith.select %48, %40, %46 : vector<196x32xi1>, vector<196x32xbf16>
    %c64 = arith.constant 64 : index
    %c0_19 = arith.constant 0 : index
    %50 = vector.load %arg2[%c64, %c0_19] : memref<288x48xbf16, #tpu.memory_space<vmem>>, vector<32x48xbf16>
    %cst_20 = arith.constant dense<0.000000e+00> : vector<196x48xf32>
    %51 = tpu.matmul %49, %50, %cst_20 {dimension_numbers = #tpu.dot_dimension_numbers<[1], [0], [0], [1], [0, 0, 1, 1], [], []>} : vector<196x32xbf16>, vector<32x48xbf16>, vector<196x48xf32> -> vector<196x48xf32>
    %52 = arith.addf %38, %51 : vector<196x48xf32>
    %c0_21 = arith.constant 0 : index
    %c27 = arith.constant 27 : index
    %c0_22 = arith.constant 0 : index
    %53 = vector.load %arg1[%c0_21, %c27, %c0_22] : memref<1x252x32xbf16, #tpu.memory_space<vmem>>, vector<1x196x32xbf16>
    %54 = vector.shape_cast %53 : vector<1x196x32xbf16> to vector<196x32xbf16>
    %c1_i32_23 = arith.constant 1 : i32
    %55 = vector.broadcast %c1_i32_23 : i32 to vector<196x1xi32>
    %56 = arith.cmpi sge, %16, %55 : vector<196x1xi32>
    %c14_i32_24 = arith.constant 14 : i32
    %57 = vector.broadcast %c14_i32_24 : i32 to vector<196x1xi32>
    %58 = arith.cmpi slt, %16, %57 : vector<196x1xi32>
    %59 = arith.andi %56, %58 : vector<196x1xi1>
    %cst_25 = arith.constant 0.000000e+00 : bf16
    %60 = vector.broadcast %cst_25 : bf16 to vector<196x32xbf16>
    %61 = vector.shape_cast %59 : vector<196x1xi1> to vector<196x1xi1>
    %62 = vector.broadcast %61 : vector<196x1xi1> to vector<196x32xi1>
    %63 = arith.select %62, %54, %60 : vector<196x32xi1>, vector<196x32xbf16>
    %c96 = arith.constant 96 : index
    %c0_26 = arith.constant 0 : index
    %64 = vector.load %arg2[%c96, %c0_26] : memref<288x48xbf16, #tpu.memory_space<vmem>>, vector<32x48xbf16>
    %cst_27 = arith.constant dense<0.000000e+00> : vector<196x48xf32>
    %65 = tpu.matmul %63, %64, %cst_27 {dimension_numbers = #tpu.dot_dimension_numbers<[1], [0], [0], [1], [0, 0, 1, 1], [], []>} : vector<196x32xbf16>, vector<32x48xbf16>, vector<196x48xf32> -> vector<196x48xf32>
    %66 = arith.addf %52, %65 : vector<196x48xf32>
    %c0_28 = arith.constant 0 : index
    %c28 = arith.constant 28 : index
    %c0_29 = arith.constant 0 : index
    %67 = vector.load %arg1[%c0_28, %c28, %c0_29] : memref<1x252x32xbf16, #tpu.memory_space<vmem>>, vector<1x196x32xbf16>
    %68 = vector.shape_cast %67 : vector<1x196x32xbf16> to vector<196x32xbf16>
    %c128 = arith.constant 128 : index
    %c0_30 = arith.constant 0 : index
    %69 = vector.load %arg2[%c128, %c0_30] : memref<288x48xbf16, #tpu.memory_space<vmem>>, vector<32x48xbf16>
    %cst_31 = arith.constant dense<0.000000e+00> : vector<196x48xf32>
    %70 = tpu.matmul %68, %69, %cst_31 {dimension_numbers = #tpu.dot_dimension_numbers<[1], [0], [0], [1], [0, 0, 1, 1], [], []>} : vector<196x32xbf16>, vector<32x48xbf16>, vector<196x48xf32> -> vector<196x48xf32>
    %71 = arith.addf %66, %70 : vector<196x48xf32>
    %c0_32 = arith.constant 0 : index
    %c29 = arith.constant 29 : index
    %c0_33 = arith.constant 0 : index
    %72 = vector.load %arg1[%c0_32, %c29, %c0_33] : memref<1x252x32xbf16, #tpu.memory_space<vmem>>, vector<1x196x32xbf16>
    %73 = vector.shape_cast %72 : vector<1x196x32xbf16> to vector<196x32xbf16>
    %c0_i32_34 = arith.constant 0 : i32
    %74 = vector.broadcast %c0_i32_34 : i32 to vector<196x1xi32>
    %75 = arith.cmpi sge, %16, %74 : vector<196x1xi32>
    %c13_i32_35 = arith.constant 13 : i32
    %76 = vector.broadcast %c13_i32_35 : i32 to vector<196x1xi32>
    %77 = arith.cmpi slt, %16, %76 : vector<196x1xi32>
    %78 = arith.andi %75, %77 : vector<196x1xi1>
    %cst_36 = arith.constant 0.000000e+00 : bf16
    %79 = vector.broadcast %cst_36 : bf16 to vector<196x32xbf16>
    %80 = vector.shape_cast %78 : vector<196x1xi1> to vector<196x1xi1>
    %81 = vector.broadcast %80 : vector<196x1xi1> to vector<196x32xi1>
    %82 = arith.select %81, %73, %79 : vector<196x32xi1>, vector<196x32xbf16>
    %c160 = arith.constant 160 : index
    %c0_37 = arith.constant 0 : index
    %83 = vector.load %arg2[%c160, %c0_37] : memref<288x48xbf16, #tpu.memory_space<vmem>>, vector<32x48xbf16>
    %cst_38 = arith.constant dense<0.000000e+00> : vector<196x48xf32>
    %84 = tpu.matmul %82, %83, %cst_38 {dimension_numbers = #tpu.dot_dimension_numbers<[1], [0], [0], [1], [0, 0, 1, 1], [], []>} : vector<196x32xbf16>, vector<32x48xbf16>, vector<196x48xf32> -> vector<196x48xf32>
    %85 = arith.addf %71, %84 : vector<196x48xf32>
    %c0_39 = arith.constant 0 : index
    %c41 = arith.constant 41 : index
    %c0_40 = arith.constant 0 : index
    %86 = vector.load %arg1[%c0_39, %c41, %c0_40] : memref<1x252x32xbf16, #tpu.memory_space<vmem>>, vector<1x196x32xbf16>
    %87 = vector.shape_cast %86 : vector<1x196x32xbf16> to vector<196x32xbf16>
    %c1_i32_41 = arith.constant 1 : i32
    %88 = vector.broadcast %c1_i32_41 : i32 to vector<196x1xi32>
    %89 = arith.cmpi sge, %16, %88 : vector<196x1xi32>
    %c14_i32_42 = arith.constant 14 : i32
    %90 = vector.broadcast %c14_i32_42 : i32 to vector<196x1xi32>
    %91 = arith.cmpi slt, %16, %90 : vector<196x1xi32>
    %92 = arith.andi %89, %91 : vector<196x1xi1>
    %cst_43 = arith.constant 0.000000e+00 : bf16
    %93 = vector.broadcast %cst_43 : bf16 to vector<196x32xbf16>
    %94 = vector.shape_cast %92 : vector<196x1xi1> to vector<196x1xi1>
    %95 = vector.broadcast %94 : vector<196x1xi1> to vector<196x32xi1>
    %96 = arith.select %95, %87, %93 : vector<196x32xi1>, vector<196x32xbf16>
    %c192 = arith.constant 192 : index
    %c0_44 = arith.constant 0 : index
    %97 = vector.load %arg2[%c192, %c0_44] : memref<288x48xbf16, #tpu.memory_space<vmem>>, vector<32x48xbf16>
    %cst_45 = arith.constant dense<0.000000e+00> : vector<196x48xf32>
    %98 = tpu.matmul %96, %97, %cst_45 {dimension_numbers = #tpu.dot_dimension_numbers<[1], [0], [0], [1], [0, 0, 1, 1], [], []>} : vector<196x32xbf16>, vector<32x48xbf16>, vector<196x48xf32> -> vector<196x48xf32>
    %99 = arith.addf %85, %98 : vector<196x48xf32>
    %c0_46 = arith.constant 0 : index
    %c42 = arith.constant 42 : index
    %c0_47 = arith.constant 0 : index
    %100 = vector.load %arg1[%c0_46, %c42, %c0_47] : memref<1x252x32xbf16, #tpu.memory_space<vmem>>, vector<1x196x32xbf16>
    %101 = vector.shape_cast %100 : vector<1x196x32xbf16> to vector<196x32xbf16>
    %c224 = arith.constant 224 : index
    %c0_48 = arith.constant 0 : index
    %102 = vector.load %arg2[%c224, %c0_48] : memref<288x48xbf16, #tpu.memory_space<vmem>>, vector<32x48xbf16>
    %cst_49 = arith.constant dense<0.000000e+00> : vector<196x48xf32>
    %103 = tpu.matmul %101, %102, %cst_49 {dimension_numbers = #tpu.dot_dimension_numbers<[1], [0], [0], [1], [0, 0, 1, 1], [], []>} : vector<196x32xbf16>, vector<32x48xbf16>, vector<196x48xf32> -> vector<196x48xf32>
    %104 = arith.addf %99, %103 : vector<196x48xf32>
    %c0_50 = arith.constant 0 : index
    %c43 = arith.constant 43 : index
    %c0_51 = arith.constant 0 : index
    %105 = vector.load %arg1[%c0_50, %c43, %c0_51] : memref<1x252x32xbf16, #tpu.memory_space<vmem>>, vector<1x196x32xbf16>
    %106 = vector.shape_cast %105 : vector<1x196x32xbf16> to vector<196x32xbf16>
    %c0_i32_52 = arith.constant 0 : i32
    %107 = vector.broadcast %c0_i32_52 : i32 to vector<196x1xi32>
    %108 = arith.cmpi sge, %16, %107 : vector<196x1xi32>
    %c13_i32_53 = arith.constant 13 : i32
    %109 = vector.broadcast %c13_i32_53 : i32 to vector<196x1xi32>
    %110 = arith.cmpi slt, %16, %109 : vector<196x1xi32>
    %111 = arith.andi %108, %110 : vector<196x1xi1>
    %cst_54 = arith.constant 0.000000e+00 : bf16
    %112 = vector.broadcast %cst_54 : bf16 to vector<196x32xbf16>
    %113 = vector.shape_cast %111 : vector<196x1xi1> to vector<196x1xi1>
    %114 = vector.broadcast %113 : vector<196x1xi1> to vector<196x32xi1>
    %115 = arith.select %114, %106, %112 : vector<196x32xi1>, vector<196x32xbf16>
    %c256 = arith.constant 256 : index
    %c0_55 = arith.constant 0 : index
    %116 = vector.load %arg2[%c256, %c0_55] : memref<288x48xbf16, #tpu.memory_space<vmem>>, vector<32x48xbf16>
    %cst_56 = arith.constant dense<0.000000e+00> : vector<196x48xf32>
    %117 = tpu.matmul %115, %116, %cst_56 {dimension_numbers = #tpu.dot_dimension_numbers<[1], [0], [0], [1], [0, 0, 1, 1], [], []>} : vector<196x32xbf16>, vector<32x48xbf16>, vector<196x48xf32> -> vector<196x48xf32>
    %118 = arith.addf %104, %117 : vector<196x48xf32>
    %cst_57 = arith.constant 0.000000e+00 : f32
    %119 = vector.broadcast %cst_57 : f32 to vector<196x48xf32>
    %120 = arith.maximumf %118, %119 : vector<196x48xf32>
    %121 = arith.truncf %120 : vector<196x48xf32> to vector<196x48xbf16>
    %c0_58 = arith.constant 0 : index
    %c0_59 = arith.constant 0 : index
    %c0_60 = arith.constant 0 : index
    %122 = vector.load %arg4[%c0_58, %c0_59, %c0_60] : memref<1x196x48xbf16, #tpu.memory_space<vmem>>, vector<1x196x48xbf16>
    %123 = vector.shape_cast %122 : vector<1x196x48xbf16> to vector<196x48xbf16>
    %124 = vector.shape_cast %121 : vector<196x48xbf16> to vector<1x196x48xbf16>
    tpu.vector_store %arg4[%c0_58, %c0_59, %c0_60], %124 {strides = array<i32>} : memref<1x196x48xbf16, #tpu.memory_space<vmem>>, vector<1x196x48xbf16>,
    return
  }
  func.func @transform_0(%arg0: i32) -> (i32, i32, i32) {
    %c0_i32 = arith.constant 0 : i32
    %c0_i32_0 = arith.constant 0 : i32
    %c0_i32_1 = arith.constant 0 : i32
    return %arg0, %c0_i32, %c0_i32_0 : i32, i32, i32
  }
  func.func @transform_1(%arg0: i32) -> (i32, i32) {
    %c0_i32 = arith.constant 0 : i32
    %c0_i32_0 = arith.constant 0 : i32
    %c0_i32_1 = arith.constant 0 : i32
    return %c0_i32, %c0_i32_0 : i32, i32
  }
  func.func @transform_2(%arg0: i32) -> (i32, i32) {
    %c0_i32 = arith.constant 0 : i32
    %c0_i32_0 = arith.constant 0 : i32
    %c0_i32_1 = arith.constant 0 : i32
    return %c0_i32, %c0_i32_0 : i32, i32
  }
  func.func @transform_3(%arg0: i32) -> (i32, i32, i32) {
    %c0_i32 = arith.constant 0 : i32
    %c0_i32_0 = arith.constant 0 : i32
    %c0_i32_1 = arith.constant 0 : i32
    return %arg0, %c0_i32, %c0_i32_0 : i32, i32, i32
  }
}

</mosaic_0001>

<llo_original>
// kernel: tpu_custom_call.1
$region0: #{tpu_custom_call.1}
  #allocation0 [shape = 'u32[]', space=smem, size = 0x4, offset = 0x4, fixed_abs, tag = 'smem constant byte address 0x4 - core index']
  #allocation1 [shape = 'u32[144,128]{1,0:T(1,128)}', space=vmem, size = 0x12000, scoped, tag = 'internal scratch']
  %s0 = inlined_call_operand.vmem [shape: bf16[1,252,32], index: 0, kind: input, shape index: {}]
  %s1 = inlined_call_operand.vmem [shape: bf16[288,48], index: 1, kind: input, shape index: {}]
  %s2 = inlined_call_operand.vmem [shape: f32[1,48], index: 2, kind: input, shape index: {}]
  %s3 = inlined_call_operand.vmem [shape: bf16[1,196,48], index: 3, kind: output, shape index: {}]
  %s4 = sld [smem:[#allocation0]]
  $region22: #{tpu_custom_call.1} parent=0
    _
  %s6 = ssub.s32 1, %s4
  %s7 = scalar_select 0, %s6, %s4
  // Predicated region
  $region2: #{tpu_custom_call.1} parent=0 // pred_check
    _
  $region3: #{tpu_custom_call.1} parent=0 // pred_check_branch
    %9 = sbr.rel (0) target = $region5
  $region4: #{tpu_custom_call.1} parent=0 // pred_region
    _
  $region5: #{tpu_custom_call.1} parent=0 // pred_fallthru
    _
  // Predicated region
  $region6: #{tpu_custom_call.1} parent=0 // pred_check
    _
  $region7: #{tpu_custom_call.1} parent=0 // pred_check_branch
    %11 = sbr.rel (0) target = $region9
  $region8: #{tpu_custom_call.1} parent=0 // pred_region
    _
  $region9: #{tpu_custom_call.1} parent=0 // pred_fallthru
    _
  // Predicated region
  $region10: #{tpu_custom_call.1} parent=0 // pred_check
    _
  $region11: #{tpu_custom_call.1} parent=0 // pred_check_branch
    %13 = sbr.rel (0) target = $region13
  $region12: #{tpu_custom_call.1} parent=0 // pred_region
    _
  $region13: #{tpu_custom_call.1} parent=0 // pred_fallthru
    _
  %v17 = vlaneseq
  %v18 = vshrl.u32 %v17, 7
  %v19 = vadd.s32 %v18, 8
  %v20 = vadd.s32 %v18, 16
  %v21 = vadd.s32 %v18, 24
  %v22 = vadd.s32 %v18, 32
  %v23 = vadd.s32 %v18, 40
  %v24 = vadd.s32 %v18, 48
  %v25 = vadd.s32 %v18, 56
  %v26 = vadd.s32 %v18, 64
  %v27 = vadd.s32 %v18, 72
  %v28 = vadd.s32 %v18, 80
  %v29 = vadd.s32 %v18, 88
  %v30 = vadd.s32 %v18, 96
  %v31 = vadd.s32 %v18, 104
  %v32 = vadd.s32 %v18, 112
  %v33 = vadd.s32 %v18, 120
  %v34 = vadd.s32 %v18, 128
  %v35 = vadd.s32 %v18, 136
  %v36 = vadd.s32 %v18, 144
  %v37 = vadd.s32 %v18, 152
  %v38 = vadd.s32 %v18, 160
  %v39 = vadd.s32 %v18, 168
  %v40 = vadd.s32 %v18, 176
  %v41 = vadd.s32 %v18, 184
  %v42 = vadd.s32 %v18, 192
  %vm43 = vcmp.lt.s32.totalorder %v18, 0
  %v44 = vsub.s32 0, %v18
  %v45 = vsel %vm43, %v44, %v18
  %v46 = vmul.u32.u64.compose %v45, 2454267026
  %v47 = vextract.low.u32 %v46
  %v48 = vextract.high.u32 %v46
  %vm49 = vc.u32 %v47, 2454267026
  %v50 = vsel %vm49, 1, 0
  %v51 = vadd.s32 %v48, %v50
  %v52 = vshrl.u32 %v51, 3
  %v53 = vmul.u32 %v52, 14
  %v54 = vsub.s32 %v45, %v53
  %v55 = vsub.s32 0, %v54
  %v56 = vsel %vm43, %v55, %v54
  %vm57 = vcmp.lt.s32.totalorder %v19, 0
  %v58 = vsub.s32 0, %v19
  %v59 = vsel %vm57, %v58, %v19
  %v60 = vmul.u32.u64.compose %v59, 2454267026
  %v61 = vextract.low.u32 %v60
  %v62 = vextract.high.u32 %v60
  %vm63 = vc.u32 %v61, 2454267026
  %v64 = vsel %vm63, 1, 0
  %v65 = vadd.s32 %v62, %v64
  %v66 = vshrl.u32 %v65, 3
  %v67 = vmul.u32 %v66, 14
  %v68 = vsub.s32 %v59, %v67
  %v69 = vsub.s32 0, %v68
  %v70 = vsel %vm57, %v69, %v68
  %vm71 = vcmp.lt.s32.totalorder %v20, 0
  %v72 = vsub.s32 0, %v20
  %v73 = vsel %vm71, %v72, %v20
  %v74 = vmul.u32.u64.compose %v73, 2454267026
  %v75 = vextract.low.u32 %v74
  %v76 = vextract.high.u32 %v74
  %vm77 = vc.u32 %v75, 2454267026
  %v78 = vsel %vm77, 1, 0
  %v79 = vadd.s32 %v76, %v78
  %v80 = vshrl.u32 %v79, 3
  %v81 = vmul.u32 %v80, 14
  %v82 = vsub.s32 %v73, %v81
  %v83 = vsub.s32 0, %v82
  %v84 = vsel %vm71, %v83, %v82
  %vm85 = vcmp.lt.s32.totalorder %v21, 0
  %v86 = vsub.s32 0, %v21
  %v87 = vsel %vm85, %v86, %v21
  %v88 = vmul.u32.u64.compose %v87, 2454267026
  %v89 = vextract.low.u32 %v88
  %v90 = vextract.high.u32 %v88
  %vm91 = vc.u32 %v89, 2454267026
  %v92 = vsel %vm91, 1, 0
  %v93 = vadd.s32 %v90, %v92
  %v94 = vshrl.u32 %v93, 3
  %v95 = vmul.u32 %v94, 14
  %v96 = vsub.s32 %v87, %v95
  %v97 = vsub.s32 0, %v96
  %v98 = vsel %vm85, %v97, %v96
  %vm99 = vcmp.lt.s32.totalorder %v22, 0
  %v100 = vsub.s32 0, %v22
  %v101 = vsel %vm99, %v100, %v22
  %v102 = vmul.u32.u64.compose %v101, 2454267026
  %v103 = vextract.low.u32 %v102
  %v104 = vextract.high.u32 %v102
  %vm105 = vc.u32 %v103, 2454267026
  %v106 = vsel %vm105, 1, 0
  %v107 = vadd.s32 %v104, %v106
  %v108 = vshrl.u32 %v107, 3
  %v109 = vmul.u32 %v108, 14
  %v110 = vsub.s32 %v101, %v109
  %v111 = vsub.s32 0, %v110
  %v112 = vsel %vm99, %v111, %v110
  %vm113 = vcmp.lt.s32.totalorder %v23, 0
  %v114 = vsub.s32 0, %v23
  %v115 = vsel %vm113, %v114, %v23
  %v116 = vmul.u32.u64.compose %v115, 2454267026
  %v117 = vextract.low.u32 %v116
  %v118 = vextract.high.u32 %v116
  %vm119 = vc.u32 %v117, 2454267026
  %v120 = vsel %vm119, 1, 0
  %v121 = vadd.s32 %v118, %v120
  %v122 = vshrl.u32 %v121, 3
  %v123 = vmul.u32 %v122, 14
  %v124 = vsub.s32 %v115, %v123
  %v125 = vsub.s32 0, %v124
  %v126 = vsel %vm113, %v125, %v124
  %vm127 = vcmp.lt.s32.totalorder %v24, 0
  %v128 = vsub.s32 0, %v24
  %v129 = vsel %vm127, %v128, %v24
  %v130 = vmul.u32.u64.compose %v129, 2454267026
  %v131 = vextract.low.u32 %v130
  %v132 = vextract.high.u32 %v130
  %vm133 = vc.u32 %v131, 2454267026
  %v134 = vsel %vm133, 1, 0
  %v135 = vadd.s32 %v132, %v134
  %v136 = vshrl.u32 %v135, 3
  %v137 = vmul.u32 %v136, 14
  %v138 = vsub.s32 %v129, %v137
  %v139 = vsub.s32 0, %v138
  %v140 = vsel %vm127, %v139, %v138
  %vm141 = vcmp.lt.s32.totalorder %v25, 0
  %v142 = vsub.s32 0, %v25
  %v143 = vsel %vm141, %v142, %v25
  %v144 = vmul.u32.u64.compose %v143, 2454267026
  %v145 = vextract.low.u32 %v144
  %v146 = vextract.high.u32 %v144
  %vm147 = vc.u32 %v145, 2454267026
  %v148 = vsel %vm147, 1, 0
  %v149 = vadd.s32 %v146, %v148
  %v150 = vshrl.u32 %v149, 3
  %v151 = vmul.u32 %v150, 14
  %v152 = vsub.s32 %v143, %v151
  %v153 = vsub.s32 0, %v152
  %v154 = vsel %vm141, %v153, %v152
  %vm155 = vcmp.lt.s32.totalorder %v26, 0
  %v156 = vsub.s32 0, %v26
  %v157 = vsel %vm155, %v156, %v26
  %v158 = vmul.u32.u64.compose %v157, 2454267026
  %v159 = vextract.low.u32 %v158
  %v160 = vextract.high.u32 %v158
  %vm161 = vc.u32 %v159, 2454267026
  %v162 = vsel %vm161, 1, 0
  %v163 = vadd.s32 %v160, %v162
  %v164 = vshrl.u32 %v163, 3
  %v165 = vmul.u32 %v164, 14
  %v166 = vsub.s32 %v157, %v165
  %v167 = vsub.s32 0, %v166
  %v168 = vsel %vm155, %v167, %v166
  %vm169 = vcmp.lt.s32.totalorder %v27, 0
  %v170 = vsub.s32 0, %v27
  %v171 = vsel %vm169, %v170, %v27
  %v172 = vmul.u32.u64.compose %v171, 2454267026
  %v173 = vextract.low.u32 %v172
  %v174 = vextract.high.u32 %v172
  %vm175 = vc.u32 %v173, 2454267026
  %v176 = vsel %vm175, 1, 0
  %v177 = vadd.s32 %v174, %v176
  %v178 = vshrl.u32 %v177, 3
  %v179 = vmul.u32 %v178, 14
  %v180 = vsub.s32 %v171, %v179
  %v181 = vsub.s32 0, %v180
  %v182 = vsel %vm169, %v181, %v180
  %vm183 = vcmp.lt.s32.totalorder %v28, 0
  %v184 = vsub.s32 0, %v28
  %v185 = vsel %vm183, %v184, %v28
  %v186 = vmul.u32.u64.compose %v185, 2454267026
  %v187 = vextract.low.u32 %v186
  %v188 = vextract.high.u32 %v186
  %vm189 = vc.u32 %v187, 2454267026
  %v190 = vsel %vm189, 1, 0
  %v191 = vadd.s32 %v188, %v190
  %v192 = vshrl.u32 %v191, 3
  %v193 = vmul.u32 %v192, 14
  %v194 = vsub.s32 %v185, %v193
  %v195 = vsub.s32 0, %v194
  %v196 = vsel %vm183, %v195, %v194
  %vm197 = vcmp.lt.s32.totalorder %v29, 0
  %v198 = vsub.s32 0, %v29
  %v199 = vsel %vm197, %v198, %v29
  %v200 = vmul.u32.u64.compose %v199, 2454267026
  %v201 = vextract.low.u32 %v200
  %v202 = vextract.high.u32 %v200
  %vm203 = vc.u32 %v201, 2454267026
  %v204 = vsel %vm203, 1, 0
  %v205 = vadd.s32 %v202, %v204
  %v206 = vshrl.u32 %v205, 3
  %v207 = vmul.u32 %v206, 14
  %v208 = vsub.s32 %v199, %v207
  %v209 = vsub.s32 0, %v208
  %v210 = vsel %vm197, %v209, %v208
  %vm211 = vcmp.lt.s32.totalorder %v30, 0
  %v212 = vsub.s32 0, %v30
  %v213 = vsel %vm211, %v212, %v30
  %v214 = vmul.u32.u64.compose %v213, 2454267026
  %v215 = vextract.low.u32 %v214
  %v216 = vextract.high.u32 %v214
  %vm217 = vc.u32 %v215, 2454267026
  %v218 = vsel %vm217, 1, 0
  %v219 = vadd.s32 %v216, %v218
  %v220 = vshrl.u32 %v219, 3
  %v221 = vmul.u32 %v220, 14
  %v222 = vsub.s32 %v213, %v221
  %v223 = vsub.s32 0, %v222
  %v224 = vsel %vm211, %v223, %v222
  %vm225 = vcmp.lt.s32.totalorder %v31, 0
  %v226 = vsub.s32 0, %v31
  %v227 = vsel %vm225, %v226, %v31
  %v228 = vmul.u32.u64.compose %v227, 2454267026
  %v229 = vextract.low.u32 %v228
  %v230 = vextract.high.u32 %v228
  %vm231 = vc.u32 %v229, 2454267026
  %v232 = vsel %vm231, 1, 0
  %v233 = vadd.s32 %v230, %v232
  %v234 = vshrl.u32 %v233, 3
  %v235 = vmul.u32 %v234, 14
  %v236 = vsub.s32 %v227, %v235
  %v237 = vsub.s32 0, %v236
  %v238 = vsel %vm225, %v237, %v236
  %vm239 = vcmp.lt.s32.totalorder %v32, 0
  %v240 = vsub.s32 0, %v32
  %v241 = vsel %vm239, %v240, %v32
  %v242 = vmul.u32.u64.compose %v241, 2454267026
  %v243 = vextract.low.u32 %v242
  %v244 = vextract.high.u32 %v242
  %vm245 = vc.u32 %v243, 2454267026
  %v246 = vsel %vm245, 1, 0
  %v247 = vadd.s32 %v244, %v246
  %v248 = vshrl.u32 %v247, 3
  %v249 = vmul.u32 %v248, 14
  %v250 = vsub.s32 %v241, %v249
  %v251 = vsub.s32 0, %v250
  %v252 = vsel %vm239, %v251, %v250
  %vm253 = vcmp.lt.s32.totalorder %v33, 0
  %v254 = vsub.s32 0, %v33
  %v255 = vsel %vm253, %v254, %v33
  %v256 = vmul.u32.u64.compose %v255, 2454267026
  %v257 = vextract.low.u32 %v256
  %v258 = vextract.high.u32 %v256
  %vm259 = vc.u32 %v257, 2454267026
  %v260 = vsel %vm259, 1, 0
  %v261 = vadd.s32 %v258, %v260
  %v262 = vshrl.u32 %v261, 3
  %v263 = vmul.u32 %v262, 14
  %v264 = vsub.s32 %v255, %v263
  %v265 = vsub.s32 0, %v264
  %v266 = vsel %vm253, %v265, %v264
  %vm267 = vcmp.lt.s32.totalorder %v34, 0
  %v268 = vsub.s32 0, %v34
  %v269 = vsel %vm267, %v268, %v34
  %v270 = vmul.u32.u64.compose %v269, 2454267026
  %v271 = vextract.low.u32 %v270
  %v272 = vextract.high.u32 %v270
  %vm273 = vc.u32 %v271, 2454267026
  %v274 = vsel %vm273, 1, 0
  %v275 = vadd.s32 %v272, %v274
  %v276 = vshrl.u32 %v275, 3
  %v277 = vmul.u32 %v276, 14
  %v278 = vsub.s32 %v269, %v277
  %v279 = vsub.s32 0, %v278
  %v280 = vsel %vm267, %v279, %v278
  %vm281 = vcmp.lt.s32.totalorder %v35, 0
  %v282 = vsub.s32 0, %v35
  %v283 = vsel %vm281, %v282, %v35
  %v284 = vmul.u32.u64.compose %v283, 2454267026
  %v285 = vextract.low.u32 %v284
  %v286 = vextract.high.u32 %v284
  %vm287 = vc.u32 %v285, 2454267026
  %v288 = vsel %vm287, 1, 0
  %v289 = vadd.s32 %v286, %v288
  %v290 = vshrl.u32 %v289, 3
  %v291 = vmul.u32 %v290, 14
  %v292 = vsub.s32 %v283, %v291
  %v293 = vsub.s32 0, %v292
  %v294 = vsel %vm281, %v293, %v292
  %vm295 = vcmp.lt.s32.totalorder %v36, 0
  %v296 = vsub.s32 0, %v36
  %v297 = vsel %vm295, %v296, %v36
  %v298 = vmul.u32.u64.compose %v297, 2454267026
  %v299 = vextract.low.u32 %v298
  %v300 = vextract.high.u32 %v298
  %vm301 = vc.u32 %v299, 2454267026
  %v302 = vsel %vm301, 1, 0
  %v303 = vadd.s32 %v300, %v302
  %v304 = vshrl.u32 %v303, 3
  %v305 = vmul.u32 %v304, 14
  %v306 = vsub.s32 %v297, %v305
  %v307 = vsub.s32 0, %v306
  %v308 = vsel %vm295, %v307, %v306
  %vm309 = vcmp.lt.s32.totalorder %v37, 0
  %v310 = vsub.s32 0, %v37
  %v311 = vsel %vm309, %v310, %v37
  %v312 = vmul.u32.u64.compose %v311, 2454267026
  %v313 = vextract.low.u32 %v312
  %v314 = vextract.high.u32 %v312
  %vm315 = vc.u32 %v313, 2454267026
  %v316 = vsel %vm315, 1, 0
  %v317 = vadd.s32 %v314, %v316
  %v318 = vshrl.u32 %v317, 3
  %v319 = vmul.u32 %v318, 14
  %v320 = vsub.s32 %v311, %v319
  %v321 = vsub.s32 0, %v320
  %v322 = vsel %vm309, %v321, %v320
  %vm323 = vcmp.lt.s32.totalorder %v38, 0
  %v324 = vsub.s32 0, %v38
  %v325 = vsel %vm323, %v324, %v38
  %v326 = vmul.u32.u64.compose %v325, 2454267026
  %v327 = vextract.low.u32 %v326
  %v328 = vextract.high.u32 %v326
  %vm329 = vc.u32 %v327, 2454267026
  %v330 = vsel %vm329, 1, 0
  %v331 = vadd.s32 %v328, %v330
  %v332 = vshrl.u32 %v331, 3
  %v333 = vmul.u32 %v332, 14
  %v334 = vsub.s32 %v325, %v333
  %v335 = vsub.s32 0, %v334
  %v336 = vsel %vm323, %v335, %v334
  %vm337 = vcmp.lt.s32.totalorder %v39, 0
  %v338 = vsub.s32 0, %v39
  %v339 = vsel %vm337, %v338, %v39
  %v340 = vmul.u32.u64.compose %v339, 2454267026
  %v341 = vextract.low.u32 %v340
  %v342 = vextract.high.u32 %v340
  %vm343 = vc.u32 %v341, 2454267026
  %v344 = vsel %vm343, 1, 0
  %v345 = vadd.s32 %v342, %v344
  %v346 = vshrl.u32 %v345, 3
  %v347 = vmul.u32 %v346, 14
  %v348 = vsub.s32 %v339, %v347
  %v349 = vsub.s32 0, %v348
  %v350 = vsel %vm337, %v349, %v348
  %vm351 = vcmp.lt.s32.totalorder %v40, 0
  %v352 = vsub.s32 0, %v40
  %v353 = vsel %vm351, %v352, %v40
  %v354 = vmul.u32.u64.compose %v353, 2454267026
  %v355 = vextract.low.u32 %v354
  %v356 = vextract.high.u32 %v354
  %vm357 = vc.u32 %v355, 2454267026
  %v358 = vsel %vm357, 1, 0
  %v359 = vadd.s32 %v356, %v358
  %v360 = vshrl.u32 %v359, 3
  %v361 = vmul.u32 %v360, 14
  %v362 = vsub.s32 %v353, %v361
  %v363 = vsub.s32 0, %v362
  %v364 = vsel %vm351, %v363, %v362
  %vm365 = vcmp.lt.s32.totalorder %v41, 0
  %v366 = vsub.s32 0, %v41
  %v367 = vsel %vm365, %v366, %v41
  %v368 = vmul.u32.u64.compose %v367, 2454267026
  %v369 = vextract.low.u32 %v368
  %v370 = vextract.high.u32 %v368
  %vm371 = vc.u32 %v369, 2454267026
  %v372 = vsel %vm371, 1, 0
  %v373 = vadd.s32 %v370, %v372
  %v374 = vshrl.u32 %v373, 3
  %v375 = vmul.u32 %v374, 14
  %v376 = vsub.s32 %v367, %v375
  %v377 = vsub.s32 0, %v376
  %v378 = vsel %vm365, %v377, %v376
  %vm379 = vcmp.lt.s32.totalorder %v42, 0
  %v380 = vsub.s32 0, %v42
  %v381 = vsel %vm379, %v380, %v42
  %v382 = vmul.u32.u64.compose %v381, 2454267026
  %v383 = vextract.low.u32 %v382
  %v384 = vextract.high.u32 %v382
  %vm385 = vc.u32 %v383, 2454267026
  %v386 = vsel %vm385, 1, 0
  %v387 = vadd.s32 %v384, %v386
  %v388 = vshrl.u32 %v387, 3
  %v389 = vmul.u32 %v388, 14
  %v390 = vsub.s32 %v381, %v389
  %v391 = vsub.s32 0, %v390
  %v392 = vsel %vm379, %v391, %v390
  %vm393 = vcmp.ne.s32.totalorder %v56, 0
  %vm394 = vcmp.ne.s32.totalorder %v70, 0
  %vm395 = vcmp.ne.s32.totalorder %v84, 0
  %vm396 = vcmp.ne.s32.totalorder %v98, 0
  %vm397 = vcmp.ne.s32.totalorder %v112, 0
  %vm398 = vcmp.ne.s32.totalorder %v126, 0
  %vm399 = vcmp.ne.s32.totalorder %v140, 0
  %vm400 = vcmp.ne.s32.totalorder %v154, 0
  %vm401 = vcmp.ne.s32.totalorder %v168, 0
  %vm402 = vcmp.ne.s32.totalorder %v182, 0
  %vm403 = vcmp.ne.s32.totalorder %v196, 0
  %vm404 = vcmp.ne.s32.totalorder %v210, 0
  %vm405 = vcmp.ne.s32.totalorder %v224, 0
  %vm406 = vcmp.ne.s32.totalorder %v238, 0
  %vm407 = vcmp.ne.s32.totalorder %v252, 0
  %vm408 = vcmp.ne.s32.totalorder %v266, 0
  %vm409 = vcmp.ne.s32.totalorder %v280, 0
  %vm410 = vcmp.ne.s32.totalorder %v294, 0
  %vm411 = vcmp.ne.s32.totalorder %v308, 0
  %vm412 = vcmp.ne.s32.totalorder %v322, 0
  %vm413 = vcmp.ne.s32.totalorder %v336, 0
  %vm414 = vcmp.ne.s32.totalorder %v350, 0
  %vm415 = vcmp.ne.s32.totalorder %v364, 0
  %vm416 = vcmp.ne.s32.totalorder %v378, 0
  %vm417 = vcmp.ne.s32.totalorder %v392, 0
  %vm418 = vcmp.lt.s32.totalorder %v56, 0
  %vm419 = vcmp.lt.s32.totalorder %v70, 0
  %vm420 = vcmp.lt.s32.totalorder %v84, 0
  %vm421 = vcmp.lt.s32.totalorder %v98, 0
  %vm422 = vcmp.lt.s32.totalorder %v112, 0
  %vm423 = vcmp.lt.s32.totalorder %v126, 0
  %vm424 = vcmp.lt.s32.totalorder %v140, 0
  %vm425 = vcmp.lt.s32.totalorder %v154, 0
  %vm426 = vcmp.lt.s32.totalorder %v168, 0
  %vm427 = vcmp.lt.s32.totalorder %v182, 0
  %vm428 = vcmp.lt.s32.totalorder %v196, 0
  %vm429 = vcmp.lt.s32.totalorder %v210, 0
  %vm430 = vcmp.lt.s32.totalorder %v224, 0
  %vm431 = vcmp.lt.s32.totalorder %v238, 0
  %vm432 = vcmp.lt.s32.totalorder %v252, 0
  %vm433 = vcmp.lt.s32.totalorder %v266, 0
  %vm434 = vcmp.lt.s32.totalorder %v280, 0
  %vm435 = vcmp.lt.s32.totalorder %v294, 0
  %vm436 = vcmp.lt.s32.totalorder %v308, 0
  %vm437 = vcmp.lt.s32.totalorder %v322, 0
  %vm438 = vcmp.lt.s32.totalorder %v336, 0
  %vm439 = vcmp.lt.s32.totalorder %v350, 0
  %vm440 = vcmp.lt.s32.totalorder %v364, 0
  %vm441 = vcmp.lt.s32.totalorder %v378, 0
  %vm442 = vcmp.lt.s32.totalorder %v392, 0
  %vm443 = vmand %vm418, %vm393
  %vm444 = vmand %vm419, %vm394
  %vm445 = vmand %vm420, %vm395
  %vm446 = vmand %vm421, %vm396
  %vm447 = vmand %vm422, %vm397
  %vm448 = vmand %vm423, %vm398
  %vm449 = vmand %vm424, %vm399
  %vm450 = vmand %vm425, %vm400
  %vm451 = vmand %vm426, %vm401
  %vm452 = vmand %vm427, %vm402
  %vm453 = vmand %vm428, %vm403
  %vm454 = vmand %vm429, %vm404
  %vm455 = vmand %vm430, %vm405
  %vm456 = vmand %vm431, %vm406
  %vm457 = vmand %vm432, %vm407
  %vm458 = vmand %vm433, %vm408
  %vm459 = vmand %vm434, %vm409
  %vm460 = vmand %vm435, %vm410
  %vm461 = vmand %vm436, %vm411
  %vm462 = vmand %vm437, %vm412
  %vm463 = vmand %vm438, %vm413
  %vm464 = vmand %vm439, %vm414
  %vm465 = vmand %vm440, %vm415
  %vm466 = vmand %vm441, %vm416
  %vm467 = vmand %vm442, %vm417
  %v468 = vadd.s32 %v56, 14
  %v469 = vadd.s32 %v70, 14
  %v470 = vadd.s32 %v84, 14
  %v471 = vadd.s32 %v98, 14
  %v472 = vadd.s32 %v112, 14
  %v473 = vadd.s32 %v126, 14
  %v474 = vadd.s32 %v140, 14
  %v475 = vadd.s32 %v154, 14
  %v476 = vadd.s32 %v168, 14
  %v477 = vadd.s32 %v182, 14
  %v478 = vadd.s32 %v196, 14
  %v479 = vadd.s32 %v210, 14
  %v480 = vadd.s32 %v224, 14
  %v481 = vadd.s32 %v238, 14
  %v482 = vadd.s32 %v252, 14
  %v483 = vadd.s32 %v266, 14
  %v484 = vadd.s32 %v280, 14
  %v485 = vadd.s32 %v294, 14
  %v486 = vadd.s32 %v308, 14
  %v487 = vadd.s32 %v322, 14
  %v488 = vadd.s32 %v336, 14
  %v489 = vadd.s32 %v350, 14
  %v490 = vadd.s32 %v364, 14
  %v491 = vadd.s32 %v378, 14
  %v492 = vadd.s32 %v392, 14
  %v493 = vsel %vm443, %v468, %v56
  %v494 = vsel %vm444, %v469, %v70
  %v495 = vsel %vm445, %v470, %v84
  %v496 = vsel %vm446, %v471, %v98
  %v497 = vsel %vm447, %v472, %v112
  %v498 = vsel %vm448, %v473, %v126
  %v499 = vsel %vm449, %v474, %v140
  %v500 = vsel %vm450, %v475, %v154
  %v501 = vsel %vm451, %v476, %v168
  %v502 = vsel %vm452, %v477, %v182
  %v503 = vsel %vm453, %v478, %v196
  %v504 = vsel %vm454, %v479, %v210
  %v505 = vsel %vm455, %v480, %v224
  %v506 = vsel %vm456, %v481, %v238
  %v507 = vsel %vm457, %v482, %v252
  %v508 = vsel %vm458, %v483, %v266
  %v509 = vsel %vm459, %v484, %v280
  %v510 = vsel %vm460, %v485, %v294
  %v511 = vsel %vm461, %v486, %v308
  %v512 = vsel %vm462, %v487, %v322
  %v513 = vsel %vm463, %v488, %v336
  %v514 = vsel %vm464, %v489, %v350
  %v515 = vsel %vm465, %v490, %v364
  %v516 = vsel %vm466, %v491, %v378
  %v517 = vsel %vm467, %v492, %v392
  %v518 = vld [vmem:[%s2] sm:$0x1]
  %v520 = vlaneseq
  %v521 = vshrl.u32 %v520, 7
  %v522 = vsub.s32 0, %v521
  %v523 = vrot.slane %v518, %v522
  %v525 = vld [vmem:[%s0 + $0x4] sm:$0xc]
  %v526 = vld [vmem:[%s0 + $0x8] sm:$0xf]
  %v527 = vld [vmem:[%s0 + $0xc] sm:$0xf]
  %v528 = vld [vmem:[%s0 + $0x10] sm:$0xf]
  %v529 = vld [vmem:[%s0 + $0x14] sm:$0xf]
  %v530 = vld [vmem:[%s0 + $0x18] sm:$0xf]
  %v531 = vld [vmem:[%s0 + $0x1c] sm:$0xf]
  %v532 = vld [vmem:[%s0 + $0x20] sm:$0xf]
  %v533 = vld [vmem:[%s0 + $0x24] sm:$0xf]
  %v534 = vld [vmem:[%s0 + $0x28] sm:$0xf]
  %v535 = vld [vmem:[%s0 + $0x2c] sm:$0xf]
  %v536 = vld [vmem:[%s0 + $0x30] sm:$0xf]
  %v537 = vld [vmem:[%s0 + $0x34] sm:$0xf]
  %v538 = vld [vmem:[%s0 + $0x38] sm:$0xf]
  %v539 = vld [vmem:[%s0 + $0x3c] sm:$0xf]
  %v540 = vld [vmem:[%s0 + $0x40] sm:$0xf]
  %v541 = vld [vmem:[%s0 + $0x44] sm:$0xf]
  %v542 = vld [vmem:[%s0 + $0x48] sm:$0xf]
  %v543 = vld [vmem:[%s0 + $0x4c] sm:$0xf]
  %v544 = vld [vmem:[%s0 + $0x50] sm:$0xf]
  %v545 = vld [vmem:[%s0 + $0x54] sm:$0xf]
  %v546 = vld [vmem:[%s0 + $0x58] sm:$0xf]
  %v547 = vld [vmem:[%s0 + $0x5c] sm:$0xf]
  %v548 = vld [vmem:[%s0 + $0x60] sm:$0xf]
  %v549 = vld [vmem:[%s0 + $0x64] sm:$0xf]
  %v550 = vld [vmem:[%s0 + $0x68] sm:$0x1]
  %vm551 = vcmp.ge.s32.totalorder %v493, 1
  %vm552 = vcmp.ge.s32.totalorder %v494, 1
  %vm553 = vcmp.ge.s32.totalorder %v495, 1
  %vm554 = vcmp.ge.s32.totalorder %v496, 1
  %vm555 = vcmp.ge.s32.totalorder %v497, 1
  %vm556 = vcmp.ge.s32.totalorder %v498, 1
  %vm557 = vcmp.ge.s32.totalorder %v499, 1
  %vm558 = vcmp.ge.s32.totalorder %v500, 1
  %vm559 = vcmp.ge.s32.totalorder %v501, 1
  %vm560 = vcmp.ge.s32.totalorder %v502, 1
  %vm561 = vcmp.ge.s32.totalorder %v503, 1
  %vm562 = vcmp.ge.s32.totalorder %v504, 1
  %vm563 = vcmp.ge.s32.totalorder %v505, 1
  %vm564 = vcmp.ge.s32.totalorder %v506, 1
  %vm565 = vcmp.ge.s32.totalorder %v507, 1
  %vm566 = vcmp.ge.s32.totalorder %v508, 1
  %vm567 = vcmp.ge.s32.totalorder %v509, 1
  %vm568 = vcmp.ge.s32.totalorder %v510, 1
  %vm569 = vcmp.ge.s32.totalorder %v511, 1
  %vm570 = vcmp.ge.s32.totalorder %v512, 1
  %vm571 = vcmp.ge.s32.totalorder %v513, 1
  %vm572 = vcmp.ge.s32.totalorder %v514, 1
  %vm573 = vcmp.ge.s32.totalorder %v515, 1
  %vm574 = vcmp.ge.s32.totalorder %v516, 1
  %vm575 = vcmp.ge.s32.totalorder %v517, 1
  %vm576 = vcmp.lt.s32.totalorder %v493, 14
  %vm577 = vcmp.lt.s32.totalorder %v494, 14
  %vm578 = vcmp.lt.s32.totalorder %v495, 14
  %vm579 = vcmp.lt.s32.totalorder %v496, 14
  %vm580 = vcmp.lt.s32.totalorder %v497, 14
  %vm581 = vcmp.lt.s32.totalorder %v498, 14
  %vm582 = vcmp.lt.s32.totalorder %v499, 14
  %vm583 = vcmp.lt.s32.totalorder %v500, 14
  %vm584 = vcmp.lt.s32.totalorder %v501, 14
  %vm585 = vcmp.lt.s32.totalorder %v502, 14
  %vm586 = vcmp.lt.s32.totalorder %v503, 14
  %vm587 = vcmp.lt.s32.totalorder %v504, 14
  %vm588 = vcmp.lt.s32.totalorder %v505, 14
  %vm589 = vcmp.lt.s32.totalorder %v506, 14
  %vm590 = vcmp.lt.s32.totalorder %v507, 14
  %vm591 = vcmp.lt.s32.totalorder %v508, 14
  %vm592 = vcmp.lt.s32.totalorder %v509, 14
  %vm593 = vcmp.lt.s32.totalorder %v510, 14
  %vm594 = vcmp.lt.s32.totalorder %v511, 14
  %vm595 = vcmp.lt.s32.totalorder %v512, 14
  %vm596 = vcmp.lt.s32.totalorder %v513, 14
  %vm597 = vcmp.lt.s32.totalorder %v514, 14
  %vm598 = vcmp.lt.s32.totalorder %v515, 14
  %vm599 = vcmp.lt.s32.totalorder %v516, 14
  %vm600 = vcmp.lt.s32.totalorder %v517, 14
  %vm601 = vmand %vm551, %vm576
  %vm602 = vmand %vm552, %vm577
  %vm603 = vmand %vm553, %vm578
  %vm604 = vmand %vm554, %vm579
  %vm605 = vmand %vm555, %vm580
  %vm606 = vmand %vm556, %vm581
  %vm607 = vmand %vm557, %vm582
  %vm608 = vmand %vm558, %vm583
  %vm609 = vmand %vm559, %vm584
  %vm610 = vmand %vm560, %vm585
  %vm611 = vmand %vm561, %vm586
  %vm612 = vmand %vm562, %vm587
  %vm613 = vmand %vm563, %vm588
  %vm614 = vmand %vm564, %vm589
  %vm615 = vmand %vm565, %vm590
  %vm616 = vmand %vm566, %vm591
  %vm617 = vmand %vm567, %vm592
  %vm618 = vmand %vm568, %vm593
  %vm619 = vmand %vm569, %vm594
  %vm620 = vmand %vm570, %vm595
  %vm621 = vmand %vm571, %vm596
  %vm622 = vmand %vm572, %vm597
  %vm623 = vmand %vm573, %vm598
  %vm624 = vmand %vm574, %vm599
  %vm625 = vmand %vm575, %vm600
  %v626 = vsel %vm601, 1, 0
  %v627 = vsel %vm602, 1, 0
  %v628 = vsel %vm603, 1, 0
  %v629 = vsel %vm604, 1, 0
  %v630 = vsel %vm605, 1, 0
  %v631 = vsel %vm606, 1, 0
  %v632 = vsel %vm607, 1, 0
  %v633 = vsel %vm608, 1, 0
  %v634 = vsel %vm609, 1, 0
  %v635 = vsel %vm610, 1, 0
  %v636 = vsel %vm611, 1, 0
  %v637 = vsel %vm612, 1, 0
  %v638 = vsel %vm613, 1, 0
  %v639 = vsel %vm614, 1, 0
  %v640 = vsel %vm615, 1, 0
  %v641 = vsel %vm616, 1, 0
  %v642 = vsel %vm617, 1, 0
  %v643 = vsel %vm618, 1, 0
  %v644 = vsel %vm619, 1, 0
  %v645 = vsel %vm620, 1, 0
  %v646 = vsel %vm621, 1, 0
  %v647 = vsel %vm622, 1, 0
  %v648 = vsel %vm623, 1, 0
  %v649 = vsel %vm624, 1, 0
  %v650 = vsel %vm625, 1, 0
  %vm651 = vcmp.eq.s32.totalorder %v626, 1
  %vm652 = vcmp.eq.s32.totalorder %v627, 1
  %vm653 = vcmp.eq.s32.totalorder %v628, 1
  %vm654 = vcmp.eq.s32.totalorder %v629, 1
  %vm655 = vcmp.eq.s32.totalorder %v630, 1
  %vm656 = vcmp.eq.s32.totalorder %v631, 1
  %vm657 = vcmp.eq.s32.totalorder %v632, 1
  %vm658 = vcmp.eq.s32.totalorder %v633, 1
  %vm659 = vcmp.eq.s32.totalorder %v634, 1
  %vm660 = vcmp.eq.s32.totalorder %v635, 1
  %vm661 = vcmp.eq.s32.totalorder %v636, 1
  %vm662 = vcmp.eq.s32.totalorder %v637, 1
  %vm663 = vcmp.eq.s32.totalorder %v638, 1
  %vm664 = vcmp.eq.s32.totalorder %v639, 1
  %vm665 = vcmp.eq.s32.totalorder %v640, 1
  %vm666 = vcmp.eq.s32.totalorder %v641, 1
  %vm667 = vcmp.eq.s32.totalorder %v642, 1
  %vm668 = vcmp.eq.s32.totalorder %v643, 1
  %vm669 = vcmp.eq.s32.totalorder %v644, 1
  %vm670 = vcmp.eq.s32.totalorder %v645, 1
  %vm671 = vcmp.eq.s32.totalorder %v646, 1
  %vm672 = vcmp.eq.s32.totalorder %v647, 1
  %vm673 = vcmp.eq.s32.totalorder %v648, 1
  %vm674 = vcmp.eq.s32.totalorder %v649, 1
  %vm675 = vcmp.eq.s32.totalorder %v650, 1
  %vm676 = vmpackc.low %vm651, %vm651
  %vm677 = vmpackc.low %vm652, %vm652
  %vm678 = vmpackc.low %vm653, %vm653
  %vm679 = vmpackc.low %vm654, %vm654
  %vm680 = vmpackc.low %vm655, %vm655
  %vm681 = vmpackc.low %vm656, %vm656
  %vm682 = vmpackc.low %vm657, %vm657
  %vm683 = vmpackc.low %vm658, %vm658
  %vm684 = vmpackc.low %vm659, %vm659
  %vm685 = vmpackc.low %vm660, %vm660
  %vm686 = vmpackc.low %vm661, %vm661
  %vm687 = vmpackc.low %vm662, %vm662
  %vm688 = vmpackc.low %vm663, %vm663
  %vm689 = vmpackc.low %vm664, %vm664
  %vm690 = vmpackc.low %vm665, %vm665
  %vm691 = vmpackc.low %vm666, %vm666
  %vm692 = vmpackc.low %vm667, %vm667
  %vm693 = vmpackc.low %vm668, %vm668
  %vm694 = vmpackc.low %vm669, %vm669
  %vm695 = vmpackc.low %vm670, %vm670
  %vm696 = vmpackc.low %vm671, %vm671
  %vm697 = vmpackc.low %vm672, %vm672
  %vm698 = vmpackc.low %vm673, %vm673
  %vm699 = vmpackc.low %vm674, %vm674
  %vm700 = vmpackc.low %vm675, %vm675
  %v701 = vsel %vm676, 65537, 0
  %v702 = vsel %vm677, 65537, 0
  %v703 = vsel %vm678, 65537, 0
  %v704 = vsel %vm679, 65537, 0
  %v705 = vsel %vm680, 65537, 0
  %v706 = vsel %vm681, 65537, 0
  %v707 = vsel %vm682, 65537, 0
  %v708 = vsel %vm683, 65537, 0
  %v709 = vsel %vm684, 65537, 0
  %v710 = vsel %vm685, 65537, 0
  %v711 = vsel %vm686, 65537, 0
  %v712 = vsel %vm687, 65537, 0
  %v713 = vsel %vm688, 65537, 0
  %v714 = vsel %vm689, 65537, 0
  %v715 = vsel %vm690, 65537, 0
  %v716 = vsel %vm691, 65537, 0
  %v717 = vsel %vm692, 65537, 0
  %v718 = vsel %vm693, 65537, 0
  %v719 = vsel %vm694, 65537, 0
  %v720 = vsel %vm695, 65537, 0
  %v721 = vsel %vm696, 65537, 0
  %v722 = vsel %vm697, 65537, 0
  %v723 = vsel %vm698, 65537, 0
  %v724 = vsel %vm699, 65537, 0
  %v725 = vsel %vm700, 65537, 0
  %vm726 = vsmask.f32 2304
  %vm727 = vsmask.f32 6416
  %vm728 = vmor %vm726, %vm727
  %v730 = vshrl.u32 %v701, 16
  %v732 = vrot.slane %v730, 5
  %v733 = vshll.u32 %v701, 16
  %v735 = vrot.slane %v733, 6
  %v736 = vor.u32 %v732, %v735
  %v737 = vrot.slane %v736, 4
  %v739 = vshrl.u32 %v702, 16
  %v741 = vrot.slane %v739, 5
  %v742 = vshll.u32 %v702, 16
  %v744 = vrot.slane %v742, 6
  %v745 = vor.u32 %v741, %v744
  %v746 = vsel %vm728, %v737, %v745
  %v747 = vrot.slane %v745, 4
  %v749 = vshrl.u32 %v703, 16
  %v751 = vrot.slane %v749, 5
  %v752 = vshll.u32 %v703, 16
  %v754 = vrot.slane %v752, 6
  %v755 = vor.u32 %v751, %v754
  %v756 = vsel %vm728, %v747, %v755
  %v757 = vrot.slane %v755, 4
  %v759 = vshrl.u32 %v704, 16
  %v761 = vrot.slane %v759, 5
  %v762 = vshll.u32 %v704, 16
  %v764 = vrot.slane %v762, 6
  %v765 = vor.u32 %v761, %v764
  %v766 = vsel %vm728, %v757, %v765
  %v767 = vrot.slane %v765, 4
  %v769 = vshrl.u32 %v705, 16
  %v771 = vrot.slane %v769, 5
  %v772 = vshll.u32 %v705, 16
  %v774 = vrot.slane %v772, 6
  %v775 = vor.u32 %v771, %v774
  %v776 = vsel %vm728, %v767, %v775
  %v777 = vrot.slane %v775, 4
  %v779 = vshrl.u32 %v706, 16
  %v781 = vrot.slane %v779, 5
  %v782 = vshll.u32 %v706, 16
  %v784 = vrot.slane %v782, 6
  %v785 = vor.u32 %v781, %v784
  %v786 = vsel %vm728, %v777, %v785
  %v787 = vrot.slane %v785, 4
  %v789 = vshrl.u32 %v707, 16
  %v791 = vrot.slane %v789, 5
  %v792 = vshll.u32 %v707, 16
  %v794 = vrot.slane %v792, 6
  %v795 = vor.u32 %v791, %v794
  %v796 = vsel %vm728, %v787, %v795
  %v797 = vrot.slane %v795, 4
  %v799 = vshrl.u32 %v708, 16
  %v801 = vrot.slane %v799, 5
  %v802 = vshll.u32 %v708, 16
  %v804 = vrot.slane %v802, 6
  %v805 = vor.u32 %v801, %v804
  %v806 = vsel %vm728, %v797, %v805
  %v807 = vrot.slane %v805, 4
  %v809 = vshrl.u32 %v709, 16
  %v811 = vrot.slane %v809, 5
  %v812 = vshll.u32 %v709, 16
  %v814 = vrot.slane %v812, 6
  %v815 = vor.u32 %v811, %v814
  %v816 = vsel %vm728, %v807, %v815
  %v817 = vrot.slane %v815, 4
  %v819 = vshrl.u32 %v710, 16
  %v821 = vrot.slane %v819, 5
  %v822 = vshll.u32 %v710, 16
  %v824 = vrot.slane %v822, 6
  %v825 = vor.u32 %v821, %v824
  %v826 = vsel %vm728, %v817, %v825
  %v827 = vrot.slane %v825, 4
  %v829 = vshrl.u32 %v711, 16
  %v831 = vrot.slane %v829, 5
  %v832 = vshll.u32 %v711, 16
  %v834 = vrot.slane %v832, 6
  %v835 = vor.u32 %v831, %v834
  %v836 = vsel %vm728, %v827, %v835
  %v837 = vrot.slane %v835, 4
  %v839 = vshrl.u32 %v712, 16
  %v841 = vrot.slane %v839, 5
  %v842 = vshll.u32 %v712, 16
  %v844 = vrot.slane %v842, 6
  %v845 = vor.u32 %v841, %v844
  %v846 = vsel %vm728, %v837, %v845
  %v847 = vrot.slane %v845, 4
  %v849 = vshrl.u32 %v713, 16
  %v851 = vrot.slane %v849, 5
  %v852 = vshll.u32 %v713, 16
  %v854 = vrot.slane %v852, 6
  %v855 = vor.u32 %v851, %v854
  %v856 = vsel %vm728, %v847, %v855
  %v857 = vrot.slane %v855, 4
  %v859 = vshrl.u32 %v714, 16
  %v861 = vrot.slane %v859, 5
  %v862 = vshll.u32 %v714, 16
  %v864 = vrot.slane %v862, 6
  %v865 = vor.u32 %v861, %v864
  %v866 = vsel %vm728, %v857, %v865
  %v867 = vrot.slane %v865, 4
  %v869 = vshrl.u32 %v715, 16
  %v871 = vrot.slane %v869, 5
  %v872 = vshll.u32 %v715, 16
  %v874 = vrot.slane %v872, 6
  %v875 = vor.u32 %v871, %v874
  %v876 = vsel %vm728, %v867, %v875
  %v877 = vrot.slane %v875, 4
  %v879 = vshrl.u32 %v716, 16
  %v881 = vrot.slane %v879, 5
  %v882 = vshll.u32 %v716, 16
  %v884 = vrot.slane %v882, 6
  %v885 = vor.u32 %v881, %v884
  %v886 = vsel %vm728, %v877, %v885
  %v887 = vrot.slane %v885, 4
  %v889 = vshrl.u32 %v717, 16
  %v891 = vrot.slane %v889, 5
  %v892 = vshll.u32 %v717, 16
  %v894 = vrot.slane %v892, 6
  %v895 = vor.u32 %v891, %v894
  %v896 = vsel %vm728, %v887, %v895
  %v897 = vrot.slane %v895, 4
  %v899 = vshrl.u32 %v718, 16
  %v901 = vrot.slane %v899, 5
  %v902 = vshll.u32 %v718, 16
  %v904 = vrot.slane %v902, 6
  %v905 = vor.u32 %v901, %v904
  %v906 = vsel %vm728, %v897, %v905
  %v907 = vrot.slane %v905, 4
  %v909 = vshrl.u32 %v719, 16
  %v911 = vrot.slane %v909, 5
  %v912 = vshll.u32 %v719, 16
  %v914 = vrot.slane %v912, 6
  %v915 = vor.u32 %v911, %v914
  %v916 = vsel %vm728, %v907, %v915
  %v917 = vrot.slane %v915, 4
  %v919 = vshrl.u32 %v720, 16
  %v921 = vrot.slane %v919, 5
  %v922 = vshll.u32 %v720, 16
  %v924 = vrot.slane %v922, 6
  %v925 = vor.u32 %v921, %v924
  %v926 = vsel %vm728, %v917, %v925
  %v927 = vrot.slane %v925, 4
  %v929 = vshrl.u32 %v721, 16
  %v931 = vrot.slane %v929, 5
  %v932 = vshll.u32 %v721, 16
  %v934 = vrot.slane %v932, 6
  %v935 = vor.u32 %v931, %v934
  %v936 = vsel %vm728, %v927, %v935
  %v937 = vrot.slane %v935, 4
  %v939 = vshrl.u32 %v722, 16
  %v941 = vrot.slane %v939, 5
  %v942 = vshll.u32 %v722, 16
  %v944 = vrot.slane %v942, 6
  %v945 = vor.u32 %v941, %v944
  %v946 = vsel %vm728, %v937, %v945
  %v947 = vrot.slane %v945, 4
  %v949 = vshrl.u32 %v723, 16
  %v951 = vrot.slane %v949, 5
  %v952 = vshll.u32 %v723, 16
  %v954 = vrot.slane %v952, 6
  %v955 = vor.u32 %v951, %v954
  %v956 = vsel %vm728, %v947, %v955
  %v957 = vrot.slane %v955, 4
  %v959 = vshrl.u32 %v724, 16
  %v961 = vrot.slane %v959, 5
  %v962 = vshll.u32 %v724, 16
  %v964 = vrot.slane %v962, 6
  %v965 = vor.u32 %v961, %v964
  %v966 = vsel %vm728, %v957, %v965
  %v967 = vrot.slane %v965, 4
  %v969 = vshrl.u32 %v725, 16
  %v971 = vrot.slane %v969, 5
  %v972 = vshll.u32 %v725, 16
  %v974 = vrot.slane %v972, 6
  %v975 = vor.u32 %v971, %v974
  %v976 = vsel %vm728, %v967, %v975
  %v977 = vrot.slane %v971, 4
  %vm978 = vcmp.ne.s16.totalorder %v736, 0
  %vm979 = vcmp.ne.s16.totalorder %v746, 0
  %vm980 = vcmp.ne.s16.totalorder %v756, 0
  %vm981 = vcmp.ne.s16.totalorder %v766, 0
  %vm982 = vcmp.ne.s16.totalorder %v776, 0
  %vm983 = vcmp.ne.s16.totalorder %v786, 0
  %vm984 = vcmp.ne.s16.totalorder %v796, 0
  %vm985 = vcmp.ne.s16.totalorder %v806, 0
  %vm986 = vcmp.ne.s16.totalorder %v816, 0
  %vm987 = vcmp.ne.s16.totalorder %v826, 0
  %vm988 = vcmp.ne.s16.totalorder %v836, 0
  %vm989 = vcmp.ne.s16.totalorder %v846, 0
  %vm990 = vcmp.ne.s16.totalorder %v856, 0
  %vm991 = vcmp.ne.s16.totalorder %v866, 0
  %vm992 = vcmp.ne.s16.totalorder %v876, 0
  %vm993 = vcmp.ne.s16.totalorder %v886, 0
  %vm994 = vcmp.ne.s16.totalorder %v896, 0
  %vm995 = vcmp.ne.s16.totalorder %v906, 0
  %vm996 = vcmp.ne.s16.totalorder %v916, 0
  %vm997 = vcmp.ne.s16.totalorder %v926, 0
  %vm998 = vcmp.ne.s16.totalorder %v936, 0
  %vm999 = vcmp.ne.s16.totalorder %v946, 0
  %vm1000 = vcmp.ne.s16.totalorder %v956, 0
  %vm1001 = vcmp.ne.s16.totalorder %v966, 0
  %vm1002 = vcmp.ne.s16.totalorder %v976, 0
  %vm1003 = vcmp.ne.s16.totalorder %v977, 0
  %v1004 = vsel %vm978, %v525, 0
  %v1005 = vsel %vm979, %v526, 0
  %v1006 = vsel %vm980, %v527, 0
  %v1007 = vsel %vm981, %v528, 0
  %v1008 = vsel %vm982, %v529, 0
  %v1009 = vsel %vm983, %v530, 0
  %v1010 = vsel %vm984, %v531, 0
  %v1011 = vsel %vm985, %v532, 0
  %v1012 = vsel %vm986, %v533, 0
  %v1013 = vsel %vm987, %v534, 0
  %v1014 = vsel %vm988, %v535, 0
  %v1015 = vsel %vm989, %v536, 0
  %v1016 = vsel %vm990, %v537, 0
  %v1017 = vsel %vm991, %v538, 0
  %v1018 = vsel %vm992, %v539, 0
  %v1019 = vsel %vm993, %v540, 0
  %v1020 = vsel %vm994, %v541, 0
  %v1021 = vsel %vm995, %v542, 0
  %v1022 = vsel %vm996, %v543, 0
  %v1023 = vsel %vm997, %v544, 0
  %v1024 = vsel %vm998, %v545, 0
  %v1025 = vsel %vm999, %v546, 0
  %v1026 = vsel %vm1000, %v547, 0
  %v1027 = vsel %vm1001, %v548, 0
  %v1028 = vsel %vm1002, %v549, 0
  %v1029 = vsel %vm1003, %v550, 0
  %v1030 = vld [vmem:[%s1] sm:$0xf]
  %v1031 = vld [vmem:[%s1 + $0x4] sm:$0xf]
  %v1032 = vld [vmem:[%s1 + $0x8] sm:$0xf]
  %v1033 = vld [vmem:[%s1 + $0xc] sm:$0xf]
  %v1060 = vunpack.c.l.b16 %v1004
  %v1061 = vunpack.c.l.b16 %v1005
  %v1062 = vunpack.c.l.b16 %v1006
  %v1063 = vunpack.c.l.b16 %v1007
  %v1064 = vunpack.c.l.b16 %v1008
  %v1065 = vunpack.c.l.b16 %v1009
  %v1066 = vunpack.c.l.b16 %v1010
  %v1067 = vunpack.c.l.b16 %v1011
  %v1068 = vunpack.c.l.b16 %v1012
  %v1069 = vunpack.c.l.b16 %v1013
  %v1070 = vunpack.c.l.b16 %v1014
  %v1071 = vunpack.c.l.b16 %v1015
  %v1072 = vunpack.c.l.b16 %v1016
  %v1073 = vunpack.c.l.b16 %v1017
  %v1074 = vunpack.c.l.b16 %v1018
  %v1075 = vunpack.c.l.b16 %v1019
  %v1076 = vunpack.c.l.b16 %v1020
  %v1077 = vunpack.c.l.b16 %v1021
  %v1078 = vunpack.c.l.b16 %v1022
  %v1079 = vunpack.c.l.b16 %v1023
  %v1080 = vunpack.c.l.b16 %v1024
  %v1081 = vunpack.c.l.b16 %v1025
  %v1082 = vunpack.c.l.b16 %v1026
  %v1083 = vunpack.c.l.b16 %v1027
  %v1084 = vunpack.c.l.b16 %v1028
  %v1085 = vunpack.c.l.b16 %v1029
  %v1086 = vpack.c.b16 %v1061, %v1060
  %v1087 = vpack.c.b16 %v1063, %v1062
  %v1088 = vpack.c.b16 %v1065, %v1064
  %v1089 = vpack.c.b16 %v1067, %v1066
  %v1090 = vpack.c.b16 %v1069, %v1068
  %v1091 = vpack.c.b16 %v1071, %v1070
  %v1092 = vpack.c.b16 %v1073, %v1072
  %v1093 = vpack.c.b16 %v1075, %v1074
  %v1094 = vpack.c.b16 %v1077, %v1076
  %v1095 = vpack.c.b16 %v1079, %v1078
  %v1096 = vpack.c.b16 %v1081, %v1080
  %v1097 = vpack.c.b16 %v1083, %v1082
  %v1098 = vpack.c.b16 %v1085, %v1084
  %vm1099 = vsmask.f32 5376
  %v1101 = vshrl.u32 %v1086, 16
  %v1103 = vrot.slane %v1101, 2
  %v1104 = vshll.u32 %v1086, 16
  %v1106 = vrot.slane %v1104, 3
  %v1107 = vor.u32 %v1103, %v1106
  %v1109 = vshrl.u32 %v1087, 16
  %v1111 = vrot.slane %v1109, 2
  %v1112 = vshll.u32 %v1087, 16
  %v1114 = vrot.slane %v1112, 3
  %v1115 = vor.u32 %v1111, %v1114
  %v1116 = vsel %vm1099, %v1107, %v1115
  %v1118 = vshrl.u32 %v1088, 16
  %v1120 = vrot.slane %v1118, 2
  %v1121 = vshll.u32 %v1088, 16
  %v1123 = vrot.slane %v1121, 3
  %v1124 = vor.u32 %v1120, %v1123
  %v1125 = vsel %vm1099, %v1115, %v1124
  %v1127 = vshrl.u32 %v1089, 16
  %v1129 = vrot.slane %v1127, 2
  %v1130 = vshll.u32 %v1089, 16
  %v1132 = vrot.slane %v1130, 3
  %v1133 = vor.u32 %v1129, %v1132
  %v1134 = vsel %vm1099, %v1124, %v1133
  %v1136 = vshrl.u32 %v1090, 16
  %v1138 = vrot.slane %v1136, 2
  %v1139 = vshll.u32 %v1090, 16
  %v1141 = vrot.slane %v1139, 3
  %v1142 = vor.u32 %v1138, %v1141
  %v1143 = vsel %vm1099, %v1133, %v1142
  %v1145 = vshrl.u32 %v1091, 16
  %v1147 = vrot.slane %v1145, 2
  %v1148 = vshll.u32 %v1091, 16
  %v1150 = vrot.slane %v1148, 3
  %v1151 = vor.u32 %v1147, %v1150
  %v1152 = vsel %vm1099, %v1142, %v1151
  %v1154 = vshrl.u32 %v1092, 16
  %v1156 = vrot.slane %v1154, 2
  %v1157 = vshll.u32 %v1092, 16
  %v1159 = vrot.slane %v1157, 3
  %v1160 = vor.u32 %v1156, %v1159
  %v1161 = vsel %vm1099, %v1151, %v1160
  %v1163 = vshrl.u32 %v1093, 16
  %v1165 = vrot.slane %v1163, 2
  %v1166 = vshll.u32 %v1093, 16
  %v1168 = vrot.slane %v1166, 3
  %v1169 = vor.u32 %v1165, %v1168
  %v1170 = vsel %vm1099, %v1160, %v1169
  %v1172 = vshrl.u32 %v1094, 16
  %v1174 = vrot.slane %v1172, 2
  %v1175 = vshll.u32 %v1094, 16
  %v1177 = vrot.slane %v1175, 3
  %v1178 = vor.u32 %v1174, %v1177
  %v1179 = vsel %vm1099, %v1169, %v1178
  %v1181 = vshrl.u32 %v1095, 16
  %v1183 = vrot.slane %v1181, 2
  %v1184 = vshll.u32 %v1095, 16
  %v1186 = vrot.slane %v1184, 3
  %v1187 = vor.u32 %v1183, %v1186
  %v1188 = vsel %vm1099, %v1178, %v1187
  %v1190 = vshrl.u32 %v1096, 16
  %v1192 = vrot.slane %v1190, 2
  %v1193 = vshll.u32 %v1096, 16
  %v1195 = vrot.slane %v1193, 3
  %v1196 = vor.u32 %v1192, %v1195
  %v1197 = vsel %vm1099, %v1187, %v1196
  %v1199 = vshrl.u32 %v1097, 16
  %v1201 = vrot.slane %v1199, 2
  %v1202 = vshll.u32 %v1097, 16
  %v1204 = vrot.slane %v1202, 3
  %v1205 = vor.u32 %v1201, %v1204
  %v1206 = vsel %vm1099, %v1196, %v1205
  %v1208 = vshrl.u32 %v1098, 16
  %v1210 = vrot.slane %v1208, 2
  %v1211 = vshll.u32 %v1098, 16
  %v1213 = vrot.slane %v1211, 3
  %v1214 = vor.u32 %v1210, %v1213
  %v1215 = vsel %vm1099, %v1205, %v1214
  %v1220 = vunpack.c.l.b16 %v1030
  %v1221 = vunpack.c.l.b16 %v1031
  %v1222 = vunpack.c.l.b16 %v1032
  %v1223 = vunpack.c.l.b16 %v1033
  %v1224 = vpack.c.b16 %v1221, %v1220
  %v1225 = vpack.c.b16 %v1223, %v1222
  %vm1228 = vcmask 261120
  %v1230 = vsel %vm1228, %v1116, 0
  %v1233 = vsel %vm1228, %v1125, 0
  %v1236 = vsel %vm1228, %v1134, 0
  %v1239 = vsel %vm1228, %v1143, 0
  %v1242 = vsel %vm1228, %v1152, 0
  %v1245 = vsel %vm1228, %v1161, 0
  %v1248 = vsel %vm1228, %v1170, 0
  %v1251 = vsel %vm1228, %v1179, 0
  %v1254 = vsel %vm1228, %v1188, 0
  %v1257 = vsel %vm1228, %v1197, 0
  %v1260 = vsel %vm1228, %v1206, 0
  %v1263 = vsel %vm1228, %v1215, 0
  %v1266 = vsel %vm1228, %v1214, 0
  %1268 = vmatprep.subr.bf16.mxu0 0
  %1269 = vmatpush1.bf16.msra.mxu0 %v1224
  %1270 = vmatprep.subr.bf16.mxu0 0
  %1271 = vmatpush1.bf16.msra.mxu0 %v1225
  %1272 = vmatprep.subr.bf16.mxu0 0
  %1273 = vmatpush1.bf16.msra.mxu0 0
  %1274 = vmatprep.subr.bf16.mxu0 0
  %1275 = vmatpush1.bf16.msra.mxu0 0
  %1276 = vmatprep.subr.bf16.mxu0 0
  %1277 = vmatpush1.bf16.msra.mxu0 0
  %1278 = vmatprep.subr.bf16.mxu0 0
  %1279 = vmatpush1.bf16.msra.mxu0 0
  %1280 = vmatprep.subr.bf16.mxu0 0
  %1281 = vmatpush1.bf16.msra.mxu0 0
  %1282 = vmatprep.subr.bf16.mxu0 0
  %1283 = vmatpush1.bf16.msra.mxu0 0
  %1284 = vmatprep.subr.bf16.mxu0 0
  %1285 = vmatpush1.bf16.msra.mxu0 0
  %1286 = vmatprep.subr.bf16.mxu0 0
  %1287 = vmatpush1.bf16.msra.mxu0 0
  %1288 = vmatprep.subr.bf16.mxu0 0
  %1289 = vmatpush1.bf16.msra.mxu0 0
  %1290 = vmatprep.subr.bf16.mxu0 0
  %1291 = vmatpush1.bf16.msra.mxu0 0
  %1292 = vmatprep.subr.bf16.mxu0 0
  %1293 = vmatpush1.bf16.msra.mxu0 0
  %1294 = vmatprep.subr.bf16.mxu0 0
  %1295 = vmatpush1.bf16.msra.mxu0 0
  %1296 = vmatprep.subr.bf16.mxu0 0
  %1297 = vmatpush1.bf16.msra.mxu0 0
  %1298 = vmatprep.subr.bf16.mxu0 0
  %1299 = vmatpush1.bf16.msra.mxu0 0
  %1300 = vmatprep.mubr.bf16.mxu0 0
  %1301 = vmatmul.mubr.bf16.gmra.mrb[0].mxu0 %v1230
  %v1302 = vpop.f32.mrb[0].mxu0
  %v1303 = vadd.f32 0.0, %v1302
  %v1304 = vpop.f32.mrb[0].mxu0
  %v1305 = vpop.f32.mrb[0].mxu0
  %v1306 = vadd.f32 0.0, %v1305
  %v1307 = vpop.f32.mrb[0].mxu0
  %1308 = vmatprep.mubr.bf16.mxu0 0
  %1309 = vmatmul.mubr.bf16.gmra.mrb[0].mxu0 %v1233
  %v1310 = vpop.f32.mrb[0].mxu0
  %v1311 = vadd.f32 0.0, %v1310
  %v1312 = vpop.f32.mrb[0].mxu0
  %v1313 = vpop.f32.mrb[0].mxu0
  %v1314 = vadd.f32 0.0, %v1313
  %v1315 = vpop.f32.mrb[0].mxu0
  %1316 = vmatprep.mubr.bf16.mxu0 0
  %1317 = vmatmul.mubr.bf16.gmra.mrb[0].mxu0 %v1236
  %v1318 = vpop.f32.mrb[0].mxu0
  %v1319 = vadd.f32 0.0, %v1318
  %v1320 = vpop.f32.mrb[0].mxu0
  %v1321 = vpop.f32.mrb[0].mxu0
  %v1322 = vadd.f32 0.0, %v1321
  %v1323 = vpop.f32.mrb[0].mxu0
  %1324 = vmatprep.mubr.bf16.mxu0 0
  %1325 = vmatmul.mubr.bf16.gmra.mrb[0].mxu0 %v1239
  %v1326 = vpop.f32.mrb[0].mxu0
  %v1327 = vadd.f32 0.0, %v1326
  %v1328 = vpop.f32.mrb[0].mxu0
  %v1329 = vpop.f32.mrb[0].mxu0
  %v1330 = vadd.f32 0.0, %v1329
  %v1331 = vpop.f32.mrb[0].mxu0
  %1332 = vmatprep.mubr.bf16.mxu0 0
  %1333 = vmatmul.mubr.bf16.gmra.mrb[0].mxu0 %v1242
  %v1334 = vpop.f32.mrb[0].mxu0
  %v1335 = vadd.f32 0.0, %v1334
  %v1336 = vpop.f32.mrb[0].mxu0
  %v1337 = vpop.f32.mrb[0].mxu0
  %v1338 = vadd.f32 0.0, %v1337
  %v1339 = vpop.f32.mrb[0].mxu0
  %1340 = vmatprep.mubr.bf16.mxu0 0
  %1341 = vmatmul.mubr.bf16.gmra.mrb[0].mxu0 %v1245
  %v1342 = vpop.f32.mrb[0].mxu0
  %v1343 = vadd.f32 0.0, %v1342
  %v1344 = vpop.f32.mrb[0].mxu0
  %v1345 = vpop.f32.mrb[0].mxu0
  %v1346 = vadd.f32 0.0, %v1345
  %v1347 = vpop.f32.mrb[0].mxu0
  %1348 = vmatprep.mubr.bf16.mxu0 0
  %1349 = vmatmul.mubr.bf16.gmra.mrb[0].mxu0 %v1248
  %v1350 = vpop.f32.mrb[0].mxu0
  %v1351 = vadd.f32 0.0, %v1350
  %v1352 = vpop.f32.mrb[0].mxu0
  %v1353 = vpop.f32.mrb[0].mxu0
  %v1354 = vadd.f32 0.0, %v1353
  %v1355 = vpop.f32.mrb[0].mxu0
  %1356 = vmatprep.mubr.bf16.mxu0 0
  %1357 = vmatmul.mubr.bf16.gmra.mrb[0].mxu0 %v1251
  %v1358 = vpop.f32.mrb[0].mxu0
  %v1359 = vadd.f32 0.0, %v1358
  %v1360 = vpop.f32.mrb[0].mxu0
  %v1361 = vpop.f32.mrb[0].mxu0
  %v1362 = vadd.f32 0.0, %v1361
  %v1363 = vpop.f32.mrb[0].mxu0
  %1364 = vmatprep.mubr.bf16.mxu0 0
  %1365 = vmatmul.mubr.bf16.gmra.mrb[0].mxu0 %v1254
  %v1366 = vpop.f32.mrb[0].mxu0
  %v1367 = vadd.f32 0.0, %v1366
  %v1368 = vpop.f32.mrb[0].mxu0
  %v1369 = vpop.f32.mrb[0].mxu0
  %v1370 = vadd.f32 0.0, %v1369
  %v1371 = vpop.f32.mrb[0].mxu0
  %1372 = vmatprep.mubr.bf16.mxu0 0
  %1373 = vmatmul.mubr.bf16.gmra.mrb[0].mxu0 %v1257
  %v1374 = vpop.f32.mrb[0].mxu0
  %v1375 = vadd.f32 0.0, %v1374
  %v1376 = vpop.f32.mrb[0].mxu0
  %v1377 = vpop.f32.mrb[0].mxu0
  %v1378 = vadd.f32 0.0, %v1377
  %v1379 = vpop.f32.mrb[0].mxu0
  %1380 = vmatprep.mubr.bf16.mxu0 0
  %1381 = vmatmul.mubr.bf16.gmra.mrb[0].mxu0 %v1260
  %v1382 = vpop.f32.mrb[0].mxu0
  %v1383 = vadd.f32 0.0, %v1382
  %v1384 = vpop.f32.mrb[0].mxu0
  %v1385 = vpop.f32.mrb[0].mxu0
  %v1386 = vadd.f32 0.0, %v1385
  %v1387 = vpop.f32.mrb[0].mxu0
  %1388 = vmatprep.mubr.bf16.mxu0 0
  %1389 = vmatmul.mubr.bf16.gmra.mrb[0].mxu0 %v1263
  %v1390 = vpop.f32.mrb[0].mxu0
  %v1391 = vadd.f32 0.0, %v1390
  %v1392 = vpop.f32.mrb[0].mxu0
  %v1393 = vpop.f32.mrb[0].mxu0
  %v1394 = vadd.f32 0.0, %v1393
  %v1395 = vpop.f32.mrb[0].mxu0
  %1396 = vmatprep.mubr.bf16.mxu0 0
  %1397 = vmatmul.mubr.bf16.gmra.mrb[0].mxu0 %v1266
  %v1398 = vpop.f32.mrb[0].mxu0
  %v1399 = vadd.f32 0.0, %v1398
  %v1400 = vpop.f32.mrb[0].mxu0
  %v1401 = vpop.f32.mrb[0].mxu0
  %v1402 = vpop.f32.mrb[0].mxu0
  %1403 = vdwg.mxu0
  %v1404 = vadd.f32 %v523, %v1303
  %v1405 = vadd.f32 %v523, %v1306
  %v1406 = vadd.f32 %v523, %v1311
  %v1407 = vadd.f32 %v523, %v1314
  %v1408 = vadd.f32 %v523, %v1319
  %v1409 = vadd.f32 %v523, %v1322
  %v1410 = vadd.f32 %v523, %v1327
  %v1411 = vadd.f32 %v523, %v1330
  %v1412 = vadd.f32 %v523, %v1335
  %v1413 = vadd.f32 %v523, %v1338
  %v1414 = vadd.f32 %v523, %v1343
  %v1415 = vadd.f32 %v523, %v1346
  %v1416 = vadd.f32 %v523, %v1351
  %v1417 = vadd.f32 %v523, %v1354
  %v1418 = vadd.f32 %v523, %v1359
  %v1419 = vadd.f32 %v523, %v1362
  %v1420 = vadd.f32 %v523, %v1367
  %v1421 = vadd.f32 %v523, %v1370
  %v1422 = vadd.f32 %v523, %v1375
  %v1423 = vadd.f32 %v523, %v1378
  %v1424 = vadd.f32 %v523, %v1383
  %v1425 = vadd.f32 %v523, %v1386
  %v1426 = vadd.f32 %v523, %v1391
  %v1427 = vadd.f32 %v523, %v1394
  %v1428 = vadd.f32 %v523, %v1399
  %v1429 = vld [vmem:[%s0 + $0x4] sm:$0x8]
  %v1430 = vld [vmem:[%s1 + $0x10] sm:$0xf]
  %v1431 = vld [vmem:[%s1 + $0x14] sm:$0xf]
  %v1432 = vld [vmem:[%s1 + $0x18] sm:$0xf]
  %v1433 = vld [vmem:[%s1 + $0x1c] sm:$0xf]
  %v1460 = vunpack.c.l.b16 %v1429
  %v1461 = vunpack.c.l.b16 %v526
  %v1462 = vunpack.c.l.b16 %v527
  %v1463 = vunpack.c.l.b16 %v528
  %v1464 = vunpack.c.l.b16 %v529
  %v1465 = vunpack.c.l.b16 %v530
  %v1466 = vunpack.c.l.b16 %v531
  %v1467 = vunpack.c.l.b16 %v532
  %v1468 = vunpack.c.l.b16 %v533
  %v1469 = vunpack.c.l.b16 %v534
  %v1470 = vunpack.c.l.b16 %v535
  %v1471 = vunpack.c.l.b16 %v536
  %v1472 = vunpack.c.l.b16 %v537
  %v1473 = vunpack.c.l.b16 %v538
  %v1474 = vunpack.c.l.b16 %v539
  %v1475 = vunpack.c.l.b16 %v540
  %v1476 = vunpack.c.l.b16 %v541
  %v1477 = vunpack.c.l.b16 %v542
  %v1478 = vunpack.c.l.b16 %v543
  %v1479 = vunpack.c.l.b16 %v544
  %v1480 = vunpack.c.l.b16 %v545
  %v1481 = vunpack.c.l.b16 %v546
  %v1482 = vunpack.c.l.b16 %v547
  %v1483 = vunpack.c.l.b16 %v548
  %v1484 = vunpack.c.l.b16 %v549
  %v1485 = vunpack.c.l.b16 %v550
  %v1486 = vpack.c.b16 %v1461, %v1460
  %v1487 = vpack.c.b16 %v1463, %v1462
  %v1488 = vpack.c.b16 %v1465, %v1464
  %v1489 = vpack.c.b16 %v1467, %v1466
  %v1490 = vpack.c.b16 %v1469, %v1468
  %v1491 = vpack.c.b16 %v1471, %v1470
  %v1492 = vpack.c.b16 %v1473, %v1472
  %v1493 = vpack.c.b16 %v1475, %v1474
  %v1494 = vpack.c.b16 %v1477, %v1476
  %v1495 = vpack.c.b16 %v1479, %v1478
  %v1496 = vpack.c.b16 %v1481, %v1480
  %v1497 = vpack.c.b16 %v1483, %v1482
  %v1498 = vpack.c.b16 %v1485, %v1484
  %vm1499 = vcmask 1044480
  %v1500 = vrot.slane %v1486, 3
  %v1501 = vrot.slane %v1487, 3
  %v1502 = vsel %vm1499, %v1500, %v1501
  %v1503 = vrot.slane %v1488, 3
  %v1504 = vsel %vm1499, %v1501, %v1503
  %v1505 = vrot.slane %v1489, 3
  %v1506 = vsel %vm1499, %v1503, %v1505
  %v1507 = vrot.slane %v1490, 3
  %v1508 = vsel %vm1499, %v1505, %v1507
  %v1509 = vrot.slane %v1491, 3
  %v1510 = vsel %vm1499, %v1507, %v1509
  %v1511 = vrot.slane %v1492, 3
  %v1512 = vsel %vm1499, %v1509, %v1511
  %v1513 = vrot.slane %v1493, 3
  %v1514 = vsel %vm1499, %v1511, %v1513
  %v1515 = vrot.slane %v1494, 3
  %v1516 = vsel %vm1499, %v1513, %v1515
  %v1517 = vrot.slane %v1495, 3
  %v1518 = vsel %vm1499, %v1515, %v1517
  %v1519 = vrot.slane %v1496, 3
  %v1520 = vsel %vm1499, %v1517, %v1519
  %v1521 = vrot.slane %v1497, 3
  %v1522 = vsel %vm1499, %v1519, %v1521
  %v1523 = vrot.slane %v1498, 3
  %v1524 = vsel %vm1499, %v1521, %v1523
  %v1529 = vunpack.c.l.b16 %v1430
  %v1530 = vunpack.c.l.b16 %v1431
  %v1531 = vunpack.c.l.b16 %v1432
  %v1532 = vunpack.c.l.b16 %v1433
  %v1533 = vpack.c.b16 %v1530, %v1529
  %v1534 = vpack.c.b16 %v1532, %v1531
  %v1538 = vsel %vm1228, %v1502, 0
  %v1541 = vsel %vm1228, %v1504, 0
  %v1544 = vsel %vm1228, %v1506, 0
  %v1547 = vsel %vm1228, %v1508, 0
  %v1550 = vsel %vm1228, %v1510, 0
  %v1553 = vsel %vm1228, %v1512, 0
  %v1556 = vsel %vm1228, %v1514, 0
  %v1559 = vsel %vm1228, %v1516, 0
  %v1562 = vsel %vm1228, %v1518, 0
  %v1565 = vsel %vm1228, %v1520, 0
  %v1568 = vsel %vm1228, %v1522, 0
  %v1571 = vsel %vm1228, %v1524, 0
  %v1574 = vsel %vm1228, %v1523, 0
  %1576 = vmatprep.subr.bf16.mxu0 0
  %1577 = vmatpush1.bf16.msra.mxu0 %v1533
  %1578 = vmatprep.subr.bf16.mxu0 0
  %1579 = vmatpush1.bf16.msra.mxu0 %v1534
  %1580 = vmatprep.subr.bf16.mxu0 0
  %1581 = vmatpush1.bf16.msra.mxu0 0
  %1582 = vmatprep.subr.bf16.mxu0 0
  %1583 = vmatpush1.bf16.msra.mxu0 0
  %1584 = vmatprep.subr.bf16.mxu0 0
  %1585 = vmatpush1.bf16.msra.mxu0 0
  %1586 = vmatprep.subr.bf16.mxu0 0
  %1587 = vmatpush1.bf16.msra.mxu0 0
  %1588 = vmatprep.subr.bf16.mxu0 0
  %1589 = vmatpush1.bf16.msra.mxu0 0
  %1590 = vmatprep.subr.bf16.mxu0 0
  %1591 = vmatpush1.bf16.msra.mxu0 0
  %1592 = vmatprep.subr.bf16.mxu0 0
  %1593 = vmatpush1.bf16.msra.mxu0 0
  %1594 = vmatprep.subr.bf16.mxu0 0
  %1595 = vmatpush1.bf16.msra.mxu0 0
  %1596 = vmatprep.subr.bf16.mxu0 0
  %1597 = vmatpush1.bf16.msra.mxu0 0
  %1598 = vmatprep.subr.bf16.mxu0 0
  %1599 = vmatpush1.bf16.msra.mxu0 0
  %1600 = vmatprep.subr.bf16.mxu0 0
  %1601 = vmatpush1.bf16.msra.mxu0 0
  %1602 = vmatprep.subr.bf16.mxu0 0
  %1603 = vmatpush1.bf16.msra.mxu0 0
  %1604 = vmatprep.subr.bf16.mxu0 0
  %1605 = vmatpush1.bf16.msra.mxu0 0
  %1606 = vmatprep.subr.bf16.mxu0 0
  %1607 = vmatpush1.bf16.msra.mxu0 0
  %1608 = vmatprep.mubr.bf16.mxu0 0
  %1609 = vmatmul.mubr.bf16.gmra.mrb[0].mxu0 %v1538
  %v1610 = vpop.f32.mrb[0].mxu0
  %v1611 = vadd.f32 0.0, %v1610
  %v1612 = vpop.f32.mrb[0].mxu0
  %v1613 = vpop.f32.mrb[0].mxu0
  %v1614 = vadd.f32 0.0, %v1613
  %v1615 = vpop.f32.mrb[0].mxu0
  %1616 = vmatprep.mubr.bf16.mxu0 0
  %1617 = vmatmul.mubr.bf16.gmra.mrb[0].mxu0 %v1541
  %v1618 = vpop.f32.mrb[0].mxu0
  %v1619 = vadd.f32 0.0, %v1618
  %v1620 = vpop.f32.mrb[0].mxu0
  %v1621 = vpop.f32.mrb[0].mxu0
  %v1622 = vadd.f32 0.0, %v1621
  %v1623 = vpop.f32.mrb[0].mxu0
  %1624 = vmatprep.mubr.bf16.mxu0 0
  %1625 = vmatmul.mubr.bf16.gmra.mrb[0].mxu0 %v1544
  %v1626 = vpop.f32.mrb[0].mxu0
  %v1627 = vadd.f32 0.0, %v1626
  %v1628 = vpop.f32.mrb[0].mxu0
  %v1629 = vpop.f32.mrb[0].mxu0
  %v1630 = vadd.f32 0.0, %v1629
  %v1631 = vpop.f32.mrb[0].mxu0
  %1632 = vmatprep.mubr.bf16.mxu0 0
  %1633 = vmatmul.mubr.bf16.gmra.mrb[0].mxu0 %v1547
  %v1634 = vpop.f32.mrb[0].mxu0
  %v1635 = vadd.f32 0.0, %v1634
  %v1636 = vpop.f32.mrb[0].mxu0
  %v1637 = vpop.f32.mrb[0].mxu0
  %v1638 = vadd.f32 0.0, %v1637
  %v1639 = vpop.f32.mrb[0].mxu0
  %1640 = vmatprep.mubr.bf16.mxu0 0
  %1641 = vmatmul.mubr.bf16.gmra.mrb[0].mxu0 %v1550
  %v1642 = vpop.f32.mrb[0].mxu0
  %v1643 = vadd.f32 0.0, %v1642
  %v1644 = vpop.f32.mrb[0].mxu0
  %v1645 = vpop.f32.mrb[0].mxu0
  %v1646 = vadd.f32 0.0, %v1645
  %v1647 = vpop.f32.mrb[0].mxu0
  %1648 = vmatprep.mubr.bf16.mxu0 0
  %1649 = vmatmul.mubr.bf16.gmra.mrb[0].mxu0 %v1553
  %v1650 = vpop.f32.mrb[0].mxu0
  %v1651 = vadd.f32 0.0, %v1650
  %v1652 = vpop.f32.mrb[0].mxu0
  %v1653 = vpop.f32.mrb[0].mxu0
  %v1654 = vadd.f32 0.0, %v1653
  %v1655 = vpop.f32.mrb[0].mxu0
  %1656 = vmatprep.mubr.bf16.mxu0 0
  %1657 = vmatmul.mubr.bf16.gmra.mrb[0].mxu0 %v1556
  %v1658 = vpop.f32.mrb[0].mxu0
  %v1659 = vadd.f32 0.0, %v1658
  %v1660 = vpop.f32.mrb[0].mxu0
  %v1661 = vpop.f32.mrb[0].mxu0
  %v1662 = vadd.f32 0.0, %v1661
  %v1663 = vpop.f32.mrb[0].mxu0
  %1664 = vmatprep.mubr.bf16.mxu0 0
  %1665 = vmatmul.mubr.bf16.gmra.mrb[0].mxu0 %v1559
  %v1666 = vpop.f32.mrb[0].mxu0
  %v1667 = vadd.f32 0.0, %v1666
  %v1668 = vpop.f32.mrb[0].mxu0
  %v1669 = vpop.f32.mrb[0].mxu0
  %v1670 = vadd.f32 0.0, %v1669
  %v1671 = vpop.f32.mrb[0].mxu0
  %1672 = vmatprep.mubr.bf16.mxu0 0
  %1673 = vmatmul.mubr.bf16.gmra.mrb[0].mxu0 %v1562
  %v1674 = vpop.f32.mrb[0].mxu0
  %v1675 = vadd.f32 0.0, %v1674
  %v1676 = vpop.f32.mrb[0].mxu0
  %v1677 = vpop.f32.mrb[0].mxu0
  %v1678 = vadd.f32 0.0, %v1677
  %v1679 = vpop.f32.mrb[0].mxu0
  %1680 = vmatprep.mubr.bf16.mxu0 0
  %1681 = vmatmul.mubr.bf16.gmra.mrb[0].mxu0 %v1565
  %v1682 = vpop.f32.mrb[0].mxu0
  %v1683 = vadd.f32 0.0, %v1682
  %v1684 = vpop.f32.mrb[0].mxu0
  %v1685 = vpop.f32.mrb[0].mxu0
  %v1686 = vadd.f32 0.0, %v1685
  %v1687 = vpop.f32.mrb[0].mxu0
  %1688 = vmatprep.mubr.bf16.mxu0 0
  %1689 = vmatmul.mubr.bf16.gmra.mrb[0].mxu0 %v1568
  %v1690 = vpop.f32.mrb[0].mxu0
  %v1691 = vadd.f32 0.0, %v1690
  %v1692 = vpop.f32.mrb[0].mxu0
  %v1693 = vpop.f32.mrb[0].mxu0
  %v1694 = vadd.f32 0.0, %v1693
  %v1695 = vpop.f32.mrb[0].mxu0
  %1696 = vmatprep.mubr.bf16.mxu0 0
  %1697 = vmatmul.mubr.bf16.gmra.mrb[0].mxu0 %v1571
  %v1698 = vpop.f32.mrb[0].mxu0
  %v1699 = vadd.f32 0.0, %v1698
  %v1700 = vpop.f32.mrb[0].mxu0
  %v1701 = vpop.f32.mrb[0].mxu0
  %v1702 = vadd.f32 0.0, %v1701
  %v1703 = vpop.f32.mrb[0].mxu0
  %1704 = vmatprep.mubr.bf16.mxu0 0
  %1705 = vmatmul.mubr.bf16.gmra.mrb[0].mxu0 %v1574
  %v1706 = vpop.f32.mrb[0].mxu0
  %v1707 = vadd.f32 0.0, %v1706
  %v1708 = vpop.f32.mrb[0].mxu0
  %v1709 = vpop.f32.mrb[0].mxu0
  %v1710 = vpop.f32.mrb[0].mxu0
  %1711 = vdwg.mxu0
  %v1712 = vadd.f32 %v1404, %v1611
  %v1713 = vadd.f32 %v1405, %v1614
  %v1714 = vadd.f32 %v1406, %v1619
  %v1715 = vadd.f32 %v1407, %v1622
  %v1716 = vadd.f32 %v1408, %v1627
  %v1717 = vadd.f32 %v1409, %v1630
  %v1718 = vadd.f32 %v1410, %v1635
  %v1719 = vadd.f32 %v1411, %v1638
  %v1720 = vadd.f32 %v1412, %v1643
  %v1721 = vadd.f32 %v1413, %v1646
  %v1722 = vadd.f32 %v1414, %v1651
  %v1723 = vadd.f32 %v1415, %v1654
  %v1724 = vadd.f32 %v1416, %v1659
  %v1725 = vadd.f32 %v1417, %v1662
  %v1726 = vadd.f32 %v1418, %v1667
  %v1727 = vadd.f32 %v1419, %v1670
  %v1728 = vadd.f32 %v1420, %v1675
  %v1729 = vadd.f32 %v1421, %v1678
  %v1730 = vadd.f32 %v1422, %v1683
  %v1731 = vadd.f32 %v1423, %v1686
  %v1732 = vadd.f32 %v1424, %v1691
  %v1733 = vadd.f32 %v1425, %v1694
  %v1734 = vadd.f32 %v1426, %v1699
  %v1735 = vadd.f32 %v1427, %v1702
  %v1736 = vadd.f32 %v1428, %v1707
  %v1737 = vld [vmem:[%s0 + $0x68] sm:$0x3]
  %vm1738 = vcmp.ge.s32.totalorder %v493, 0
  %vm1739 = vcmp.ge.s32.totalorder %v494, 0
  %vm1740 = vcmp.ge.s32.totalorder %v495, 0
  %vm1741 = vcmp.ge.s32.totalorder %v496, 0
  %vm1742 = vcmp.ge.s32.totalorder %v497, 0
  %vm1743 = vcmp.ge.s32.totalorder %v498, 0
  %vm1744 = vcmp.ge.s32.totalorder %v499, 0
  %vm1745 = vcmp.ge.s32.totalorder %v500, 0
  %vm1746 = vcmp.ge.s32.totalorder %v501, 0
  %vm1747 = vcmp.ge.s32.totalorder %v502, 0
  %vm1748 = vcmp.ge.s32.totalorder %v503, 0
  %vm1749 = vcmp.ge.s32.totalorder %v504, 0
  %vm1750 = vcmp.ge.s32.totalorder %v505, 0
  %vm1751 = vcmp.ge.s32.totalorder %v506, 0
  %vm1752 = vcmp.ge.s32.totalorder %v507, 0
  %vm1753 = vcmp.ge.s32.totalorder %v508, 0
  %vm1754 = vcmp.ge.s32.totalorder %v509, 0
  %vm1755 = vcmp.ge.s32.totalorder %v510, 0
  %vm1756 = vcmp.ge.s32.totalorder %v511, 0
  %vm1757 = vcmp.ge.s32.totalorder %v512, 0
  %vm1758 = vcmp.ge.s32.totalorder %v513, 0
  %vm1759 = vcmp.ge.s32.totalorder %v514, 0
  %vm1760 = vcmp.ge.s32.totalorder %v515, 0
  %vm1761 = vcmp.ge.s32.totalorder %v516, 0
  %vm1762 = vcmp.ge.s32.totalorder %v517, 0
  %vm1763 = vcmp.lt.s32.totalorder %v493, 13
  %vm1764 = vcmp.lt.s32.totalorder %v494, 13
  %vm1765 = vcmp.lt.s32.totalorder %v495, 13
  %vm1766 = vcmp.lt.s32.totalorder %v496, 13
  %vm1767 = vcmp.lt.s32.totalorder %v497, 13
  %vm1768 = vcmp.lt.s32.totalorder %v498, 13
  %vm1769 = vcmp.lt.s32.totalorder %v499, 13
  %vm1770 = vcmp.lt.s32.totalorder %v500, 13
  %vm1771 = vcmp.lt.s32.totalorder %v501, 13
  %vm1772 = vcmp.lt.s32.totalorder %v502, 13
  %vm1773 = vcmp.lt.s32.totalorder %v503, 13
  %vm1774 = vcmp.lt.s32.totalorder %v504, 13
  %vm1775 = vcmp.lt.s32.totalorder %v505, 13
  %vm1776 = vcmp.lt.s32.totalorder %v506, 13
  %vm1777 = vcmp.lt.s32.totalorder %v507, 13
  %vm1778 = vcmp.lt.s32.totalorder %v508, 13
  %vm1779 = vcmp.lt.s32.totalorder %v509, 13
  %vm1780 = vcmp.lt.s32.totalorder %v510, 13
  %vm1781 = vcmp.lt.s32.totalorder %v511, 13
  %vm1782 = vcmp.lt.s32.totalorder %v512, 13
  %vm1783 = vcmp.lt.s32.totalorder %v513, 13
  %vm1784 = vcmp.lt.s32.totalorder %v514, 13
  %vm1785 = vcmp.lt.s32.totalorder %v515, 13
  %vm1786 = vcmp.lt.s32.totalorder %v516, 13
  %vm1787 = vcmp.lt.s32.totalorder %v517, 13
  %vm1788 = vmand %vm1738, %vm1763
  %vm1789 = vmand %vm1739, %vm1764
  %vm1790 = vmand %vm1740, %vm1765
  %vm1791 = vmand %vm1741, %vm1766
  %vm1792 = vmand %vm1742, %vm1767
  %vm1793 = vmand %vm1743, %vm1768
  %vm1794 = vmand %vm1744, %vm1769
  %vm1795 = vmand %vm1745, %vm1770
  %vm1796 = vmand %vm1746, %vm1771
  %vm1797 = vmand %vm1747, %vm1772
  %vm1798 = vmand %vm1748, %vm1773
  %vm1799 = vmand %vm1749, %vm1774
  %vm1800 = vmand %vm1750, %vm1775
  %vm1801 = vmand %vm1751, %vm1776
  %vm1802 = vmand %vm1752, %vm1777
  %vm1803 = vmand %vm1753, %vm1778
  %vm1804 = vmand %vm1754, %vm1779
  %vm1805 = vmand %vm1755, %vm1780
  %vm1806 = vmand %vm1756, %vm1781
  %vm1807 = vmand %vm1757, %vm1782
  %vm1808 = vmand %vm1758, %vm1783
  %vm1809 = vmand %vm1759, %vm1784
  %vm1810 = vmand %vm1760, %vm1785
  %vm1811 = vmand %vm1761, %vm1786
  %vm1812 = vmand %vm1762, %vm1787
  %v1813 = vsel %vm1788, 1, 0
  %v1814 = vsel %vm1789, 1, 0
  %v1815 = vsel %vm1790, 1, 0
  %v1816 = vsel %vm1791, 1, 0
  %v1817 = vsel %vm1792, 1, 0
  %v1818 = vsel %vm1793, 1, 0
  %v1819 = vsel %vm1794, 1, 0
  %v1820 = vsel %vm1795, 1, 0
  %v1821 = vsel %vm1796, 1, 0
  %v1822 = vsel %vm1797, 1, 0
  %v1823 = vsel %vm1798, 1, 0
  %v1824 = vsel %vm1799, 1, 0
  %v1825 = vsel %vm1800, 1, 0
  %v1826 = vsel %vm1801, 1, 0
  %v1827 = vsel %vm1802, 1, 0
  %v1828 = vsel %vm1803, 1, 0
  %v1829 = vsel %vm1804, 1, 0
  %v1830 = vsel %vm1805, 1, 0
  %v1831 = vsel %vm1806, 1, 0
  %v1832 = vsel %vm1807, 1, 0
  %v1833 = vsel %vm1808, 1, 0
  %v1834 = vsel %vm1809, 1, 0
  %v1835 = vsel %vm1810, 1, 0
  %v1836 = vsel %vm1811, 1, 0
  %v1837 = vsel %vm1812, 1, 0
  %vm1838 = vcmp.eq.s32.totalorder %v1813, 1
  %vm1839 = vcmp.eq.s32.totalorder %v1814, 1
  %vm1840 = vcmp.eq.s32.totalorder %v1815, 1
  %vm1841 = vcmp.eq.s32.totalorder %v1816, 1
  %vm1842 = vcmp.eq.s32.totalorder %v1817, 1
  %vm1843 = vcmp.eq.s32.totalorder %v1818, 1
  %vm1844 = vcmp.eq.s32.totalorder %v1819, 1
  %vm1845 = vcmp.eq.s32.totalorder %v1820, 1
  %vm1846 = vcmp.eq.s32.totalorder %v1821, 1
  %vm1847 = vcmp.eq.s32.totalorder %v1822, 1
  %vm1848 = vcmp.eq.s32.totalorder %v1823, 1
  %vm1849 = vcmp.eq.s32.totalorder %v1824, 1
  %vm1850 = vcmp.eq.s32.totalorder %v1825, 1
  %vm1851 = vcmp.eq.s32.totalorder %v1826, 1
  %vm1852 = vcmp.eq.s32.totalorder %v1827, 1
  %vm1853 = vcmp.eq.s32.totalorder %v1828, 1
  %vm1854 = vcmp.eq.s32.totalorder %v1829, 1
  %vm1855 = vcmp.eq.s32.totalorder %v1830, 1
  %vm1856 = vcmp.eq.s32.totalorder %v1831, 1
  %vm1857 = vcmp.eq.s32.totalorder %v1832, 1
  %vm1858 = vcmp.eq.s32.totalorder %v1833, 1
  %vm1859 = vcmp.eq.s32.totalorder %v1834, 1
  %vm1860 = vcmp.eq.s32.totalorder %v1835, 1
  %vm1861 = vcmp.eq.s32.totalorder %v1836, 1
  %vm1862 = vcmp.eq.s32.totalorder %v1837, 1
  %vm1863 = vmpackc.low %vm1838, %vm1838
  %vm1864 = vmpackc.low %vm1839, %vm1839
  %vm1865 = vmpackc.low %vm1840, %vm1840
  %vm1866 = vmpackc.low %vm1841, %vm1841
  %vm1867 = vmpackc.low %vm1842, %vm1842
  %vm1868 = vmpackc.low %vm1843, %vm1843
  %vm1869 = vmpackc.low %vm1844, %vm1844
  %vm1870 = vmpackc.low %vm1845, %vm1845
  %vm1871 = vmpackc.low %vm1846, %vm1846
  %vm1872 = vmpackc.low %vm1847, %vm1847
  %vm1873 = vmpackc.low %vm1848, %vm1848
  %vm1874 = vmpackc.low %vm1849, %vm1849
  %vm1875 = vmpackc.low %vm1850, %vm1850
  %vm1876 = vmpackc.low %vm1851, %vm1851
  %vm1877 = vmpackc.low %vm1852, %vm1852
  %vm1878 = vmpackc.low %vm1853, %vm1853
  %vm1879 = vmpackc.low %vm1854, %vm1854
  %vm1880 = vmpackc.low %vm1855, %vm1855
  %vm1881 = vmpackc.low %vm1856, %vm1856
  %vm1882 = vmpackc.low %vm1857, %vm1857
  %vm1883 = vmpackc.low %vm1858, %vm1858
  %vm1884 = vmpackc.low %vm1859, %vm1859
  %vm1885 = vmpackc.low %vm1860, %vm1860
  %vm1886 = vmpackc.low %vm1861, %vm1861
  %vm1887 = vmpackc.low %vm1862, %vm1862
  %v1888 = vsel %vm1863, 65537, 0
  %v1889 = vsel %vm1864, 65537, 0
  %v1890 = vsel %vm1865, 65537, 0
  %v1891 = vsel %vm1866, 65537, 0
  %v1892 = vsel %vm1867, 65537, 0
  %v1893 = vsel %vm1868, 65537, 0
  %v1894 = vsel %vm1869, 65537, 0
  %v1895 = vsel %vm1870, 65537, 0
  %v1896 = vsel %vm1871, 65537, 0
  %v1897 = vsel %vm1872, 65537, 0
  %v1898 = vsel %vm1873, 65537, 0
  %v1899 = vsel %vm1874, 65537, 0
  %v1900 = vsel %vm1875, 65537, 0
  %v1901 = vsel %vm1876, 65537, 0
  %v1902 = vsel %vm1877, 65537, 0
  %v1903 = vsel %vm1878, 65537, 0
  %v1904 = vsel %vm1879, 65537, 0
  %v1905 = vsel %vm1880, 65537, 0
  %v1906 = vsel %vm1881, 65537, 0
  %v1907 = vsel %vm1882, 65537, 0
  %v1908 = vsel %vm1883, 65537, 0
  %v1909 = vsel %vm1884, 65537, 0
  %v1910 = vsel %vm1885, 65537, 0
  %v1911 = vsel %vm1886, 65537, 0
  %v1912 = vsel %vm1887, 65537, 0
  %vm1913 = vsmask.f32 3328
  %vm1914 = vsmask.f32 7440
  %vm1915 = vmor %vm1913, %vm1914
  %v1917 = vshll.u32 %v1888, 16
  %v1919 = vrot.slane %v1917, 5
  %v1920 = vshrl.u32 %v1888, 16
  %v1922 = vrot.slane %v1920, 4
  %v1923 = vor.u32 %v1922, %v1919
  %v1924 = vrot.slane %v1923, 4
  %v1926 = vshll.u32 %v1889, 16
  %v1928 = vrot.slane %v1926, 5
  %v1929 = vsel %vm1915, %v1924, %v1928
  %v1930 = vshrl.u32 %v1889, 16
  %v1932 = vrot.slane %v1930, 4
  %v1933 = vor.u32 %v1932, %v1928
  %v1934 = vrot.slane %v1933, 4
  %v1936 = vshll.u32 %v1890, 16
  %v1938 = vrot.slane %v1936, 5
  %v1939 = vsel %vm1915, %v1934, %v1938
  %v1940 = vshrl.u32 %v1890, 16
  %v1942 = vrot.slane %v1940, 4
  %v1943 = vor.u32 %v1942, %v1938
  %v1944 = vrot.slane %v1943, 4
  %v1946 = vshll.u32 %v1891, 16
  %v1948 = vrot.slane %v1946, 5
  %v1949 = vsel %vm1915, %v1944, %v1948
  %v1950 = vshrl.u32 %v1891, 16
  %v1952 = vrot.slane %v1950, 4
  %v1953 = vor.u32 %v1952, %v1948
  %v1954 = vrot.slane %v1953, 4
  %v1956 = vshll.u32 %v1892, 16
  %v1958 = vrot.slane %v1956, 5
  %v1959 = vsel %vm1915, %v1954, %v1958
  %v1960 = vshrl.u32 %v1892, 16
  %v1962 = vrot.slane %v1960, 4
  %v1963 = vor.u32 %v1962, %v1958
  %v1964 = vrot.slane %v1963, 4
  %v1966 = vshll.u32 %v1893, 16
  %v1968 = vrot.slane %v1966, 5
  %v1969 = vsel %vm1915, %v1964, %v1968
  %v1970 = vshrl.u32 %v1893, 16
  %v1972 = vrot.slane %v1970, 4
  %v1973 = vor.u32 %v1972, %v1968
  %v1974 = vrot.slane %v1973, 4
  %v1976 = vshll.u32 %v1894, 16
  %v1978 = vrot.slane %v1976, 5
  %v1979 = vsel %vm1915, %v1974, %v1978
  %v1980 = vshrl.u32 %v1894, 16
  %v1982 = vrot.slane %v1980, 4
  %v1983 = vor.u32 %v1982, %v1978
  %v1984 = vrot.slane %v1983, 4
  %v1986 = vshll.u32 %v1895, 16
  %v1988 = vrot.slane %v1986, 5
  %v1989 = vsel %vm1915, %v1984, %v1988
  %v1990 = vshrl.u32 %v1895, 16
  %v1992 = vrot.slane %v1990, 4
  %v1993 = vor.u32 %v1992, %v1988
  %v1994 = vrot.slane %v1993, 4
  %v1996 = vshll.u32 %v1896, 16
  %v1998 = vrot.slane %v1996, 5
  %v1999 = vsel %vm1915, %v1994, %v1998
  %v2000 = vshrl.u32 %v1896, 16
  %v2002 = vrot.slane %v2000, 4
  %v2003 = vor.u32 %v2002, %v1998
  %v2004 = vrot.slane %v2003, 4
  %v2006 = vshll.u32 %v1897, 16
  %v2008 = vrot.slane %v2006, 5
  %v2009 = vsel %vm1915, %v2004, %v2008
  %v2010 = vshrl.u32 %v1897, 16
  %v2012 = vrot.slane %v2010, 4
  %v2013 = vor.u32 %v2012, %v2008
  %v2014 = vrot.slane %v2013, 4
  %v2016 = vshll.u32 %v1898, 16
  %v2018 = vrot.slane %v2016, 5
  %v2019 = vsel %vm1915, %v2014, %v2018
  %v2020 = vshrl.u32 %v1898, 16
  %v2022 = vrot.slane %v2020, 4
  %v2023 = vor.u32 %v2022, %v2018
  %v2024 = vrot.slane %v2023, 4
  %v2026 = vshll.u32 %v1899, 16
  %v2028 = vrot.slane %v2026, 5
  %v2029 = vsel %vm1915, %v2024, %v2028
  %v2030 = vshrl.u32 %v1899, 16
  %v2032 = vrot.slane %v2030, 4
  %v2033 = vor.u32 %v2032, %v2028
  %v2034 = vrot.slane %v2033, 4
  %v2036 = vshll.u32 %v1900, 16
  %v2038 = vrot.slane %v2036, 5
  %v2039 = vsel %vm1915, %v2034, %v2038
  %v2040 = vshrl.u32 %v1900, 16
  %v2042 = vrot.slane %v2040, 4
  %v2043 = vor.u32 %v2042, %v2038
  %v2044 = vrot.slane %v2043, 4
  %v2046 = vshll.u32 %v1901, 16
  %v2048 = vrot.slane %v2046, 5
  %v2049 = vsel %vm1915, %v2044, %v2048
  %v2050 = vshrl.u32 %v1901, 16
  %v2052 = vrot.slane %v2050, 4
  %v2053 = vor.u32 %v2052, %v2048
  %v2054 = vrot.slane %v2053, 4
  %v2056 = vshll.u32 %v1902, 16
  %v2058 = vrot.slane %v2056, 5
  %v2059 = vsel %vm1915, %v2054, %v2058
  %v2060 = vshrl.u32 %v1902, 16
  %v2062 = vrot.slane %v2060, 4
  %v2063 = vor.u32 %v2062, %v2058
  %v2064 = vrot.slane %v2063, 4
  %v2066 = vshll.u32 %v1903, 16
  %v2068 = vrot.slane %v2066, 5
  %v2069 = vsel %vm1915, %v2064, %v2068
  %v2070 = vshrl.u32 %v1903, 16
  %v2072 = vrot.slane %v2070, 4
  %v2073 = vor.u32 %v2072, %v2068
  %v2074 = vrot.slane %v2073, 4
  %v2076 = vshll.u32 %v1904, 16
  %v2078 = vrot.slane %v2076, 5
  %v2079 = vsel %vm1915, %v2074, %v2078
  %v2080 = vshrl.u32 %v1904, 16
  %v2082 = vrot.slane %v2080, 4
  %v2083 = vor.u32 %v2082, %v2078
  %v2084 = vrot.slane %v2083, 4
  %v2086 = vshll.u32 %v1905, 16
  %v2088 = vrot.slane %v2086, 5
  %v2089 = vsel %vm1915, %v2084, %v2088
  %v2090 = vshrl.u32 %v1905, 16
  %v2092 = vrot.slane %v2090, 4
  %v2093 = vor.u32 %v2092, %v2088
  %v2094 = vrot.slane %v2093, 4
  %v2096 = vshll.u32 %v1906, 16
  %v2098 = vrot.slane %v2096, 5
  %v2099 = vsel %vm1915, %v2094, %v2098
  %v2100 = vshrl.u32 %v1906, 16
  %v2102 = vrot.slane %v2100, 4
  %v2103 = vor.u32 %v2102, %v2098
  %v2104 = vrot.slane %v2103, 4
  %v2106 = vshll.u32 %v1907, 16
  %v2108 = vrot.slane %v2106, 5
  %v2109 = vsel %vm1915, %v2104, %v2108
  %v2110 = vshrl.u32 %v1907, 16
  %v2112 = vrot.slane %v2110, 4
  %v2113 = vor.u32 %v2112, %v2108
  %v2114 = vrot.slane %v2113, 4
  %v2116 = vshll.u32 %v1908, 16
  %v2118 = vrot.slane %v2116, 5
  %v2119 = vsel %vm1915, %v2114, %v2118
  %v2120 = vshrl.u32 %v1908, 16
  %v2122 = vrot.slane %v2120, 4
  %v2123 = vor.u32 %v2122, %v2118
  %v2124 = vrot.slane %v2123, 4
  %v2126 = vshll.u32 %v1909, 16
  %v2128 = vrot.slane %v2126, 5
  %v2129 = vsel %vm1915, %v2124, %v2128
  %v2130 = vshrl.u32 %v1909, 16
  %v2132 = vrot.slane %v2130, 4
  %v2133 = vor.u32 %v2132, %v2128
  %v2134 = vrot.slane %v2133, 4
  %v2136 = vshll.u32 %v1910, 16
  %v2138 = vrot.slane %v2136, 5
  %v2139 = vsel %vm1915, %v2134, %v2138
  %v2140 = vshrl.u32 %v1910, 16
  %v2142 = vrot.slane %v2140, 4
  %v2143 = vor.u32 %v2142, %v2138
  %v2144 = vrot.slane %v2143, 4
  %v2146 = vshll.u32 %v1911, 16
  %v2148 = vrot.slane %v2146, 5
  %v2149 = vsel %vm1915, %v2144, %v2148
  %v2150 = vshrl.u32 %v1911, 16
  %v2152 = vrot.slane %v2150, 4
  %v2153 = vor.u32 %v2152, %v2148
  %v2154 = vrot.slane %v2153, 4
  %v2156 = vshll.u32 %v1912, 16
  %v2158 = vrot.slane %v2156, 5
  %v2159 = vsel %vm1915, %v2154, %v2158
  %v2160 = vshrl.u32 %v1912, 16
  %v2162 = vrot.slane %v2160, 4
  %v2163 = vor.u32 %v2162, %v2158
  %v2164 = vrot.slane %v2163, 4
  %vm2165 = vcmp.ne.s16.totalorder %v1919, 0
  %vm2166 = vcmp.ne.s16.totalorder %v1929, 0
  %vm2167 = vcmp.ne.s16.totalorder %v1939, 0
  %vm2168 = vcmp.ne.s16.totalorder %v1949, 0
  %vm2169 = vcmp.ne.s16.totalorder %v1959, 0
  %vm2170 = vcmp.ne.s16.totalorder %v1969, 0
  %vm2171 = vcmp.ne.s16.totalorder %v1979, 0
  %vm2172 = vcmp.ne.s16.totalorder %v1989, 0
  %vm2173 = vcmp.ne.s16.totalorder %v1999, 0
  %vm2174 = vcmp.ne.s16.totalorder %v2009, 0
  %vm2175 = vcmp.ne.s16.totalorder %v2019, 0
  %vm2176 = vcmp.ne.s16.totalorder %v2029, 0
  %vm2177 = vcmp.ne.s16.totalorder %v2039, 0
  %vm2178 = vcmp.ne.s16.totalorder %v2049, 0
  %vm2179 = vcmp.ne.s16.totalorder %v2059, 0
  %vm2180 = vcmp.ne.s16.totalorder %v2069, 0
  %vm2181 = vcmp.ne.s16.totalorder %v2079, 0
  %vm2182 = vcmp.ne.s16.totalorder %v2089, 0
  %vm2183 = vcmp.ne.s16.totalorder %v2099, 0
  %vm2184 = vcmp.ne.s16.totalorder %v2109, 0
  %vm2185 = vcmp.ne.s16.totalorder %v2119, 0
  %vm2186 = vcmp.ne.s16.totalorder %v2129, 0
  %vm2187 = vcmp.ne.s16.totalorder %v2139, 0
  %vm2188 = vcmp.ne.s16.totalorder %v2149, 0
  %vm2189 = vcmp.ne.s16.totalorder %v2159, 0
  %vm2190 = vcmp.ne.s16.totalorder %v2164, 0
  %v2191 = vsel %vm2165, %v1429, 0
  %v2192 = vsel %vm2166, %v526, 0
  %v2193 = vsel %vm2167, %v527, 0
  %v2194 = vsel %vm2168, %v528, 0
  %v2195 = vsel %vm2169, %v529, 0
  %v2196 = vsel %vm2170, %v530, 0
  %v2197 = vsel %vm2171, %v531, 0
  %v2198 = vsel %vm2172, %v532, 0
  %v2199 = vsel %vm2173, %v533, 0
  %v2200 = vsel %vm2174, %v534, 0
  %v2201 = vsel %vm2175, %v535, 0
  %v2202 = vsel %vm2176, %v536, 0
  %v2203 = vsel %vm2177, %v537, 0
  %v2204 = vsel %vm2178, %v538, 0
  %v2205 = vsel %vm2179, %v539, 0
  %v2206 = vsel %vm2180, %v540, 0
  %v2207 = vsel %vm2181, %v541, 0
  %v2208 = vsel %vm2182, %v542, 0
  %v2209 = vsel %vm2183, %v543, 0
  %v2210 = vsel %vm2184, %v544, 0
  %v2211 = vsel %vm2185, %v545, 0
  %v2212 = vsel %vm2186, %v546, 0
  %v2213 = vsel %vm2187, %v547, 0
  %v2214 = vsel %vm2188, %v548, 0
  %v2215 = vsel %vm2189, %v549, 0
  %v2216 = vsel %vm2190, %v1737, 0
  %v2217 = vld [vmem:[%s1 + $0x20] sm:$0xf]
  %v2218 = vld [vmem:[%s1 + $0x24] sm:$0xf]
  %v2219 = vld [vmem:[%s1 + $0x28] sm:$0xf]
  %v2220 = vld [vmem:[%s1 + $0x2c] sm:$0xf]
  %v2247 = vunpack.c.l.b16 %v2191
  %v2248 = vunpack.c.l.b16 %v2192
  %v2249 = vunpack.c.l.b16 %v2193
  %v2250 = vunpack.c.l.b16 %v2194
  %v2251 = vunpack.c.l.b16 %v2195
  %v2252 = vunpack.c.l.b16 %v2196
  %v2253 = vunpack.c.l.b16 %v2197
  %v2254 = vunpack.c.l.b16 %v2198
  %v2255 = vunpack.c.l.b16 %v2199
  %v2256 = vunpack.c.l.b16 %v2200
  %v2257 = vunpack.c.l.b16 %v2201
  %v2258 = vunpack.c.l.b16 %v2202
  %v2259 = vunpack.c.l.b16 %v2203
  %v2260 = vunpack.c.l.b16 %v2204
  %v2261 = vunpack.c.l.b16 %v2205
  %v2262 = vunpack.c.l.b16 %v2206
  %v2263 = vunpack.c.l.b16 %v2207
  %v2264 = vunpack.c.l.b16 %v2208
  %v2265 = vunpack.c.l.b16 %v2209
  %v2266 = vunpack.c.l.b16 %v2210
  %v2267 = vunpack.c.l.b16 %v2211
  %v2268 = vunpack.c.l.b16 %v2212
  %v2269 = vunpack.c.l.b16 %v2213
  %v2270 = vunpack.c.l.b16 %v2214
  %v2271 = vunpack.c.l.b16 %v2215
  %v2272 = vunpack.c.l.b16 %v2216
  %v2273 = vpack.c.b16 %v2248, %v2247
  %v2274 = vpack.c.b16 %v2250, %v2249
  %v2275 = vpack.c.b16 %v2252, %v2251
  %v2276 = vpack.c.b16 %v2254, %v2253
  %v2277 = vpack.c.b16 %v2256, %v2255
  %v2278 = vpack.c.b16 %v2258, %v2257
  %v2279 = vpack.c.b16 %v2260, %v2259
  %v2280 = vpack.c.b16 %v2262, %v2261
  %v2281 = vpack.c.b16 %v2264, %v2263
  %v2282 = vpack.c.b16 %v2266, %v2265
  %v2283 = vpack.c.b16 %v2268, %v2267
  %v2284 = vpack.c.b16 %v2270, %v2269
  %v2285 = vpack.c.b16 %v2272, %v2271
  %vm2286 = vsmask.f32 4352
  %v2288 = vshrl.u32 %v2273, 16
  %v2290 = vrot.slane %v2288, 3
  %v2291 = vshll.u32 %v2273, 16
  %v2293 = vrot.slane %v2291, 4
  %v2294 = vor.u32 %v2290, %v2293
  %v2296 = vshrl.u32 %v2274, 16
  %v2298 = vrot.slane %v2296, 3
  %v2299 = vshll.u32 %v2274, 16
  %v2301 = vrot.slane %v2299, 4
  %v2302 = vor.u32 %v2298, %v2301
  %v2303 = vsel %vm2286, %v2294, %v2302
  %v2305 = vshrl.u32 %v2275, 16
  %v2307 = vrot.slane %v2305, 3
  %v2308 = vshll.u32 %v2275, 16
  %v2310 = vrot.slane %v2308, 4
  %v2311 = vor.u32 %v2307, %v2310
  %v2312 = vsel %vm2286, %v2302, %v2311
  %v2314 = vshrl.u32 %v2276, 16
  %v2316 = vrot.slane %v2314, 3
  %v2317 = vshll.u32 %v2276, 16
  %v2319 = vrot.slane %v2317, 4
  %v2320 = vor.u32 %v2316, %v2319
  %v2321 = vsel %vm2286, %v2311, %v2320
  %v2323 = vshrl.u32 %v2277, 16
  %v2325 = vrot.slane %v2323, 3
  %v2326 = vshll.u32 %v2277, 16
  %v2328 = vrot.slane %v2326, 4
  %v2329 = vor.u32 %v2325, %v2328
  %v2330 = vsel %vm2286, %v2320, %v2329
  %v2332 = vshrl.u32 %v2278, 16
  %v2334 = vrot.slane %v2332, 3
  %v2335 = vshll.u32 %v2278, 16
  %v2337 = vrot.slane %v2335, 4
  %v2338 = vor.u32 %v2334, %v2337
  %v2339 = vsel %vm2286, %v2329, %v2338
  %v2341 = vshrl.u32 %v2279, 16
  %v2343 = vrot.slane %v2341, 3
  %v2344 = vshll.u32 %v2279, 16
  %v2346 = vrot.slane %v2344, 4
  %v2347 = vor.u32 %v2343, %v2346
  %v2348 = vsel %vm2286, %v2338, %v2347
  %v2350 = vshrl.u32 %v2280, 16
  %v2352 = vrot.slane %v2350, 3
  %v2353 = vshll.u32 %v2280, 16
  %v2355 = vrot.slane %v2353, 4
  %v2356 = vor.u32 %v2352, %v2355
  %v2357 = vsel %vm2286, %v2347, %v2356
  %v2359 = vshrl.u32 %v2281, 16
  %v2361 = vrot.slane %v2359, 3
  %v2362 = vshll.u32 %v2281, 16
  %v2364 = vrot.slane %v2362, 4
  %v2365 = vor.u32 %v2361, %v2364
  %v2366 = vsel %vm2286, %v2356, %v2365
  %v2368 = vshrl.u32 %v2282, 16
  %v2370 = vrot.slane %v2368, 3
  %v2371 = vshll.u32 %v2282, 16
  %v2373 = vrot.slane %v2371, 4
  %v2374 = vor.u32 %v2370, %v2373
  %v2375 = vsel %vm2286, %v2365, %v2374
  %v2377 = vshrl.u32 %v2283, 16
  %v2379 = vrot.slane %v2377, 3
  %v2380 = vshll.u32 %v2283, 16
  %v2382 = vrot.slane %v2380, 4
  %v2383 = vor.u32 %v2379, %v2382
  %v2384 = vsel %vm2286, %v2374, %v2383
  %v2386 = vshrl.u32 %v2284, 16
  %v2388 = vrot.slane %v2386, 3
  %v2389 = vshll.u32 %v2284, 16
  %v2391 = vrot.slane %v2389, 4
  %v2392 = vor.u32 %v2388, %v2391
  %v2393 = vsel %vm2286, %v2383, %v2392
  %v2395 = vshrl.u32 %v2285, 16
  %v2397 = vrot.slane %v2395, 3
  %v2398 = vshll.u32 %v2285, 16
  %v2400 = vrot.slane %v2398, 4
  %v2401 = vor.u32 %v2397, %v2400
  %v2402 = vsel %vm2286, %v2392, %v2401
  %v2407 = vunpack.c.l.b16 %v2217
  %v2408 = vunpack.c.l.b16 %v2218
  %v2409 = vunpack.c.l.b16 %v2219
  %v2410 = vunpack.c.l.b16 %v2220
  %v2411 = vpack.c.b16 %v2408, %v2407
  %v2412 = vpack.c.b16 %v2410, %v2409
  %v2416 = vsel %vm1228, %v2303, 0
  %v2419 = vsel %vm1228, %v2312, 0
  %v2422 = vsel %vm1228, %v2321, 0
  %v2425 = vsel %vm1228, %v2330, 0
  %v2428 = vsel %vm1228, %v2339, 0
  %v2431 = vsel %vm1228, %v2348, 0
  %v2434 = vsel %vm1228, %v2357, 0
  %v2437 = vsel %vm1228, %v2366, 0
  %v2440 = vsel %vm1228, %v2375, 0
  %v2443 = vsel %vm1228, %v2384, 0
  %v2446 = vsel %vm1228, %v2393, 0
  %v2449 = vsel %vm1228, %v2402, 0
  %v2452 = vsel %vm1228, %v2401, 0
  %2454 = vmatprep.subr.bf16.mxu0 0
  %2455 = vmatpush1.bf16.msra.mxu0 %v2411
  %2456 = vmatprep.subr.bf16.mxu0 0
  %2457 = vmatpush1.bf16.msra.mxu0 %v2412
  %2458 = vmatprep.subr.bf16.mxu0 0
  %2459 = vmatpush1.bf16.msra.mxu0 0
  %2460 = vmatprep.subr.bf16.mxu0 0
  %2461 = vmatpush1.bf16.msra.mxu0 0
  %2462 = vmatprep.subr.bf16.mxu0 0
  %2463 = vmatpush1.bf16.msra.mxu0 0
  %2464 = vmatprep.subr.bf16.mxu0 0
  %2465 = vmatpush1.bf16.msra.mxu0 0
  %2466 = vmatprep.subr.bf16.mxu0 0
  %2467 = vmatpush1.bf16.msra.mxu0 0
  %2468 = vmatprep.subr.bf16.mxu0 0
  %2469 = vmatpush1.bf16.msra.mxu0 0
  %2470 = vmatprep.subr.bf16.mxu0 0
  %2471 = vmatpush1.bf16.msra.mxu0 0
  %2472 = vmatprep.subr.bf16.mxu0 0
  %2473 = vmatpush1.bf16.msra.mxu0 0
  %2474 = vmatprep.subr.bf16.mxu0 0
  %2475 = vmatpush1.bf16.msra.mxu0 0
  %2476 = vmatprep.subr.bf16.mxu0 0
  %2477 = vmatpush1.bf16.msra.mxu0 0
  %2478 = vmatprep.subr.bf16.mxu0 0
  %2479 = vmatpush1.bf16.msra.mxu0 0
  %2480 = vmatprep.subr.bf16.mxu0 0
  %2481 = vmatpush1.bf16.msra.mxu0 0
  %2482 = vmatprep.subr.bf16.mxu0 0
  %2483 = vmatpush1.bf16.msra.mxu0 0
  %2484 = vmatprep.subr.bf16.mxu0 0
  %2485 = vmatpush1.bf16.msra.mxu0 0
  %2486 = vmatprep.mubr.bf16.mxu0 0
  %2487 = vmatmul.mubr.bf16.gmra.mrb[0].mxu0 %v2416
  %v2488 = vpop.f32.mrb[0].mxu0
  %v2489 = vadd.f32 0.0, %v2488
  %v2490 = vpop.f32.mrb[0].mxu0
  %v2491 = vpop.f32.mrb[0].mxu0
  %v2492 = vadd.f32 0.0, %v2491
  %v2493 = vpop.f32.mrb[0].mxu0
  %2494 = vmatprep.mubr.bf16.mxu0 0
  %2495 = vmatmul.mubr.bf16.gmra.mrb[0].mxu0 %v2419
  %v2496 = vpop.f32.mrb[0].mxu0
  %v2497 = vadd.f32 0.0, %v2496
  %v2498 = vpop.f32.mrb[0].mxu0
  %v2499 = vpop.f32.mrb[0].mxu0
  %v2500 = vadd.f32 0.0, %v2499
  %v2501 = vpop.f32.mrb[0].mxu0
  %2502 = vmatprep.mubr.bf16.mxu0 0
  %2503 = vmatmul.mubr.bf16.gmra.mrb[0].mxu0 %v2422
  %v2504 = vpop.f32.mrb[0].mxu0
  %v2505 = vadd.f32 0.0, %v2504
  %v2506 = vpop.f32.mrb[0].mxu0
  %v2507 = vpop.f32.mrb[0].mxu0
  %v2508 = vadd.f32 0.0, %v2507
  %v2509 = vpop.f32.mrb[0].mxu0
  %2510 = vmatprep.mubr.bf16.mxu0 0
  %2511 = vmatmul.mubr.bf16.gmra.mrb[0].mxu0 %v2425
  %v2512 = vpop.f32.mrb[0].mxu0
  %v2513 = vadd.f32 0.0, %v2512
  %v2514 = vpop.f32.mrb[0].mxu0
  %v2515 = vpop.f32.mrb[0].mxu0
  %v2516 = vadd.f32 0.0, %v2515
  %v2517 = vpop.f32.mrb[0].mxu0
  %2518 = vmatprep.mubr.bf16.mxu0 0
  %2519 = vmatmul.mubr.bf16.gmra.mrb[0].mxu0 %v2428
  %v2520 = vpop.f32.mrb[0].mxu0
  %v2521 = vadd.f32 0.0, %v2520
  %v2522 = vpop.f32.mrb[0].mxu0
  %v2523 = vpop.f32.mrb[0].mxu0
  %v2524 = vadd.f32 0.0, %v2523
  %v2525 = vpop.f32.mrb[0].mxu0
  %2526 = vmatprep.mubr.bf16.mxu0 0
  %2527 = vmatmul.mubr.bf16.gmra.mrb[0].mxu0 %v2431
  %v2528 = vpop.f32.mrb[0].mxu0
  %v2529 = vadd.f32 0.0, %v2528
  %v2530 = vpop.f32.mrb[0].mxu0
  %v2531 = vpop.f32.mrb[0].mxu0
  %v2532 = vadd.f32 0.0, %v2531
  %v2533 = vpop.f32.mrb[0].mxu0
  %2534 = vmatprep.mubr.bf16.mxu0 0
  %2535 = vmatmul.mubr.bf16.gmra.mrb[0].mxu0 %v2434
  %v2536 = vpop.f32.mrb[0].mxu0
  %v2537 = vadd.f32 0.0, %v2536
  %v2538 = vpop.f32.mrb[0].mxu0
  %v2539 = vpop.f32.mrb[0].mxu0
  %v2540 = vadd.f32 0.0, %v2539
  %v2541 = vpop.f32.mrb[0].mxu0
  %2542 = vmatprep.mubr.bf16.mxu0 0
  %2543 = vmatmul.mubr.bf16.gmra.mrb[0].mxu0 %v2437
  %v2544 = vpop.f32.mrb[0].mxu0
  %v2545 = vadd.f32 0.0, %v2544
  %v2546 = vpop.f32.mrb[0].mxu0
  %v2547 = vpop.f32.mrb[0].mxu0
  %v2548 = vadd.f32 0.0, %v2547
  %v2549 = vpop.f32.mrb[0].mxu0
  %2550 = vmatprep.mubr.bf16.mxu0 0
  %2551 = vmatmul.mubr.bf16.gmra.mrb[0].mxu0 %v2440
  %v2552 = vpop.f32.mrb[0].mxu0
  %v2553 = vadd.f32 0.0, %v2552
  %v2554 = vpop.f32.mrb[0].mxu0
  %v2555 = vpop.f32.mrb[0].mxu0
  %v2556 = vadd.f32 0.0, %v2555
  %v2557 = vpop.f32.mrb[0].mxu0
  %2558 = vmatprep.mubr.bf16.mxu0 0
  %2559 = vmatmul.mubr.bf16.gmra.mrb[0].mxu0 %v2443
  %v2560 = vpop.f32.mrb[0].mxu0
  %v2561 = vadd.f32 0.0, %v2560
  %v2562 = vpop.f32.mrb[0].mxu0
  %v2563 = vpop.f32.mrb[0].mxu0
  %v2564 = vadd.f32 0.0, %v2563
  %v2565 = vpop.f32.mrb[0].mxu0
  %2566 = vmatprep.mubr.bf16.mxu0 0
  %2567 = vmatmul.mubr.bf16.gmra.mrb[0].mxu0 %v2446
  %v2568 = vpop.f32.mrb[0].mxu0
  %v2569 = vadd.f32 0.0, %v2568
  %v2570 = vpop.f32.mrb[0].mxu0
  %v2571 = vpop.f32.mrb[0].mxu0
  %v2572 = vadd.f32 0.0, %v2571
  %v2573 = vpop.f32.mrb[0].mxu0
  %2574 = vmatprep.mubr.bf16.mxu0 0
  %2575 = vmatmul.mubr.bf16.gmra.mrb[0].mxu0 %v2449
  %v2576 = vpop.f32.mrb[0].mxu0
  %v2577 = vadd.f32 0.0, %v2576
  %v2578 = vpop.f32.mrb[0].mxu0
  %v2579 = vpop.f32.mrb[0].mxu0
  %v2580 = vadd.f32 0.0, %v2579
  %v2581 = vpop.f32.mrb[0].mxu0
  %2582 = vmatprep.mubr.bf16.mxu0 0
  %2583 = vmatmul.mubr.bf16.gmra.mrb[0].mxu0 %v2452
  %v2584 = vpop.f32.mrb[0].mxu0
  %v2585 = vadd.f32 0.0, %v2584
  %v2586 = vpop.f32.mrb[0].mxu0
  %v2587 = vpop.f32.mrb[0].mxu0
  %v2588 = vpop.f32.mrb[0].mxu0
  %2589 = vdwg.mxu0
  %v2590 = vadd.f32 %v1712, %v2489
  %v2591 = vadd.f32 %v1713, %v2492
  %v2592 = vadd.f32 %v1714, %v2497
  %v2593 = vadd.f32 %v1715, %v2500
  %v2594 = vadd.f32 %v1716, %v2505
  %v2595 = vadd.f32 %v1717, %v2508
  %v2596 = vadd.f32 %v1718, %v2513
  %v2597 = vadd.f32 %v1719, %v2516
  %v2598 = vadd.f32 %v1720, %v2521
  %v2599 = vadd.f32 %v1721, %v2524
  %v2600 = vadd.f32 %v1722, %v2529
  %v2601 = vadd.f32 %v1723, %v2532
  %v2602 = vadd.f32 %v1724, %v2537
  %v2603 = vadd.f32 %v1725, %v2540
  %v2604 = vadd.f32 %v1726, %v2545
  %v2605 = vadd.f32 %v1727, %v2548
  %v2606 = vadd.f32 %v1728, %v2553
  %v2607 = vadd.f32 %v1729, %v2556
  %v2608 = vadd.f32 %v1730, %v2561
  %v2609 = vadd.f32 %v1731, %v2564
  %v2610 = vadd.f32 %v1732, %v2569
  %v2611 = vadd.f32 %v1733, %v2572
  %v2612 = vadd.f32 %v1734, %v2577
  %v2613 = vadd.f32 %v1735, %v2580
  %v2614 = vadd.f32 %v1736, %v2585
  %v2615 = vld [vmem:[%s0 + $0xc] sm:$0xe]
  %v2616 = vld [vmem:[%s0 + $0x10] sm:$0xf]
  %v2617 = vld [vmem:[%s0 + $0x14] sm:$0xf]
  %v2618 = vld [vmem:[%s0 + $0x18] sm:$0xf]
  %v2619 = vld [vmem:[%s0 + $0x1c] sm:$0xf]
  %v2620 = vld [vmem:[%s0 + $0x20] sm:$0xf]
  %v2621 = vld [vmem:[%s0 + $0x24] sm:$0xf]
  %v2622 = vld [vmem:[%s0 + $0x28] sm:$0xf]
  %v2623 = vld [vmem:[%s0 + $0x2c] sm:$0xf]
  %v2624 = vld [vmem:[%s0 + $0x30] sm:$0xf]
  %v2625 = vld [vmem:[%s0 + $0x34] sm:$0xf]
  %v2626 = vld [vmem:[%s0 + $0x38] sm:$0xf]
  %v2627 = vld [vmem:[%s0 + $0x3c] sm:$0xf]
  %v2628 = vld [vmem:[%s0 + $0x40] sm:$0xf]
  %v2629 = vld [vmem:[%s0 + $0x44] sm:$0xf]
  %v2630 = vld [vmem:[%s0 + $0x48] sm:$0xf]
  %v2631 = vld [vmem:[%s0 + $0x4c] sm:$0xf]
  %v2632 = vld [vmem:[%s0 + $0x50] sm:$0xf]
  %v2633 = vld [vmem:[%s0 + $0x54] sm:$0xf]
  %v2634 = vld [vmem:[%s0 + $0x58] sm:$0xf]
  %v2635 = vld [vmem:[%s0 + $0x5c] sm:$0xf]
  %v2636 = vld [vmem:[%s0 + $0x60] sm:$0xf]
  %v2637 = vld [vmem:[%s0 + $0x64] sm:$0xf]
  %v2638 = vld [vmem:[%s0 + $0x68] sm:$0xf]
  %v2639 = vld [vmem:[%s0 + $0x6c] sm:$0xf]
  %vm2640 = vsmask.f32 1280
  %vm2641 = vsmask.f32 5392
  %vm2642 = vmor %vm2640, %vm2641
  %v2643 = vrot.slane %v730, 6
  %v2644 = vrot.slane %v733, 7
  %v2645 = vor.u32 %v2643, %v2644
  %v2646 = vrot.slane %v2645, 4
  %v2647 = vrot.slane %v739, 6
  %v2648 = vrot.slane %v742, 7
  %v2649 = vor.u32 %v2647, %v2648
  %v2650 = vsel %vm2642, %v2646, %v2649
  %v2651 = vrot.slane %v2649, 4
  %v2652 = vrot.slane %v749, 6
  %v2653 = vrot.slane %v752, 7
  %v2654 = vor.u32 %v2652, %v2653
  %v2655 = vsel %vm2642, %v2651, %v2654
  %v2656 = vrot.slane %v2654, 4
  %v2657 = vrot.slane %v759, 6
  %v2658 = vrot.slane %v762, 7
  %v2659 = vor.u32 %v2657, %v2658
  %v2660 = vsel %vm2642, %v2656, %v2659
  %v2661 = vrot.slane %v2659, 4
  %v2662 = vrot.slane %v769, 6
  %v2663 = vrot.slane %v772, 7
  %v2664 = vor.u32 %v2662, %v2663
  %v2665 = vsel %vm2642, %v2661, %v2664
  %v2666 = vrot.slane %v2664, 4
  %v2667 = vrot.slane %v779, 6
  %v2668 = vrot.slane %v782, 7
  %v2669 = vor.u32 %v2667, %v2668
  %v2670 = vsel %vm2642, %v2666, %v2669
  %v2671 = vrot.slane %v2669, 4
  %v2672 = vrot.slane %v789, 6
  %v2673 = vrot.slane %v792, 7
  %v2674 = vor.u32 %v2672, %v2673
  %v2675 = vsel %vm2642, %v2671, %v2674
  %v2676 = vrot.slane %v2674, 4
  %v2677 = vrot.slane %v799, 6
  %v2678 = vrot.slane %v802, 7
  %v2679 = vor.u32 %v2677, %v2678
  %v2680 = vsel %vm2642, %v2676, %v2679
  %v2681 = vrot.slane %v2679, 4
  %v2682 = vrot.slane %v809, 6
  %v2683 = vrot.slane %v812, 7
  %v2684 = vor.u32 %v2682, %v2683
  %v2685 = vsel %vm2642, %v2681, %v2684
  %v2686 = vrot.slane %v2684, 4
  %v2687 = vrot.slane %v819, 6
  %v2688 = vrot.slane %v822, 7
  %v2689 = vor.u32 %v2687, %v2688
  %v2690 = vsel %vm2642, %v2686, %v2689
  %v2691 = vrot.slane %v2689, 4
  %v2692 = vrot.slane %v829, 6
  %v2693 = vrot.slane %v832, 7
  %v2694 = vor.u32 %v2692, %v2693
  %v2695 = vsel %vm2642, %v2691, %v2694
  %v2696 = vrot.slane %v2694, 4
  %v2697 = vrot.slane %v839, 6
  %v2698 = vrot.slane %v842, 7
  %v2699 = vor.u32 %v2697, %v2698
  %v2700 = vsel %vm2642, %v2696, %v2699
  %v2701 = vrot.slane %v2699, 4
  %v2702 = vrot.slane %v849, 6
  %v2703 = vrot.slane %v852, 7
  %v2704 = vor.u32 %v2702, %v2703
  %v2705 = vsel %vm2642, %v2701, %v2704
  %v2706 = vrot.slane %v2704, 4
  %v2707 = vrot.slane %v859, 6
  %v2708 = vrot.slane %v862, 7
  %v2709 = vor.u32 %v2707, %v2708
  %v2710 = vsel %vm2642, %v2706, %v2709
  %v2711 = vrot.slane %v2709, 4
  %v2712 = vrot.slane %v869, 6
  %v2713 = vrot.slane %v872, 7
  %v2714 = vor.u32 %v2712, %v2713
  %v2715 = vsel %vm2642, %v2711, %v2714
  %v2716 = vrot.slane %v2714, 4
  %v2717 = vrot.slane %v879, 6
  %v2718 = vrot.slane %v882, 7
  %v2719 = vor.u32 %v2717, %v2718
  %v2720 = vsel %vm2642, %v2716, %v2719
  %v2721 = vrot.slane %v2719, 4
  %v2722 = vrot.slane %v889, 6
  %v2723 = vrot.slane %v892, 7
  %v2724 = vor.u32 %v2722, %v2723
  %v2725 = vsel %vm2642, %v2721, %v2724
  %v2726 = vrot.slane %v2724, 4
  %v2727 = vrot.slane %v899, 6
  %v2728 = vrot.slane %v902, 7
  %v2729 = vor.u32 %v2727, %v2728
  %v2730 = vsel %vm2642, %v2726, %v2729
  %v2731 = vrot.slane %v2729, 4
  %v2732 = vrot.slane %v909, 6
  %v2733 = vrot.slane %v912, 7
  %v2734 = vor.u32 %v2732, %v2733
  %v2735 = vsel %vm2642, %v2731, %v2734
  %v2736 = vrot.slane %v2734, 4
  %v2737 = vrot.slane %v919, 6
  %v2738 = vrot.slane %v922, 7
  %v2739 = vor.u32 %v2737, %v2738
  %v2740 = vsel %vm2642, %v2736, %v2739
  %v2741 = vrot.slane %v2739, 4
  %v2742 = vrot.slane %v929, 6
  %v2743 = vrot.slane %v932, 7
  %v2744 = vor.u32 %v2742, %v2743
  %v2745 = vsel %vm2642, %v2741, %v2744
  %v2746 = vrot.slane %v2744, 4
  %v2747 = vrot.slane %v939, 6
  %v2748 = vrot.slane %v942, 7
  %v2749 = vor.u32 %v2747, %v2748
  %v2750 = vsel %vm2642, %v2746, %v2749
  %v2751 = vrot.slane %v2749, 4
  %v2752 = vrot.slane %v949, 6
  %v2753 = vrot.slane %v952, 7
  %v2754 = vor.u32 %v2752, %v2753
  %v2755 = vsel %vm2642, %v2751, %v2754
  %v2756 = vrot.slane %v2754, 4
  %v2757 = vrot.slane %v959, 6
  %v2758 = vrot.slane %v962, 7
  %v2759 = vor.u32 %v2757, %v2758
  %v2760 = vsel %vm2642, %v2756, %v2759
  %v2761 = vrot.slane %v2759, 4
  %v2762 = vrot.slane %v969, 6
  %v2763 = vrot.slane %v972, 7
  %v2764 = vor.u32 %v2762, %v2763
  %v2765 = vsel %vm2642, %v2761, %v2764
  %vm2766 = vcmp.ne.s16.totalorder %v2645, 0
  %vm2767 = vcmp.ne.s16.totalorder %v2650, 0
  %vm2768 = vcmp.ne.s16.totalorder %v2655, 0
  %vm2769 = vcmp.ne.s16.totalorder %v2660, 0
  %vm2770 = vcmp.ne.s16.totalorder %v2665, 0
  %vm2771 = vcmp.ne.s16.totalorder %v2670, 0
  %vm2772 = vcmp.ne.s16.totalorder %v2675, 0
  %vm2773 = vcmp.ne.s16.totalorder %v2680, 0
  %vm2774 = vcmp.ne.s16.totalorder %v2685, 0
  %vm2775 = vcmp.ne.s16.totalorder %v2690, 0
  %vm2776 = vcmp.ne.s16.totalorder %v2695, 0
  %vm2777 = vcmp.ne.s16.totalorder %v2700, 0
  %vm2778 = vcmp.ne.s16.totalorder %v2705, 0
  %vm2779 = vcmp.ne.s16.totalorder %v2710, 0
  %vm2780 = vcmp.ne.s16.totalorder %v2715, 0
  %vm2781 = vcmp.ne.s16.totalorder %v2720, 0
  %vm2782 = vcmp.ne.s16.totalorder %v2725, 0
  %vm2783 = vcmp.ne.s16.totalorder %v2730, 0
  %vm2784 = vcmp.ne.s16.totalorder %v2735, 0
  %vm2785 = vcmp.ne.s16.totalorder %v2740, 0
  %vm2786 = vcmp.ne.s16.totalorder %v2745, 0
  %vm2787 = vcmp.ne.s16.totalorder %v2750, 0
  %vm2788 = vcmp.ne.s16.totalorder %v2755, 0
  %vm2789 = vcmp.ne.s16.totalorder %v2760, 0
  %vm2790 = vcmp.ne.s16.totalorder %v2765, 0
  %v2791 = vsel %vm2766, %v2615, 0
  %v2792 = vsel %vm2767, %v2616, 0
  %v2793 = vsel %vm2768, %v2617, 0
  %v2794 = vsel %vm2769, %v2618, 0
  %v2795 = vsel %vm2770, %v2619, 0
  %v2796 = vsel %vm2771, %v2620, 0
  %v2797 = vsel %vm2772, %v2621, 0
  %v2798 = vsel %vm2773, %v2622, 0
  %v2799 = vsel %vm2774, %v2623, 0
  %v2800 = vsel %vm2775, %v2624, 0
  %v2801 = vsel %vm2776, %v2625, 0
  %v2802 = vsel %vm2777, %v2626, 0
  %v2803 = vsel %vm2778, %v2627, 0
  %v2804 = vsel %vm2779, %v2628, 0
  %v2805 = vsel %vm2780, %v2629, 0
  %v2806 = vsel %vm2781, %v2630, 0
  %v2807 = vsel %vm2782, %v2631, 0
  %v2808 = vsel %vm2783, %v2632, 0
  %v2809 = vsel %vm2784, %v2633, 0
  %v2810 = vsel %vm2785, %v2634, 0
  %v2811 = vsel %vm2786, %v2635, 0
  %v2812 = vsel %vm2787, %v2636, 0
  %v2813 = vsel %vm2788, %v2637, 0
  %v2814 = vsel %vm2789, %v2638, 0
  %v2815 = vsel %vm2790, %v2639, 0
  %v2816 = vld [vmem:[%s1 + $0x30] sm:$0xf]
  %v2817 = vld [vmem:[%s1 + $0x34] sm:$0xf]
  %v2818 = vld [vmem:[%s1 + $0x38] sm:$0xf]
  %v2819 = vld [vmem:[%s1 + $0x3c] sm:$0xf]
  %v2845 = vunpack.c.l.b16 %v2791
  %v2846 = vunpack.c.l.b16 %v2792
  %v2847 = vunpack.c.l.b16 %v2793
  %v2848 = vunpack.c.l.b16 %v2794
  %v2849 = vunpack.c.l.b16 %v2795
  %v2850 = vunpack.c.l.b16 %v2796
  %v2851 = vunpack.c.l.b16 %v2797
  %v2852 = vunpack.c.l.b16 %v2798
  %v2853 = vunpack.c.l.b16 %v2799
  %v2854 = vunpack.c.l.b16 %v2800
  %v2855 = vunpack.c.l.b16 %v2801
  %v2856 = vunpack.c.l.b16 %v2802
  %v2857 = vunpack.c.l.b16 %v2803
  %v2858 = vunpack.c.l.b16 %v2804
  %v2859 = vunpack.c.l.b16 %v2805
  %v2860 = vunpack.c.l.b16 %v2806
  %v2861 = vunpack.c.l.b16 %v2807
  %v2862 = vunpack.c.l.b16 %v2808
  %v2863 = vunpack.c.l.b16 %v2809
  %v2864 = vunpack.c.l.b16 %v2810
  %v2865 = vunpack.c.l.b16 %v2811
  %v2866 = vunpack.c.l.b16 %v2812
  %v2867 = vunpack.c.l.b16 %v2813
  %v2868 = vunpack.c.l.b16 %v2814
  %v2869 = vunpack.c.l.b16 %v2815
  %v2870 = vpack.c.b16 %v2846, %v2845
  %v2871 = vpack.c.b16 %v2848, %v2847
  %v2872 = vpack.c.b16 %v2850, %v2849
  %v2873 = vpack.c.b16 %v2852, %v2851
  %v2874 = vpack.c.b16 %v2854, %v2853
  %v2875 = vpack.c.b16 %v2856, %v2855
  %v2876 = vpack.c.b16 %v2858, %v2857
  %v2877 = vpack.c.b16 %v2860, %v2859
  %v2878 = vpack.c.b16 %v2862, %v2861
  %v2879 = vpack.c.b16 %v2864, %v2863
  %v2880 = vpack.c.b16 %v2866, %v2865
  %v2881 = vpack.c.b16 %v2868, %v2867
  %v2882 = vpack.c.b16 %v2869, %v2869
  %vm2883 = vsmask.f32 6400
  %v2885 = vshrl.u32 %v2870, 16
  %v2887 = vrot.slane %v2885, 1
  %v2888 = vshll.u32 %v2870, 16
  %v2890 = vrot.slane %v2888, 2
  %v2891 = vor.u32 %v2887, %v2890
  %v2893 = vshrl.u32 %v2871, 16
  %v2895 = vrot.slane %v2893, 1
  %v2896 = vshll.u32 %v2871, 16
  %v2898 = vrot.slane %v2896, 2
  %v2899 = vor.u32 %v2895, %v2898
  %v2900 = vsel %vm2883, %v2891, %v2899
  %v2902 = vshrl.u32 %v2872, 16
  %v2904 = vrot.slane %v2902, 1
  %v2905 = vshll.u32 %v2872, 16
  %v2907 = vrot.slane %v2905, 2
  %v2908 = vor.u32 %v2904, %v2907
  %v2909 = vsel %vm2883, %v2899, %v2908
  %v2911 = vshrl.u32 %v2873, 16
  %v2913 = vrot.slane %v2911, 1
  %v2914 = vshll.u32 %v2873, 16
  %v2916 = vrot.slane %v2914, 2
  %v2917 = vor.u32 %v2913, %v2916
  %v2918 = vsel %vm2883, %v2908, %v2917
  %v2920 = vshrl.u32 %v2874, 16
  %v2922 = vrot.slane %v2920, 1
  %v2923 = vshll.u32 %v2874, 16
  %v2925 = vrot.slane %v2923, 2
  %v2926 = vor.u32 %v2922, %v2925
  %v2927 = vsel %vm2883, %v2917, %v2926
  %v2929 = vshrl.u32 %v2875, 16
  %v2931 = vrot.slane %v2929, 1
  %v2932 = vshll.u32 %v2875, 16
  %v2934 = vrot.slane %v2932, 2
  %v2935 = vor.u32 %v2931, %v2934
  %v2936 = vsel %vm2883, %v2926, %v2935
  %v2938 = vshrl.u32 %v2876, 16
  %v2940 = vrot.slane %v2938, 1
  %v2941 = vshll.u32 %v2876, 16
  %v2943 = vrot.slane %v2941, 2
  %v2944 = vor.u32 %v2940, %v2943
  %v2945 = vsel %vm2883, %v2935, %v2944
  %v2947 = vshrl.u32 %v2877, 16
  %v2949 = vrot.slane %v2947, 1
  %v2950 = vshll.u32 %v2877, 16
  %v2952 = vrot.slane %v2950, 2
  %v2953 = vor.u32 %v2949, %v2952
  %v2954 = vsel %vm2883, %v2944, %v2953
  %v2956 = vshrl.u32 %v2878, 16
  %v2958 = vrot.slane %v2956, 1
  %v2959 = vshll.u32 %v2878, 16
  %v2961 = vrot.slane %v2959, 2
  %v2962 = vor.u32 %v2958, %v2961
  %v2963 = vsel %vm2883, %v2953, %v2962
  %v2965 = vshrl.u32 %v2879, 16
  %v2967 = vrot.slane %v2965, 1
  %v2968 = vshll.u32 %v2879, 16
  %v2970 = vrot.slane %v2968, 2
  %v2971 = vor.u32 %v2967, %v2970
  %v2972 = vsel %vm2883, %v2962, %v2971
  %v2974 = vshrl.u32 %v2880, 16
  %v2976 = vrot.slane %v2974, 1
  %v2977 = vshll.u32 %v2880, 16
  %v2979 = vrot.slane %v2977, 2
  %v2980 = vor.u32 %v2976, %v2979
  %v2981 = vsel %vm2883, %v2971, %v2980
  %v2983 = vshrl.u32 %v2881, 16
  %v2985 = vrot.slane %v2983, 1
  %v2986 = vshll.u32 %v2881, 16
  %v2988 = vrot.slane %v2986, 2
  %v2989 = vor.u32 %v2985, %v2988
  %v2990 = vsel %vm2883, %v2980, %v2989
  %v2992 = vshrl.u32 %v2882, 16
  %v2994 = vrot.slane %v2992, 1
  %v2995 = vshll.u32 %v2882, 16
  %v2997 = vrot.slane %v2995, 2
  %v2998 = vor.u32 %v2994, %v2997
  %v2999 = vsel %vm2883, %v2989, %v2998
  %v3004 = vunpack.c.l.b16 %v2816
  %v3005 = vunpack.c.l.b16 %v2817
  %v3006 = vunpack.c.l.b16 %v2818
  %v3007 = vunpack.c.l.b16 %v2819
  %v3008 = vpack.c.b16 %v3005, %v3004
  %v3009 = vpack.c.b16 %v3007, %v3006
  %v3013 = vsel %vm1228, %v2900, 0
  %v3016 = vsel %vm1228, %v2909, 0
  %v3019 = vsel %vm1228, %v2918, 0
  %v3022 = vsel %vm1228, %v2927, 0
  %v3025 = vsel %vm1228, %v2936, 0
  %v3028 = vsel %vm1228, %v2945, 0
  %v3031 = vsel %vm1228, %v2954, 0
  %v3034 = vsel %vm1228, %v2963, 0
  %v3037 = vsel %vm1228, %v2972, 0
  %v3040 = vsel %vm1228, %v2981, 0
  %v3043 = vsel %vm1228, %v2990, 0
  %v3046 = vsel %vm1228, %v2999, 0
  %v3049 = vsel %vm1228, %v2998, 0
  %3051 = vmatprep.subr.bf16.mxu0 0
  %3052 = vmatpush1.bf16.msra.mxu0 %v3008
  %3053 = vmatprep.subr.bf16.mxu0 0
  %3054 = vmatpush1.bf16.msra.mxu0 %v3009
  %3055 = vmatprep.subr.bf16.mxu0 0
  %3056 = vmatpush1.bf16.msra.mxu0 0
  %3057 = vmatprep.subr.bf16.mxu0 0
  %3058 = vmatpush1.bf16.msra.mxu0 0
  %3059 = vmatprep.subr.bf16.mxu0 0
  %3060 = vmatpush1.bf16.msra.mxu0 0
  %3061 = vmatprep.subr.bf16.mxu0 0
  %3062 = vmatpush1.bf16.msra.mxu0 0
  %3063 = vmatprep.subr.bf16.mxu0 0
  %3064 = vmatpush1.bf16.msra.mxu0 0
  %3065 = vmatprep.subr.bf16.mxu0 0
  %3066 = vmatpush1.bf16.msra.mxu0 0
  %3067 = vmatprep.subr.bf16.mxu0 0
  %3068 = vmatpush1.bf16.msra.mxu0 0
  %3069 = vmatprep.subr.bf16.mxu0 0
  %3070 = vmatpush1.bf16.msra.mxu0 0
  %3071 = vmatprep.subr.bf16.mxu0 0
  %3072 = vmatpush1.bf16.msra.mxu0 0
  %3073 = vmatprep.subr.bf16.mxu0 0
  %3074 = vmatpush1.bf16.msra.mxu0 0
  %3075 = vmatprep.subr.bf16.mxu0 0
  %3076 = vmatpush1.bf16.msra.mxu0 0
  %3077 = vmatprep.subr.bf16.mxu0 0
  %3078 = vmatpush1.bf16.msra.mxu0 0
  %3079 = vmatprep.subr.bf16.mxu0 0
  %3080 = vmatpush1.bf16.msra.mxu0 0
  %3081 = vmatprep.subr.bf16.mxu0 0
  %3082 = vmatpush1.bf16.msra.mxu0 0
  %3083 = vmatprep.mubr.bf16.mxu0 0
  %3084 = vmatmul.mubr.bf16.gmra.mrb[0].mxu0 %v3013
  %v3085 = vpop.f32.mrb[0].mxu0
  %v3086 = vadd.f32 0.0, %v3085
  %v3087 = vpop.f32.mrb[0].mxu0
  %v3088 = vpop.f32.mrb[0].mxu0
  %v3089 = vadd.f32 0.0, %v3088
  %v3090 = vpop.f32.mrb[0].mxu0
  %3091 = vmatprep.mubr.bf16.mxu0 0
  %3092 = vmatmul.mubr.bf16.gmra.mrb[0].mxu0 %v3016
  %v3093 = vpop.f32.mrb[0].mxu0
  %v3094 = vadd.f32 0.0, %v3093
  %v3095 = vpop.f32.mrb[0].mxu0
  %v3096 = vpop.f32.mrb[0].mxu0
  %v3097 = vadd.f32 0.0, %v3096
  %v3098 = vpop.f32.mrb[0].mxu0
  %3099 = vmatprep.mubr.bf16.mxu0 0
  %3100 = vmatmul.mubr.bf16.gmra.mrb[0].mxu0 %v3019
  %v3101 = vpop.f32.mrb[0].mxu0
  %v3102 = vadd.f32 0.0, %v3101
  %v3103 = vpop.f32.mrb[0].mxu0
  %v3104 = vpop.f32.mrb[0].mxu0
  %v3105 = vadd.f32 0.0, %v3104
  %v3106 = vpop.f32.mrb[0].mxu0
  %3107 = vmatprep.mubr.bf16.mxu0 0
  %3108 = vmatmul.mubr.bf16.gmra.mrb[0].mxu0 %v3022
  %v3109 = vpop.f32.mrb[0].mxu0
  %v3110 = vadd.f32 0.0, %v3109
  %v3111 = vpop.f32.mrb[0].mxu0
  %v3112 = vpop.f32.mrb[0].mxu0
  %v3113 = vadd.f32 0.0, %v3112
  %v3114 = vpop.f32.mrb[0].mxu0
  %3115 = vmatprep.mubr.bf16.mxu0 0
  %3116 = vmatmul.mubr.bf16.gmra.mrb[0].mxu0 %v3025
  %v3117 = vpop.f32.mrb[0].mxu0
  %v3118 = vadd.f32 0.0, %v3117
  %v3119 = vpop.f32.mrb[0].mxu0
  %v3120 = vpop.f32.mrb[0].mxu0
  %v3121 = vadd.f32 0.0, %v3120
  %v3122 = vpop.f32.mrb[0].mxu0
  %3123 = vmatprep.mubr.bf16.mxu0 0
  %3124 = vmatmul.mubr.bf16.gmra.mrb[0].mxu0 %v3028
  %v3125 = vpop.f32.mrb[0].mxu0
  %v3126 = vadd.f32 0.0, %v3125
  %v3127 = vpop.f32.mrb[0].mxu0
  %v3128 = vpop.f32.mrb[0].mxu0
  %v3129 = vadd.f32 0.0, %v3128
  %v3130 = vpop.f32.mrb[0].mxu0
  %3131 = vmatprep.mubr.bf16.mxu0 0
  %3132 = vmatmul.mubr.bf16.gmra.mrb[0].mxu0 %v3031
  %v3133 = vpop.f32.mrb[0].mxu0
  %v3134 = vadd.f32 0.0, %v3133
  %v3135 = vpop.f32.mrb[0].mxu0
  %v3136 = vpop.f32.mrb[0].mxu0
  %v3137 = vadd.f32 0.0, %v3136
  %v3138 = vpop.f32.mrb[0].mxu0
  %3139 = vmatprep.mubr.bf16.mxu0 0
  %3140 = vmatmul.mubr.bf16.gmra.mrb[0].mxu0 %v3034
  %v3141 = vpop.f32.mrb[0].mxu0
  %v3142 = vadd.f32 0.0, %v3141
  %v3143 = vpop.f32.mrb[0].mxu0
  %v3144 = vpop.f32.mrb[0].mxu0
  %v3145 = vadd.f32 0.0, %v3144
  %v3146 = vpop.f32.mrb[0].mxu0
  %3147 = vmatprep.mubr.bf16.mxu0 0
  %3148 = vmatmul.mubr.bf16.gmra.mrb[0].mxu0 %v3037
  %v3149 = vpop.f32.mrb[0].mxu0
  %v3150 = vadd.f32 0.0, %v3149
  %v3151 = vpop.f32.mrb[0].mxu0
  %v3152 = vpop.f32.mrb[0].mxu0
  %v3153 = vadd.f32 0.0, %v3152
  %v3154 = vpop.f32.mrb[0].mxu0
  %3155 = vmatprep.mubr.bf16.mxu0 0
  %3156 = vmatmul.mubr.bf16.gmra.mrb[0].mxu0 %v3040
  %v3157 = vpop.f32.mrb[0].mxu0
  %v3158 = vadd.f32 0.0, %v3157
  %v3159 = vpop.f32.mrb[0].mxu0
  %v3160 = vpop.f32.mrb[0].mxu0
  %v3161 = vadd.f32 0.0, %v3160
  %v3162 = vpop.f32.mrb[0].mxu0
  %3163 = vmatprep.mubr.bf16.mxu0 0
  %3164 = vmatmul.mubr.bf16.gmra.mrb[0].mxu0 %v3043
  %v3165 = vpop.f32.mrb[0].mxu0
  %v3166 = vadd.f32 0.0, %v3165
  %v3167 = vpop.f32.mrb[0].mxu0
  %v3168 = vpop.f32.mrb[0].mxu0
  %v3169 = vadd.f32 0.0, %v3168
  %v3170 = vpop.f32.mrb[0].mxu0
  %3171 = vmatprep.mubr.bf16.mxu0 0
  %3172 = vmatmul.mubr.bf16.gmra.mrb[0].mxu0 %v3046
  %v3173 = vpop.f32.mrb[0].mxu0
  %v3174 = vadd.f32 0.0, %v3173
  %v3175 = vpop.f32.mrb[0].mxu0
  %v3176 = vpop.f32.mrb[0].mxu0
  %v3177 = vadd.f32 0.0, %v3176
  %v3178 = vpop.f32.mrb[0].mxu0
  %3179 = vmatprep.mubr.bf16.mxu0 0
  %3180 = vmatmul.mubr.bf16.gmra.mrb[0].mxu0 %v3049
  %v3181 = vpop.f32.mrb[0].mxu0
  %v3182 = vadd.f32 0.0, %v3181
  %v3183 = vpop.f32.mrb[0].mxu0
  %v3184 = vpop.f32.mrb[0].mxu0
  %v3185 = vpop.f32.mrb[0].mxu0
  %3186 = vdwg.mxu0
  %v3187 = vadd.f32 %v2590, %v3086
  %v3188 = vadd.f32 %v2591, %v3089
  %v3189 = vadd.f32 %v2592, %v3094
  %v3190 = vadd.f32 %v2593, %v3097
  %v3191 = vadd.f32 %v2594, %v3102
  %v3192 = vadd.f32 %v2595, %v3105
  %v3193 = vadd.f32 %v2596, %v3110
  %v3194 = vadd.f32 %v2597, %v3113
  %v3195 = vadd.f32 %v2598, %v3118
  %v3196 = vadd.f32 %v2599, %v3121
  %v3197 = vadd.f32 %v2600, %v3126
  %v3198 = vadd.f32 %v2601, %v3129
  %v3199 = vadd.f32 %v2602, %v3134
  %v3200 = vadd.f32 %v2603, %v3137
  %v3201 = vadd.f32 %v2604, %v3142
  %v3202 = vadd.f32 %v2605, %v3145
  %v3203 = vadd.f32 %v2606, %v3150
  %v3204 = vadd.f32 %v2607, %v3153
  %v3205 = vadd.f32 %v2608, %v3158
  %v3206 = vadd.f32 %v2609, %v3161
  %v3207 = vadd.f32 %v2610, %v3166
  %v3208 = vadd.f32 %v2611, %v3169
  %v3209 = vadd.f32 %v2612, %v3174
  %v3210 = vadd.f32 %v2613, %v3177
  %v3211 = vadd.f32 %v2614, %v3182
  %v3212 = vld [vmem:[%s0 + $0xc] sm:$0xc]
  %v3213 = vld [vmem:[%s1 + $0x40] sm:$0xf]
  %v3214 = vld [vmem:[%s1 + $0x44] sm:$0xf]
  %v3215 = vld [vmem:[%s1 + $0x48] sm:$0xf]
  %v3216 = vld [vmem:[%s1 + $0x4c] sm:$0xf]
  %v3242 = vunpack.c.l.b16 %v3212
  %v3243 = vunpack.c.l.b16 %v2616
  %v3244 = vunpack.c.l.b16 %v2617
  %v3245 = vunpack.c.l.b16 %v2618
  %v3246 = vunpack.c.l.b16 %v2619
  %v3247 = vunpack.c.l.b16 %v2620
  %v3248 = vunpack.c.l.b16 %v2621
  %v3249 = vunpack.c.l.b16 %v2622
  %v3250 = vunpack.c.l.b16 %v2623
  %v3251 = vunpack.c.l.b16 %v2624
  %v3252 = vunpack.c.l.b16 %v2625
  %v3253 = vunpack.c.l.b16 %v2626
  %v3254 = vunpack.c.l.b16 %v2627
  %v3255 = vunpack.c.l.b16 %v2628
  %v3256 = vunpack.c.l.b16 %v2629
  %v3257 = vunpack.c.l.b16 %v2630
  %v3258 = vunpack.c.l.b16 %v2631
  %v3259 = vunpack.c.l.b16 %v2632
  %v3260 = vunpack.c.l.b16 %v2633
  %v3261 = vunpack.c.l.b16 %v2634
  %v3262 = vunpack.c.l.b16 %v2635
  %v3263 = vunpack.c.l.b16 %v2636
  %v3264 = vunpack.c.l.b16 %v2637
  %v3265 = vunpack.c.l.b16 %v2638
  %v3266 = vunpack.c.l.b16 %v2639
  %v3267 = vpack.c.b16 %v3243, %v3242
  %v3268 = vpack.c.b16 %v3245, %v3244
  %v3269 = vpack.c.b16 %v3247, %v3246
  %v3270 = vpack.c.b16 %v3249, %v3248
  %v3271 = vpack.c.b16 %v3251, %v3250
  %v3272 = vpack.c.b16 %v3253, %v3252
  %v3273 = vpack.c.b16 %v3255, %v3254
  %v3274 = vpack.c.b16 %v3257, %v3256
  %v3275 = vpack.c.b16 %v3259, %v3258
  %v3276 = vpack.c.b16 %v3261, %v3260
  %v3277 = vpack.c.b16 %v3263, %v3262
  %v3278 = vpack.c.b16 %v3265, %v3264
  %v3279 = vpack.c.b16 %v3266, %v3266
  %vm3280 = vcmask 1045504
  %v3281 = vrot.slane %v3267, 2
  %v3282 = vrot.slane %v3268, 2
  %v3283 = vsel %vm3280, %v3281, %v3282
  %v3284 = vrot.slane %v3269, 2
  %v3285 = vsel %vm3280, %v3282, %v3284
  %v3286 = vrot.slane %v3270, 2
  %v3287 = vsel %vm3280, %v3284, %v3286
  %v3288 = vrot.slane %v3271, 2
  %v3289 = vsel %vm3280, %v3286, %v3288
  %v3290 = vrot.slane %v3272, 2
  %v3291 = vsel %vm3280, %v3288, %v3290
  %v3292 = vrot.slane %v3273, 2
  %v3293 = vsel %vm3280, %v3290, %v3292
  %v3294 = vrot.slane %v3274, 2
  %v3295 = vsel %vm3280, %v3292, %v3294
  %v3296 = vrot.slane %v3275, 2
  %v3297 = vsel %vm3280, %v3294, %v3296
  %v3298 = vrot.slane %v3276, 2
  %v3299 = vsel %vm3280, %v3296, %v3298
  %v3300 = vrot.slane %v3277, 2
  %v3301 = vsel %vm3280, %v3298, %v3300
  %v3302 = vrot.slane %v3278, 2
  %v3303 = vsel %vm3280, %v3300, %v3302
  %v3304 = vrot.slane %v3279, 2
  %v3305 = vsel %vm3280, %v3302, %v3304
  %v3310 = vunpack.c.l.b16 %v3213
  %v3311 = vunpack.c.l.b16 %v3214
  %v3312 = vunpack.c.l.b16 %v3215
  %v3313 = vunpack.c.l.b16 %v3216
  %v3314 = vpack.c.b16 %v3311, %v3310
  %v3315 = vpack.c.b16 %v3313, %v3312
  %v3319 = vsel %vm1228, %v3283, 0
  %v3322 = vsel %vm1228, %v3285, 0
  %v3325 = vsel %vm1228, %v3287, 0
  %v3328 = vsel %vm1228, %v3289, 0
  %v3331 = vsel %vm1228, %v3291, 0
  %v3334 = vsel %vm1228, %v3293, 0
  %v3337 = vsel %vm1228, %v3295, 0
  %v3340 = vsel %vm1228, %v3297, 0
  %v3343 = vsel %vm1228, %v3299, 0
  %v3346 = vsel %vm1228, %v3301, 0
  %v3349 = vsel %vm1228, %v3303, 0
  %v3352 = vsel %vm1228, %v3305, 0
  %v3355 = vsel %vm1228, %v3304, 0
  %3357 = vmatprep.subr.bf16.mxu0 0
  %3358 = vmatpush1.bf16.msra.mxu0 %v3314
  %3359 = vmatprep.subr.bf16.mxu0 0
  %3360 = vmatpush1.bf16.msra.mxu0 %v3315
  %3361 = vmatprep.subr.bf16.mxu0 0
  %3362 = vmatpush1.bf16.msra.mxu0 0
  %3363 = vmatprep.subr.bf16.mxu0 0
  %3364 = vmatpush1.bf16.msra.mxu0 0
  %3365 = vmatprep.subr.bf16.mxu0 0
  %3366 = vmatpush1.bf16.msra.mxu0 0
  %3367 = vmatprep.subr.bf16.mxu0 0
  %3368 = vmatpush1.bf16.msra.mxu0 0
  %3369 = vmatprep.subr.bf16.mxu0 0
  %3370 = vmatpush1.bf16.msra.mxu0 0
  %3371 = vmatprep.subr.bf16.mxu0 0
  %3372 = vmatpush1.bf16.msra.mxu0 0
  %3373 = vmatprep.subr.bf16.mxu0 0
  %3374 = vmatpush1.bf16.msra.mxu0 0
  %3375 = vmatprep.subr.bf16.mxu0 0
  %3376 = vmatpush1.bf16.msra.mxu0 0
  %3377 = vmatprep.subr.bf16.mxu0 0
  %3378 = vmatpush1.bf16.msra.mxu0 0
  %3379 = vmatprep.subr.bf16.mxu0 0
  %3380 = vmatpush1.bf16.msra.mxu0 0
  %3381 = vmatprep.subr.bf16.mxu0 0
  %3382 = vmatpush1.bf16.msra.mxu0 0
  %3383 = vmatprep.subr.bf16.mxu0 0
  %3384 = vmatpush1.bf16.msra.mxu0 0
  %3385 = vmatprep.subr.bf16.mxu0 0
  %3386 = vmatpush1.bf16.msra.mxu0 0
  %3387 = vmatprep.subr.bf16.mxu0 0
  %3388 = vmatpush1.bf16.msra.mxu0 0
  %3389 = vmatprep.mubr.bf16.mxu0 0
  %3390 = vmatmul.mubr.bf16.gmra.mrb[0].mxu0 %v3319
  %v3391 = vpop.f32.mrb[0].mxu0
  %v3392 = vadd.f32 0.0, %v3391
  %v3393 = vpop.f32.mrb[0].mxu0
  %v3394 = vpop.f32.mrb[0].mxu0
  %v3395 = vadd.f32 0.0, %v3394
  %v3396 = vpop.f32.mrb[0].mxu0
  %3397 = vmatprep.mubr.bf16.mxu0 0
  %3398 = vmatmul.mubr.bf16.gmra.mrb[0].mxu0 %v3322
  %v3399 = vpop.f32.mrb[0].mxu0
  %v3400 = vadd.f32 0.0, %v3399
  %v3401 = vpop.f32.mrb[0].mxu0
  %v3402 = vpop.f32.mrb[0].mxu0
  %v3403 = vadd.f32 0.0, %v3402
  %v3404 = vpop.f32.mrb[0].mxu0
  %3405 = vmatprep.mubr.bf16.mxu0 0
  %3406 = vmatmul.mubr.bf16.gmra.mrb[0].mxu0 %v3325
  %v3407 = vpop.f32.mrb[0].mxu0
  %v3408 = vadd.f32 0.0, %v3407
  %v3409 = vpop.f32.mrb[0].mxu0
  %v3410 = vpop.f32.mrb[0].mxu0
  %v3411 = vadd.f32 0.0, %v3410
  %v3412 = vpop.f32.mrb[0].mxu0
  %3413 = vmatprep.mubr.bf16.mxu0 0
  %3414 = vmatmul.mubr.bf16.gmra.mrb[0].mxu0 %v3328
  %v3415 = vpop.f32.mrb[0].mxu0
  %v3416 = vadd.f32 0.0, %v3415
  %v3417 = vpop.f32.mrb[0].mxu0
  %v3418 = vpop.f32.mrb[0].mxu0
  %v3419 = vadd.f32 0.0, %v3418
  %v3420 = vpop.f32.mrb[0].mxu0
  %3421 = vmatprep.mubr.bf16.mxu0 0
  %3422 = vmatmul.mubr.bf16.gmra.mrb[0].mxu0 %v3331
  %v3423 = vpop.f32.mrb[0].mxu0
  %v3424 = vadd.f32 0.0, %v3423
  %v3425 = vpop.f32.mrb[0].mxu0
  %v3426 = vpop.f32.mrb[0].mxu0
  %v3427 = vadd.f32 0.0, %v3426
  %v3428 = vpop.f32.mrb[0].mxu0
  %3429 = vmatprep.mubr.bf16.mxu0 0
  %3430 = vmatmul.mubr.bf16.gmra.mrb[0].mxu0 %v3334
  %v3431 = vpop.f32.mrb[0].mxu0
  %v3432 = vadd.f32 0.0, %v3431
  %v3433 = vpop.f32.mrb[0].mxu0
  %v3434 = vpop.f32.mrb[0].mxu0
  %v3435 = vadd.f32 0.0, %v3434
  %v3436 = vpop.f32.mrb[0].mxu0
  %3437 = vmatprep.mubr.bf16.mxu0 0
  %3438 = vmatmul.mubr.bf16.gmra.mrb[0].mxu0 %v3337
  %v3439 = vpop.f32.mrb[0].mxu0
  %v3440 = vadd.f32 0.0, %v3439
  %v3441 = vpop.f32.mrb[0].mxu0
  %v3442 = vpop.f32.mrb[0].mxu0
  %v3443 = vadd.f32 0.0, %v3442
  %v3444 = vpop.f32.mrb[0].mxu0
  %3445 = vmatprep.mubr.bf16.mxu0 0
  %3446 = vmatmul.mubr.bf16.gmra.mrb[0].mxu0 %v3340
  %v3447 = vpop.f32.mrb[0].mxu0
  %v3448 = vadd.f32 0.0, %v3447
  %v3449 = vpop.f32.mrb[0].mxu0
  %v3450 = vpop.f32.mrb[0].mxu0
  %v3451 = vadd.f32 0.0, %v3450
  %v3452 = vpop.f32.mrb[0].mxu0
  %3453 = vmatprep.mubr.bf16.mxu0 0
  %3454 = vmatmul.mubr.bf16.gmra.mrb[0].mxu0 %v3343
  %v3455 = vpop.f32.mrb[0].mxu0
  %v3456 = vadd.f32 0.0, %v3455
  %v3457 = vpop.f32.mrb[0].mxu0
  %v3458 = vpop.f32.mrb[0].mxu0
  %v3459 = vadd.f32 0.0, %v3458
  %v3460 = vpop.f32.mrb[0].mxu0
  %3461 = vmatprep.mubr.bf16.mxu0 0
  %3462 = vmatmul.mubr.bf16.gmra.mrb[0].mxu0 %v3346
  %v3463 = vpop.f32.mrb[0].mxu0
  %v3464 = vadd.f32 0.0, %v3463
  %v3465 = vpop.f32.mrb[0].mxu0
  %v3466 = vpop.f32.mrb[0].mxu0
  %v3467 = vadd.f32 0.0, %v3466
  %v3468 = vpop.f32.mrb[0].mxu0
  %3469 = vmatprep.mubr.bf16.mxu0 0
  %3470 = vmatmul.mubr.bf16.gmra.mrb[0].mxu0 %v3349
  %v3471 = vpop.f32.mrb[0].mxu0
  %v3472 = vadd.f32 0.0, %v3471
  %v3473 = vpop.f32.mrb[0].mxu0
  %v3474 = vpop.f32.mrb[0].mxu0
  %v3475 = vadd.f32 0.0, %v3474
  %v3476 = vpop.f32.mrb[0].mxu0
  %3477 = vmatprep.mubr.bf16.mxu0 0
  %3478 = vmatmul.mubr.bf16.gmra.mrb[0].mxu0 %v3352
  %v3479 = vpop.f32.mrb[0].mxu0
  %v3480 = vadd.f32 0.0, %v3479
  %v3481 = vpop.f32.mrb[0].mxu0
  %v3482 = vpop.f32.mrb[0].mxu0
  %v3483 = vadd.f32 0.0, %v3482
  %v3484 = vpop.f32.mrb[0].mxu0
  %3485 = vmatprep.mubr.bf16.mxu0 0
  %3486 = vmatmul.mubr.bf16.gmra.mrb[0].mxu0 %v3355
  %v3487 = vpop.f32.mrb[0].mxu0
  %v3488 = vadd.f32 0.0, %v3487
  %v3489 = vpop.f32.mrb[0].mxu0
  %v3490 = vpop.f32.mrb[0].mxu0
  %v3491 = vpop.f32.mrb[0].mxu0
  %3492 = vdwg.mxu0
  %v3493 = vadd.f32 %v3187, %v3392
  %v3494 = vadd.f32 %v3188, %v3395
  %v3495 = vadd.f32 %v3189, %v3400
  %v3496 = vadd.f32 %v3190, %v3403
  %v3497 = vadd.f32 %v3191, %v3408
  %v3498 = vadd.f32 %v3192, %v3411
  %v3499 = vadd.f32 %v3193, %v3416
  %v3500 = vadd.f32 %v3194, %v3419
  %v3501 = vadd.f32 %v3195, %v3424
  %v3502 = vadd.f32 %v3196, %v3427
  %v3503 = vadd.f32 %v3197, %v3432
  %v3504 = vadd.f32 %v3198, %v3435
  %v3505 = vadd.f32 %v3199, %v3440
  %v3506 = vadd.f32 %v3200, %v3443
  %v3507 = vadd.f32 %v3201, %v3448
  %v3508 = vadd.f32 %v3202, %v3451
  %v3509 = vadd.f32 %v3203, %v3456
  %v3510 = vadd.f32 %v3204, %v3459
  %v3511 = vadd.f32 %v3205, %v3464
  %v3512 = vadd.f32 %v3206, %v3467
  %v3513 = vadd.f32 %v3207, %v3472
  %v3514 = vadd.f32 %v3208, %v3475
  %v3515 = vadd.f32 %v3209, %v3480
  %v3516 = vadd.f32 %v3210, %v3483
  %v3517 = vadd.f32 %v3211, %v3488
  %v3518 = vld [vmem:[%s0 + $0xc] sm:$0xc]
  %v3519 = vld [vmem:[%s0 + $0x10] sm:$0xf]
  %v3520 = vld [vmem:[%s0 + $0x14] sm:$0xf]
  %v3521 = vld [vmem:[%s0 + $0x18] sm:$0xf]
  %v3522 = vld [vmem:[%s0 + $0x1c] sm:$0xf]
  %v3523 = vld [vmem:[%s0 + $0x20] sm:$0xf]
  %v3524 = vld [vmem:[%s0 + $0x24] sm:$0xf]
  %v3525 = vld [vmem:[%s0 + $0x28] sm:$0xf]
  %v3526 = vld [vmem:[%s0 + $0x2c] sm:$0xf]
  %v3527 = vld [vmem:[%s0 + $0x30] sm:$0xf]
  %v3528 = vld [vmem:[%s0 + $0x34] sm:$0xf]
  %v3529 = vld [vmem:[%s0 + $0x38] sm:$0xf]
  %v3530 = vld [vmem:[%s0 + $0x3c] sm:$0xf]
  %v3531 = vld [vmem:[%s0 + $0x40] sm:$0xf]
  %v3532 = vld [vmem:[%s0 + $0x44] sm:$0xf]
  %v3533 = vld [vmem:[%s0 + $0x48] sm:$0xf]
  %v3534 = vld [vmem:[%s0 + $0x4c] sm:$0xf]
  %v3535 = vld [vmem:[%s0 + $0x50] sm:$0xf]
  %v3536 = vld [vmem:[%s0 + $0x54] sm:$0xf]
  %v3537 = vld [vmem:[%s0 + $0x58] sm:$0xf]
  %v3538 = vld [vmem:[%s0 + $0x5c] sm:$0xf]
  %v3539 = vld [vmem:[%s0 + $0x60] sm:$0xf]
  %v3540 = vld [vmem:[%s0 + $0x64] sm:$0xf]
  %v3541 = vld [vmem:[%s0 + $0x68] sm:$0xf]
  %v3542 = vld [vmem:[%s0 + $0x6c] sm:$0xf]
  %v3543 = vld [vmem:[%s0 + $0x70] sm:$0x1]
  %v3544 = vrot.slane %v1920, 5
  %v3545 = vrot.slane %v1917, 6
  %v3546 = vor.u32 %v3544, %v3545
  %v3547 = vrot.slane %v3546, 4
  %v3548 = vrot.slane %v1930, 5
  %v3549 = vrot.slane %v1926, 6
  %v3550 = vor.u32 %v3548, %v3549
  %v3551 = vsel %vm728, %v3547, %v3550
  %v3552 = vrot.slane %v3550, 4
  %v3553 = vrot.slane %v1940, 5
  %v3554 = vrot.slane %v1936, 6
  %v3555 = vor.u32 %v3553, %v3554
  %v3556 = vsel %vm728, %v3552, %v3555
  %v3557 = vrot.slane %v3555, 4
  %v3558 = vrot.slane %v1950, 5
  %v3559 = vrot.slane %v1946, 6
  %v3560 = vor.u32 %v3558, %v3559
  %v3561 = vsel %vm728, %v3557, %v3560
  %v3562 = vrot.slane %v3560, 4
  %v3563 = vrot.slane %v1960, 5
  %v3564 = vrot.slane %v1956, 6
  %v3565 = vor.u32 %v3563, %v3564
  %v3566 = vsel %vm728, %v3562, %v3565
  %v3567 = vrot.slane %v3565, 4
  %v3568 = vrot.slane %v1970, 5
  %v3569 = vrot.slane %v1966, 6
  %v3570 = vor.u32 %v3568, %v3569
  %v3571 = vsel %vm728, %v3567, %v3570
  %v3572 = vrot.slane %v3570, 4
  %v3573 = vrot.slane %v1980, 5
  %v3574 = vrot.slane %v1976, 6
  %v3575 = vor.u32 %v3573, %v3574
  %v3576 = vsel %vm728, %v3572, %v3575
  %v3577 = vrot.slane %v3575, 4
  %v3578 = vrot.slane %v1990, 5
  %v3579 = vrot.slane %v1986, 6
  %v3580 = vor.u32 %v3578, %v3579
  %v3581 = vsel %vm728, %v3577, %v3580
  %v3582 = vrot.slane %v3580, 4
  %v3583 = vrot.slane %v2000, 5
  %v3584 = vrot.slane %v1996, 6
  %v3585 = vor.u32 %v3583, %v3584
  %v3586 = vsel %vm728, %v3582, %v3585
  %v3587 = vrot.slane %v3585, 4
  %v3588 = vrot.slane %v2010, 5
  %v3589 = vrot.slane %v2006, 6
  %v3590 = vor.u32 %v3588, %v3589
  %v3591 = vsel %vm728, %v3587, %v3590
  %v3592 = vrot.slane %v3590, 4
  %v3593 = vrot.slane %v2020, 5
  %v3594 = vrot.slane %v2016, 6
  %v3595 = vor.u32 %v3593, %v3594
  %v3596 = vsel %vm728, %v3592, %v3595
  %v3597 = vrot.slane %v3595, 4
  %v3598 = vrot.slane %v2030, 5
  %v3599 = vrot.slane %v2026, 6
  %v3600 = vor.u32 %v3598, %v3599
  %v3601 = vsel %vm728, %v3597, %v3600
  %v3602 = vrot.slane %v3600, 4
  %v3603 = vrot.slane %v2040, 5
  %v3604 = vrot.slane %v2036, 6
  %v3605 = vor.u32 %v3603, %v3604
  %v3606 = vsel %vm728, %v3602, %v3605
  %v3607 = vrot.slane %v3605, 4
  %v3608 = vrot.slane %v2050, 5
  %v3609 = vrot.slane %v2046, 6
  %v3610 = vor.u32 %v3608, %v3609
  %v3611 = vsel %vm728, %v3607, %v3610
  %v3612 = vrot.slane %v3610, 4
  %v3613 = vrot.slane %v2060, 5
  %v3614 = vrot.slane %v2056, 6
  %v3615 = vor.u32 %v3613, %v3614
  %v3616 = vsel %vm728, %v3612, %v3615
  %v3617 = vrot.slane %v3615, 4
  %v3618 = vrot.slane %v2070, 5
  %v3619 = vrot.slane %v2066, 6
  %v3620 = vor.u32 %v3618, %v3619
  %v3621 = vsel %vm728, %v3617, %v3620
  %v3622 = vrot.slane %v3620, 4
  %v3623 = vrot.slane %v2080, 5
  %v3624 = vrot.slane %v2076, 6
  %v3625 = vor.u32 %v3623, %v3624
  %v3626 = vsel %vm728, %v3622, %v3625
  %v3627 = vrot.slane %v3625, 4
  %v3628 = vrot.slane %v2090, 5
  %v3629 = vrot.slane %v2086, 6
  %v3630 = vor.u32 %v3628, %v3629
  %v3631 = vsel %vm728, %v3627, %v3630
  %v3632 = vrot.slane %v3630, 4
  %v3633 = vrot.slane %v2100, 5
  %v3634 = vrot.slane %v2096, 6
  %v3635 = vor.u32 %v3633, %v3634
  %v3636 = vsel %vm728, %v3632, %v3635
  %v3637 = vrot.slane %v3635, 4
  %v3638 = vrot.slane %v2110, 5
  %v3639 = vrot.slane %v2106, 6
  %v3640 = vor.u32 %v3638, %v3639
  %v3641 = vsel %vm728, %v3637, %v3640
  %v3642 = vrot.slane %v3640, 4
  %v3643 = vrot.slane %v2120, 5
  %v3644 = vrot.slane %v2116, 6
  %v3645 = vor.u32 %v3643, %v3644
  %v3646 = vsel %vm728, %v3642, %v3645
  %v3647 = vrot.slane %v3645, 4
  %v3648 = vrot.slane %v2130, 5
  %v3649 = vrot.slane %v2126, 6
  %v3650 = vor.u32 %v3648, %v3649
  %v3651 = vsel %vm728, %v3647, %v3650
  %v3652 = vrot.slane %v3650, 4
  %v3653 = vrot.slane %v2140, 5
  %v3654 = vrot.slane %v2136, 6
  %v3655 = vor.u32 %v3653, %v3654
  %v3656 = vsel %vm728, %v3652, %v3655
  %v3657 = vrot.slane %v3655, 4
  %v3658 = vrot.slane %v2150, 5
  %v3659 = vrot.slane %v2146, 6
  %v3660 = vor.u32 %v3658, %v3659
  %v3661 = vsel %vm728, %v3657, %v3660
  %v3662 = vrot.slane %v3660, 4
  %v3663 = vrot.slane %v2160, 5
  %v3664 = vrot.slane %v2156, 6
  %v3665 = vor.u32 %v3663, %v3664
  %v3666 = vsel %vm728, %v3662, %v3665
  %v3667 = vrot.slane %v3663, 4
  %vm3668 = vcmp.ne.s16.totalorder %v3546, 0
  %vm3669 = vcmp.ne.s16.totalorder %v3551, 0
  %vm3670 = vcmp.ne.s16.totalorder %v3556, 0
  %vm3671 = vcmp.ne.s16.totalorder %v3561, 0
  %vm3672 = vcmp.ne.s16.totalorder %v3566, 0
  %vm3673 = vcmp.ne.s16.totalorder %v3571, 0
  %vm3674 = vcmp.ne.s16.totalorder %v3576, 0
  %vm3675 = vcmp.ne.s16.totalorder %v3581, 0
  %vm3676 = vcmp.ne.s16.totalorder %v3586, 0
  %vm3677 = vcmp.ne.s16.totalorder %v3591, 0
  %vm3678 = vcmp.ne.s16.totalorder %v3596, 0
  %vm3679 = vcmp.ne.s16.totalorder %v3601, 0
  %vm3680 = vcmp.ne.s16.totalorder %v3606, 0
  %vm3681 = vcmp.ne.s16.totalorder %v3611, 0
  %vm3682 = vcmp.ne.s16.totalorder %v3616, 0
  %vm3683 = vcmp.ne.s16.totalorder %v3621, 0
  %vm3684 = vcmp.ne.s16.totalorder %v3626, 0
  %vm3685 = vcmp.ne.s16.totalorder %v3631, 0
  %vm3686 = vcmp.ne.s16.totalorder %v3636, 0
  %vm3687 = vcmp.ne.s16.totalorder %v3641, 0
  %vm3688 = vcmp.ne.s16.totalorder %v3646, 0
  %vm3689 = vcmp.ne.s16.totalorder %v3651, 0
  %vm3690 = vcmp.ne.s16.totalorder %v3656, 0
  %vm3691 = vcmp.ne.s16.totalorder %v3661, 0
  %vm3692 = vcmp.ne.s16.totalorder %v3666, 0
  %vm3693 = vcmp.ne.s16.totalorder %v3667, 0
  %v3694 = vsel %vm3668, %v3518, 0
  %v3695 = vsel %vm3669, %v3519, 0
  %v3696 = vsel %vm3670, %v3520, 0
  %v3697 = vsel %vm3671, %v3521, 0
  %v3698 = vsel %vm3672, %v3522, 0
  %v3699 = vsel %vm3673, %v3523, 0
  %v3700 = vsel %vm3674, %v3524, 0
  %v3701 = vsel %vm3675, %v3525, 0
  %v3702 = vsel %vm3676, %v3526, 0
  %v3703 = vsel %vm3677, %v3527, 0
  %v3704 = vsel %vm3678, %v3528, 0
  %v3705 = vsel %vm3679, %v3529, 0
  %v3706 = vsel %vm3680, %v3530, 0
  %v3707 = vsel %vm3681, %v3531, 0
  %v3708 = vsel %vm3682, %v3532, 0
  %v3709 = vsel %vm3683, %v3533, 0
  %v3710 = vsel %vm3684, %v3534, 0
  %v3711 = vsel %vm3685, %v3535, 0
  %v3712 = vsel %vm3686, %v3536, 0
  %v3713 = vsel %vm3687, %v3537, 0
  %v3714 = vsel %vm3688, %v3538, 0
  %v3715 = vsel %vm3689, %v3539, 0
  %v3716 = vsel %vm3690, %v3540, 0
  %v3717 = vsel %vm3691, %v3541, 0
  %v3718 = vsel %vm3692, %v3542, 0
  %v3719 = vsel %vm3693, %v3543, 0
  %v3720 = vld [vmem:[%s1 + $0x50] sm:$0xf]
  %v3721 = vld [vmem:[%s1 + $0x54] sm:$0xf]
  %v3722 = vld [vmem:[%s1 + $0x58] sm:$0xf]
  %v3723 = vld [vmem:[%s1 + $0x5c] sm:$0xf]
  %v3750 = vunpack.c.l.b16 %v3694
  %v3751 = vunpack.c.l.b16 %v3695
  %v3752 = vunpack.c.l.b16 %v3696
  %v3753 = vunpack.c.l.b16 %v3697
  %v3754 = vunpack.c.l.b16 %v3698
  %v3755 = vunpack.c.l.b16 %v3699
  %v3756 = vunpack.c.l.b16 %v3700
  %v3757 = vunpack.c.l.b16 %v3701
  %v3758 = vunpack.c.l.b16 %v3702
  %v3759 = vunpack.c.l.b16 %v3703
  %v3760 = vunpack.c.l.b16 %v3704
  %v3761 = vunpack.c.l.b16 %v3705
  %v3762 = vunpack.c.l.b16 %v3706
  %v3763 = vunpack.c.l.b16 %v3707
  %v3764 = vunpack.c.l.b16 %v3708
  %v3765 = vunpack.c.l.b16 %v3709
  %v3766 = vunpack.c.l.b16 %v3710
  %v3767 = vunpack.c.l.b16 %v3711
  %v3768 = vunpack.c.l.b16 %v3712
  %v3769 = vunpack.c.l.b16 %v3713
  %v3770 = vunpack.c.l.b16 %v3714
  %v3771 = vunpack.c.l.b16 %v3715
  %v3772 = vunpack.c.l.b16 %v3716
  %v3773 = vunpack.c.l.b16 %v3717
  %v3774 = vunpack.c.l.b16 %v3718
  %v3775 = vunpack.c.l.b16 %v3719
  %v3776 = vpack.c.b16 %v3751, %v3750
  %v3777 = vpack.c.b16 %v3753, %v3752
  %v3778 = vpack.c.b16 %v3755, %v3754
  %v3779 = vpack.c.b16 %v3757, %v3756
  %v3780 = vpack.c.b16 %v3759, %v3758
  %v3781 = vpack.c.b16 %v3761, %v3760
  %v3782 = vpack.c.b16 %v3763, %v3762
  %v3783 = vpack.c.b16 %v3765, %v3764
  %v3784 = vpack.c.b16 %v3767, %v3766
  %v3785 = vpack.c.b16 %v3769, %v3768
  %v3786 = vpack.c.b16 %v3771, %v3770
  %v3787 = vpack.c.b16 %v3773, %v3772
  %v3788 = vpack.c.b16 %v3775, %v3774
  %v3790 = vshrl.u32 %v3776, 16
  %v3792 = vrot.slane %v3790, 2
  %v3793 = vshll.u32 %v3776, 16
  %v3795 = vrot.slane %v3793, 3
  %v3796 = vor.u32 %v3792, %v3795
  %v3798 = vshrl.u32 %v3777, 16
  %v3800 = vrot.slane %v3798, 2
  %v3801 = vshll.u32 %v3777, 16
  %v3803 = vrot.slane %v3801, 3
  %v3804 = vor.u32 %v3800, %v3803
  %v3805 = vsel %vm1099, %v3796, %v3804
  %v3807 = vshrl.u32 %v3778, 16
  %v3809 = vrot.slane %v3807, 2
  %v3810 = vshll.u32 %v3778, 16
  %v3812 = vrot.slane %v3810, 3
  %v3813 = vor.u32 %v3809, %v3812
  %v3814 = vsel %vm1099, %v3804, %v3813
  %v3816 = vshrl.u32 %v3779, 16
  %v3818 = vrot.slane %v3816, 2
  %v3819 = vshll.u32 %v3779, 16
  %v3821 = vrot.slane %v3819, 3
  %v3822 = vor.u32 %v3818, %v3821
  %v3823 = vsel %vm1099, %v3813, %v3822
  %v3825 = vshrl.u32 %v3780, 16
  %v3827 = vrot.slane %v3825, 2
  %v3828 = vshll.u32 %v3780, 16
  %v3830 = vrot.slane %v3828, 3
  %v3831 = vor.u32 %v3827, %v3830
  %v3832 = vsel %vm1099, %v3822, %v3831
  %v3834 = vshrl.u32 %v3781, 16
  %v3836 = vrot.slane %v3834, 2
  %v3837 = vshll.u32 %v3781, 16
  %v3839 = vrot.slane %v3837, 3
  %v3840 = vor.u32 %v3836, %v3839
  %v3841 = vsel %vm1099, %v3831, %v3840
  %v3843 = vshrl.u32 %v3782, 16
  %v3845 = vrot.slane %v3843, 2
  %v3846 = vshll.u32 %v3782, 16
  %v3848 = vrot.slane %v3846, 3
  %v3849 = vor.u32 %v3845, %v3848
  %v3850 = vsel %vm1099, %v3840, %v3849
  %v3852 = vshrl.u32 %v3783, 16
  %v3854 = vrot.slane %v3852, 2
  %v3855 = vshll.u32 %v3783, 16
  %v3857 = vrot.slane %v3855, 3
  %v3858 = vor.u32 %v3854, %v3857
  %v3859 = vsel %vm1099, %v3849, %v3858
  %v3861 = vshrl.u32 %v3784, 16
  %v3863 = vrot.slane %v3861, 2
  %v3864 = vshll.u32 %v3784, 16
  %v3866 = vrot.slane %v3864, 3
  %v3867 = vor.u32 %v3863, %v3866
  %v3868 = vsel %vm1099, %v3858, %v3867
  %v3870 = vshrl.u32 %v3785, 16
  %v3872 = vrot.slane %v3870, 2
  %v3873 = vshll.u32 %v3785, 16
  %v3875 = vrot.slane %v3873, 3
  %v3876 = vor.u32 %v3872, %v3875
  %v3877 = vsel %vm1099, %v3867, %v3876
  %v3879 = vshrl.u32 %v3786, 16
  %v3881 = vrot.slane %v3879, 2
  %v3882 = vshll.u32 %v3786, 16
  %v3884 = vrot.slane %v3882, 3
  %v3885 = vor.u32 %v3881, %v3884
  %v3886 = vsel %vm1099, %v3876, %v3885
  %v3888 = vshrl.u32 %v3787, 16
  %v3890 = vrot.slane %v3888, 2
  %v3891 = vshll.u32 %v3787, 16
  %v3893 = vrot.slane %v3891, 3
  %v3894 = vor.u32 %v3890, %v3893
  %v3895 = vsel %vm1099, %v3885, %v3894
  %v3897 = vshrl.u32 %v3788, 16
  %v3899 = vrot.slane %v3897, 2
  %v3900 = vshll.u32 %v3788, 16
  %v3902 = vrot.slane %v3900, 3
  %v3903 = vor.u32 %v3899, %v3902
  %v3904 = vsel %vm1099, %v3894, %v3903
  %v3909 = vunpack.c.l.b16 %v3720
  %v3910 = vunpack.c.l.b16 %v3721
  %v3911 = vunpack.c.l.b16 %v3722
  %v3912 = vunpack.c.l.b16 %v3723
  %v3913 = vpack.c.b16 %v3910, %v3909
  %v3914 = vpack.c.b16 %v3912, %v3911
  %v3918 = vsel %vm1228, %v3805, 0
  %v3921 = vsel %vm1228, %v3814, 0
  %v3924 = vsel %vm1228, %v3823, 0
  %v3927 = vsel %vm1228, %v3832, 0
  %v3930 = vsel %vm1228, %v3841, 0
  %v3933 = vsel %vm1228, %v3850, 0
  %v3936 = vsel %vm1228, %v3859, 0
  %v3939 = vsel %vm1228, %v3868, 0
  %v3942 = vsel %vm1228, %v3877, 0
  %v3945 = vsel %vm1228, %v3886, 0
  %v3948 = vsel %vm1228, %v3895, 0
  %v3951 = vsel %vm1228, %v3904, 0
  %v3954 = vsel %vm1228, %v3903, 0
  %3956 = vmatprep.subr.bf16.mxu0 0
  %3957 = vmatpush1.bf16.msra.mxu0 %v3913
  %3958 = vmatprep.subr.bf16.mxu0 0
  %3959 = vmatpush1.bf16.msra.mxu0 %v3914
  %3960 = vmatprep.subr.bf16.mxu0 0
  %3961 = vmatpush1.bf16.msra.mxu0 0
  %3962 = vmatprep.subr.bf16.mxu0 0
  %3963 = vmatpush1.bf16.msra.mxu0 0
  %3964 = vmatprep.subr.bf16.mxu0 0
  %3965 = vmatpush1.bf16.msra.mxu0 0
  %3966 = vmatprep.subr.bf16.mxu0 0
  %3967 = vmatpush1.bf16.msra.mxu0 0
  %3968 = vmatprep.subr.bf16.mxu0 0
  %3969 = vmatpush1.bf16.msra.mxu0 0
  %3970 = vmatprep.subr.bf16.mxu0 0
  %3971 = vmatpush1.bf16.msra.mxu0 0
  %3972 = vmatprep.subr.bf16.mxu0 0
  %3973 = vmatpush1.bf16.msra.mxu0 0
  %3974 = vmatprep.subr.bf16.mxu0 0
  %3975 = vmatpush1.bf16.msra.mxu0 0
  %3976 = vmatprep.subr.bf16.mxu0 0
  %3977 = vmatpush1.bf16.msra.mxu0 0
  %3978 = vmatprep.subr.bf16.mxu0 0
  %3979 = vmatpush1.bf16.msra.mxu0 0
  %3980 = vmatprep.subr.bf16.mxu0 0
  %3981 = vmatpush1.bf16.msra.mxu0 0
  %3982 = vmatprep.subr.bf16.mxu0 0
  %3983 = vmatpush1.bf16.msra.mxu0 0
  %3984 = vmatprep.subr.bf16.mxu0 0
  %3985 = vmatpush1.bf16.msra.mxu0 0
  %3986 = vmatprep.subr.bf16.mxu0 0
  %3987 = vmatpush1.bf16.msra.mxu0 0
  %3988 = vmatprep.mubr.bf16.mxu0 0
  %3989 = vmatmul.mubr.bf16.gmra.mrb[0].mxu0 %v3918
  %v3990 = vpop.f32.mrb[0].mxu0
  %v3991 = vadd.f32 0.0, %v3990
  %v3992 = vpop.f32.mrb[0].mxu0
  %v3993 = vpop.f32.mrb[0].mxu0
  %v3994 = vadd.f32 0.0, %v3993
  %v3995 = vpop.f32.mrb[0].mxu0
  %3996 = vmatprep.mubr.bf16.mxu0 0
  %3997 = vmatmul.mubr.bf16.gmra.mrb[0].mxu0 %v3921
  %v3998 = vpop.f32.mrb[0].mxu0
  %v3999 = vadd.f32 0.0, %v3998
  %v4000 = vpop.f32.mrb[0].mxu0
  %v4001 = vpop.f32.mrb[0].mxu0
  %v4002 = vadd.f32 0.0, %v4001
  %v4003 = vpop.f32.mrb[0].mxu0
  %4004 = vmatprep.mubr.bf16.mxu0 0
  %4005 = vmatmul.mubr.bf16.gmra.mrb[0].mxu0 %v3924
  %v4006 = vpop.f32.mrb[0].mxu0
  %v4007 = vadd.f32 0.0, %v4006
  %v4008 = vpop.f32.mrb[0].mxu0
  %v4009 = vpop.f32.mrb[0].mxu0
  %v4010 = vadd.f32 0.0, %v4009
  %v4011 = vpop.f32.mrb[0].mxu0
  %4012 = vmatprep.mubr.bf16.mxu0 0
  %4013 = vmatmul.mubr.bf16.gmra.mrb[0].mxu0 %v3927
  %v4014 = vpop.f32.mrb[0].mxu0
  %v4015 = vadd.f32 0.0, %v4014
  %v4016 = vpop.f32.mrb[0].mxu0
  %v4017 = vpop.f32.mrb[0].mxu0
  %v4018 = vadd.f32 0.0, %v4017
  %v4019 = vpop.f32.mrb[0].mxu0
  %4020 = vmatprep.mubr.bf16.mxu0 0
  %4021 = vmatmul.mubr.bf16.gmra.mrb[0].mxu0 %v3930
  %v4022 = vpop.f32.mrb[0].mxu0
  %v4023 = vadd.f32 0.0, %v4022
  %v4024 = vpop.f32.mrb[0].mxu0
  %v4025 = vpop.f32.mrb[0].mxu0
  %v4026 = vadd.f32 0.0, %v4025
  %v4027 = vpop.f32.mrb[0].mxu0
  %4028 = vmatprep.mubr.bf16.mxu0 0
  %4029 = vmatmul.mubr.bf16.gmra.mrb[0].mxu0 %v3933
  %v4030 = vpop.f32.mrb[0].mxu0
  %v4031 = vadd.f32 0.0, %v4030
  %v4032 = vpop.f32.mrb[0].mxu0
  %v4033 = vpop.f32.mrb[0].mxu0
  %v4034 = vadd.f32 0.0, %v4033
  %v4035 = vpop.f32.mrb[0].mxu0
  %4036 = vmatprep.mubr.bf16.mxu0 0
  %4037 = vmatmul.mubr.bf16.gmra.mrb[0].mxu0 %v3936
  %v4038 = vpop.f32.mrb[0].mxu0
  %v4039 = vadd.f32 0.0, %v4038
  %v4040 = vpop.f32.mrb[0].mxu0
  %v4041 = vpop.f32.mrb[0].mxu0
  %v4042 = vadd.f32 0.0, %v4041
  %v4043 = vpop.f32.mrb[0].mxu0
  %4044 = vmatprep.mubr.bf16.mxu0 0
  %4045 = vmatmul.mubr.bf16.gmra.mrb[0].mxu0 %v3939
  %v4046 = vpop.f32.mrb[0].mxu0
  %v4047 = vadd.f32 0.0, %v4046
  %v4048 = vpop.f32.mrb[0].mxu0
  %v4049 = vpop.f32.mrb[0].mxu0
  %v4050 = vadd.f32 0.0, %v4049
  %v4051 = vpop.f32.mrb[0].mxu0
  %4052 = vmatprep.mubr.bf16.mxu0 0
  %4053 = vmatmul.mubr.bf16.gmra.mrb[0].mxu0 %v3942
  %v4054 = vpop.f32.mrb[0].mxu0
  %v4055 = vadd.f32 0.0, %v4054
  %v4056 = vpop.f32.mrb[0].mxu0
  %v4057 = vpop.f32.mrb[0].mxu0
  %v4058 = vadd.f32 0.0, %v4057
  %v4059 = vpop.f32.mrb[0].mxu0
  %4060 = vmatprep.mubr.bf16.mxu0 0
  %4061 = vmatmul.mubr.bf16.gmra.mrb[0].mxu0 %v3945
  %v4062 = vpop.f32.mrb[0].mxu0
  %v4063 = vadd.f32 0.0, %v4062
  %v4064 = vpop.f32.mrb[0].mxu0
  %v4065 = vpop.f32.mrb[0].mxu0
  %v4066 = vadd.f32 0.0, %v4065
  %v4067 = vpop.f32.mrb[0].mxu0
  %4068 = vmatprep.mubr.bf16.mxu0 0
  %4069 = vmatmul.mubr.bf16.gmra.mrb[0].mxu0 %v3948
  %v4070 = vpop.f32.mrb[0].mxu0
  %v4071 = vadd.f32 0.0, %v4070
  %v4072 = vpop.f32.mrb[0].mxu0
  %v4073 = vpop.f32.mrb[0].mxu0
  %v4074 = vadd.f32 0.0, %v4073
  %v4075 = vpop.f32.mrb[0].mxu0
  %4076 = vmatprep.mubr.bf16.mxu0 0
  %4077 = vmatmul.mubr.bf16.gmra.mrb[0].mxu0 %v3951
  %v4078 = vpop.f32.mrb[0].mxu0
  %v4079 = vadd.f32 0.0, %v4078
  %v4080 = vpop.f32.mrb[0].mxu0
  %v4081 = vpop.f32.mrb[0].mxu0
  %v4082 = vadd.f32 0.0, %v4081
  %v4083 = vpop.f32.mrb[0].mxu0
  %4084 = vmatprep.mubr.bf16.mxu0 0
  %4085 = vmatmul.mubr.bf16.gmra.mrb[0].mxu0 %v3954
  %v4086 = vpop.f32.mrb[0].mxu0
  %v4087 = vadd.f32 0.0, %v4086
  %v4088 = vpop.f32.mrb[0].mxu0
  %v4089 = vpop.f32.mrb[0].mxu0
  %v4090 = vpop.f32.mrb[0].mxu0
  %4091 = vdwg.mxu0
  %v4092 = vadd.f32 %v3493, %v3991
  %v4093 = vadd.f32 %v3494, %v3994
  %v4094 = vadd.f32 %v3495, %v3999
  %v4095 = vadd.f32 %v3496, %v4002
  %v4096 = vadd.f32 %v3497, %v4007
  %v4097 = vadd.f32 %v3498, %v4010
  %v4098 = vadd.f32 %v3499, %v4015
  %v4099 = vadd.f32 %v3500, %v4018
  %v4100 = vadd.f32 %v3501, %v4023
  %v4101 = vadd.f32 %v3502, %v4026
  %v4102 = vadd.f32 %v3503, %v4031
  %v4103 = vadd.f32 %v3504, %v4034
  %v4104 = vadd.f32 %v3505, %v4039
  %v4105 = vadd.f32 %v3506, %v4042
  %v4106 = vadd.f32 %v3507, %v4047
  %v4107 = vadd.f32 %v3508, %v4050
  %v4108 = vadd.f32 %v3509, %v4055
  %v4109 = vadd.f32 %v3510, %v4058
  %v4110 = vadd.f32 %v3511, %v4063
  %v4111 = vadd.f32 %v3512, %v4066
  %v4112 = vadd.f32 %v3513, %v4071
  %v4113 = vadd.f32 %v3514, %v4074
  %v4114 = vadd.f32 %v3515, %v4079
  %v4115 = vadd.f32 %v3516, %v4082
  %v4116 = vadd.f32 %v3517, %v4087
  %v4117 = vld [vmem:[%s0 + $0x14] sm:$0xf]
  %v4118 = vld [vmem:[%s0 + $0x18] sm:$0xf]
  %v4119 = vld [vmem:[%s0 + $0x1c] sm:$0xf]
  %v4120 = vld [vmem:[%s0 + $0x20] sm:$0xf]
  %v4121 = vld [vmem:[%s0 + $0x24] sm:$0xf]
  %v4122 = vld [vmem:[%s0 + $0x28] sm:$0xf]
  %v4123 = vld [vmem:[%s0 + $0x2c] sm:$0xf]
  %v4124 = vld [vmem:[%s0 + $0x30] sm:$0xf]
  %v4125 = vld [vmem:[%s0 + $0x34] sm:$0xf]
  %v4126 = vld [vmem:[%s0 + $0x38] sm:$0xf]
  %v4127 = vld [vmem:[%s0 + $0x3c] sm:$0xf]
  %v4128 = vld [vmem:[%s0 + $0x40] sm:$0xf]
  %v4129 = vld [vmem:[%s0 + $0x44] sm:$0xf]
  %v4130 = vld [vmem:[%s0 + $0x48] sm:$0xf]
  %v4131 = vld [vmem:[%s0 + $0x4c] sm:$0xf]
  %v4132 = vld [vmem:[%s0 + $0x50] sm:$0xf]
  %v4133 = vld [vmem:[%s0 + $0x54] sm:$0xf]
  %v4134 = vld [vmem:[%s0 + $0x58] sm:$0xf]
  %v4135 = vld [vmem:[%s0 + $0x5c] sm:$0xf]
  %v4136 = vld [vmem:[%s0 + $0x60] sm:$0xf]
  %v4137 = vld [vmem:[%s0 + $0x64] sm:$0xf]
  %v4138 = vld [vmem:[%s0 + $0x68] sm:$0xf]
  %v4139 = vld [vmem:[%s0 + $0x6c] sm:$0xf]
  %v4140 = vld [vmem:[%s0 + $0x70] sm:$0xf]
  %v4141 = vld [vmem:[%s0 + $0x74] sm:$0x7]
  %vm4142 = vsmask.f32 256
  %vm4143 = vsmask.f32 4368
  %vm4144 = vmor %vm4142, %vm4143
  %v4145 = vrot.slane %v730, 7
  %v4146 = vor.u32 %v4145, %v733
  %v4147 = vrot.slane %v4145, 4
  %v4148 = vrot.slane %v739, 7
  %v4149 = vor.u32 %v4148, %v742
  %v4150 = vsel %vm4144, %v4147, %v4149
  %v4151 = vrot.slane %v4148, 4
  %v4152 = vrot.slane %v749, 7
  %v4153 = vor.u32 %v4152, %v752
  %v4154 = vsel %vm4144, %v4151, %v4153
  %v4155 = vrot.slane %v4152, 4
  %v4156 = vrot.slane %v759, 7
  %v4157 = vor.u32 %v4156, %v762
  %v4158 = vsel %vm4144, %v4155, %v4157
  %v4159 = vrot.slane %v4156, 4
  %v4160 = vrot.slane %v769, 7
  %v4161 = vor.u32 %v4160, %v772
  %v4162 = vsel %vm4144, %v4159, %v4161
  %v4163 = vrot.slane %v4160, 4
  %v4164 = vrot.slane %v779, 7
  %v4165 = vor.u32 %v4164, %v782
  %v4166 = vsel %vm4144, %v4163, %v4165
  %v4167 = vrot.slane %v4164, 4
  %v4168 = vrot.slane %v789, 7
  %v4169 = vor.u32 %v4168, %v792
  %v4170 = vsel %vm4144, %v4167, %v4169
  %v4171 = vrot.slane %v4168, 4
  %v4172 = vrot.slane %v799, 7
  %v4173 = vor.u32 %v4172, %v802
  %v4174 = vsel %vm4144, %v4171, %v4173
  %v4175 = vrot.slane %v4172, 4
  %v4176 = vrot.slane %v809, 7
  %v4177 = vor.u32 %v4176, %v812
  %v4178 = vsel %vm4144, %v4175, %v4177
  %v4179 = vrot.slane %v4176, 4
  %v4180 = vrot.slane %v819, 7
  %v4181 = vor.u32 %v4180, %v822
  %v4182 = vsel %vm4144, %v4179, %v4181
  %v4183 = vrot.slane %v4180, 4
  %v4184 = vrot.slane %v829, 7
  %v4185 = vor.u32 %v4184, %v832
  %v4186 = vsel %vm4144, %v4183, %v4185
  %v4187 = vrot.slane %v4184, 4
  %v4188 = vrot.slane %v839, 7
  %v4189 = vor.u32 %v4188, %v842
  %v4190 = vsel %vm4144, %v4187, %v4189
  %v4191 = vrot.slane %v4188, 4
  %v4192 = vrot.slane %v849, 7
  %v4193 = vor.u32 %v4192, %v852
  %v4194 = vsel %vm4144, %v4191, %v4193
  %v4195 = vrot.slane %v4192, 4
  %v4196 = vrot.slane %v859, 7
  %v4197 = vor.u32 %v4196, %v862
  %v4198 = vsel %vm4144, %v4195, %v4197
  %v4199 = vrot.slane %v4196, 4
  %v4200 = vrot.slane %v869, 7
  %v4201 = vor.u32 %v4200, %v872
  %v4202 = vsel %vm4144, %v4199, %v4201
  %v4203 = vrot.slane %v4200, 4
  %v4204 = vrot.slane %v879, 7
  %v4205 = vor.u32 %v4204, %v882
  %v4206 = vsel %vm4144, %v4203, %v4205
  %v4207 = vrot.slane %v4204, 4
  %v4208 = vrot.slane %v889, 7
  %v4209 = vor.u32 %v4208, %v892
  %v4210 = vsel %vm4144, %v4207, %v4209
  %v4211 = vrot.slane %v4208, 4
  %v4212 = vrot.slane %v899, 7
  %v4213 = vor.u32 %v4212, %v902
  %v4214 = vsel %vm4144, %v4211, %v4213
  %v4215 = vrot.slane %v4212, 4
  %v4216 = vrot.slane %v909, 7
  %v4217 = vor.u32 %v4216, %v912
  %v4218 = vsel %vm4144, %v4215, %v4217
  %v4219 = vrot.slane %v4216, 4
  %v4220 = vrot.slane %v919, 7
  %v4221 = vor.u32 %v4220, %v922
  %v4222 = vsel %vm4144, %v4219, %v4221
  %v4223 = vrot.slane %v4220, 4
  %v4224 = vrot.slane %v929, 7
  %v4225 = vor.u32 %v4224, %v932
  %v4226 = vsel %vm4144, %v4223, %v4225
  %v4227 = vrot.slane %v4224, 4
  %v4228 = vrot.slane %v939, 7
  %v4229 = vor.u32 %v4228, %v942
  %v4230 = vsel %vm4144, %v4227, %v4229
  %v4231 = vrot.slane %v4228, 4
  %v4232 = vrot.slane %v949, 7
  %v4233 = vor.u32 %v4232, %v952
  %v4234 = vsel %vm4144, %v4231, %v4233
  %v4235 = vrot.slane %v4232, 4
  %v4236 = vrot.slane %v959, 7
  %v4237 = vor.u32 %v4236, %v962
  %v4238 = vsel %vm4144, %v4235, %v4237
  %v4239 = vrot.slane %v4236, 4
  %v4240 = vrot.slane %v969, 7
  %v4241 = vor.u32 %v4240, %v972
  %v4242 = vsel %vm4144, %v4239, %v4241
  %vm4243 = vcmp.ne.s16.totalorder %v4146, 0
  %vm4244 = vcmp.ne.s16.totalorder %v4150, 0
  %vm4245 = vcmp.ne.s16.totalorder %v4154, 0
  %vm4246 = vcmp.ne.s16.totalorder %v4158, 0
  %vm4247 = vcmp.ne.s16.totalorder %v4162, 0
  %vm4248 = vcmp.ne.s16.totalorder %v4166, 0
  %vm4249 = vcmp.ne.s16.totalorder %v4170, 0
  %vm4250 = vcmp.ne.s16.totalorder %v4174, 0
  %vm4251 = vcmp.ne.s16.totalorder %v4178, 0
  %vm4252 = vcmp.ne.s16.totalorder %v4182, 0
  %vm4253 = vcmp.ne.s16.totalorder %v4186, 0
  %vm4254 = vcmp.ne.s16.totalorder %v4190, 0
  %vm4255 = vcmp.ne.s16.totalorder %v4194, 0
  %vm4256 = vcmp.ne.s16.totalorder %v4198, 0
  %vm4257 = vcmp.ne.s16.totalorder %v4202, 0
  %vm4258 = vcmp.ne.s16.totalorder %v4206, 0
  %vm4259 = vcmp.ne.s16.totalorder %v4210, 0
  %vm4260 = vcmp.ne.s16.totalorder %v4214, 0
  %vm4261 = vcmp.ne.s16.totalorder %v4218, 0
  %vm4262 = vcmp.ne.s16.totalorder %v4222, 0
  %vm4263 = vcmp.ne.s16.totalorder %v4226, 0
  %vm4264 = vcmp.ne.s16.totalorder %v4230, 0
  %vm4265 = vcmp.ne.s16.totalorder %v4234, 0
  %vm4266 = vcmp.ne.s16.totalorder %v4238, 0
  %vm4267 = vcmp.ne.s16.totalorder %v4242, 0
  %v4268 = vsel %vm4243, %v4117, 0
  %v4269 = vsel %vm4244, %v4118, 0
  %v4270 = vsel %vm4245, %v4119, 0
  %v4271 = vsel %vm4246, %v4120, 0
  %v4272 = vsel %vm4247, %v4121, 0
  %v4273 = vsel %vm4248, %v4122, 0
  %v4274 = vsel %vm4249, %v4123, 0
  %v4275 = vsel %vm4250, %v4124, 0
  %v4276 = vsel %vm4251, %v4125, 0
  %v4277 = vsel %vm4252, %v4126, 0
  %v4278 = vsel %vm4253, %v4127, 0
  %v4279 = vsel %vm4254, %v4128, 0
  %v4280 = vsel %vm4255, %v4129, 0
  %v4281 = vsel %vm4256, %v4130, 0
  %v4282 = vsel %vm4257, %v4131, 0
  %v4283 = vsel %vm4258, %v4132, 0
  %v4284 = vsel %vm4259, %v4133, 0
  %v4285 = vsel %vm4260, %v4134, 0
  %v4286 = vsel %vm4261, %v4135, 0
  %v4287 = vsel %vm4262, %v4136, 0
  %v4288 = vsel %vm4263, %v4137, 0
  %v4289 = vsel %vm4264, %v4138, 0
  %v4290 = vsel %vm4265, %v4139, 0
  %v4291 = vsel %vm4266, %v4140, 0
  %v4292 = vsel %vm4267, %v4141, 0
  %v4293 = vld [vmem:[%s1 + $0x60] sm:$0xf]
  %v4294 = vld [vmem:[%s1 + $0x64] sm:$0xf]
  %v4295 = vld [vmem:[%s1 + $0x68] sm:$0xf]
  %v4296 = vld [vmem:[%s1 + $0x6c] sm:$0xf]
  %v4322 = vunpack.c.l.b16 %v4268
  %v4323 = vunpack.c.l.b16 %v4269
  %v4324 = vunpack.c.l.b16 %v4270
  %v4325 = vunpack.c.l.b16 %v4271
  %v4326 = vunpack.c.l.b16 %v4272
  %v4327 = vunpack.c.l.b16 %v4273
  %v4328 = vunpack.c.l.b16 %v4274
  %v4329 = vunpack.c.l.b16 %v4275
  %v4330 = vunpack.c.l.b16 %v4276
  %v4331 = vunpack.c.l.b16 %v4277
  %v4332 = vunpack.c.l.b16 %v4278
  %v4333 = vunpack.c.l.b16 %v4279
  %v4334 = vunpack.c.l.b16 %v4280
  %v4335 = vunpack.c.l.b16 %v4281
  %v4336 = vunpack.c.l.b16 %v4282
  %v4337 = vunpack.c.l.b16 %v4283
  %v4338 = vunpack.c.l.b16 %v4284
  %v4339 = vunpack.c.l.b16 %v4285
  %v4340 = vunpack.c.l.b16 %v4286
  %v4341 = vunpack.c.l.b16 %v4287
  %v4342 = vunpack.c.l.b16 %v4288
  %v4343 = vunpack.c.l.b16 %v4289
  %v4344 = vunpack.c.l.b16 %v4290
  %v4345 = vunpack.c.l.b16 %v4291
  %v4346 = vunpack.c.l.b16 %v4292
  %v4347 = vpack.c.b16 %v4323, %v4322
  %v4348 = vpack.c.b16 %v4325, %v4324
  %v4349 = vpack.c.b16 %v4327, %v4326
  %v4350 = vpack.c.b16 %v4329, %v4328
  %v4351 = vpack.c.b16 %v4331, %v4330
  %v4352 = vpack.c.b16 %v4333, %v4332
  %v4353 = vpack.c.b16 %v4335, %v4334
  %v4354 = vpack.c.b16 %v4337, %v4336
  %v4355 = vpack.c.b16 %v4339, %v4338
  %v4356 = vpack.c.b16 %v4341, %v4340
  %v4357 = vpack.c.b16 %v4343, %v4342
  %v4358 = vpack.c.b16 %v4345, %v4344
  %v4359 = vpack.c.b16 %v4346, %v4346
  %vm4360 = vsmask.f32 7424
  %v4362 = vshrl.u32 %v4347, 16
  %v4364 = vshll.u32 %v4347, 16
  %v4366 = vrot.slane %v4364, 1
  %v4367 = vor.u32 %v4362, %v4366
  %v4369 = vshll.u32 %v4348, 16
  %v4371 = vrot.slane %v4369, 1
  %v4372 = vsel %vm4360, %v4367, %v4371
  %v4373 = vshrl.u32 %v4348, 16
  %v4375 = vor.u32 %v4373, %v4371
  %v4377 = vshll.u32 %v4349, 16
  %v4379 = vrot.slane %v4377, 1
  %v4380 = vsel %vm4360, %v4375, %v4379
  %v4381 = vshrl.u32 %v4349, 16
  %v4383 = vor.u32 %v4381, %v4379
  %v4385 = vshll.u32 %v4350, 16
  %v4387 = vrot.slane %v4385, 1
  %v4388 = vsel %vm4360, %v4383, %v4387
  %v4389 = vshrl.u32 %v4350, 16
  %v4391 = vor.u32 %v4389, %v4387
  %v4393 = vshll.u32 %v4351, 16
  %v4395 = vrot.slane %v4393, 1
  %v4396 = vsel %vm4360, %v4391, %v4395
  %v4397 = vshrl.u32 %v4351, 16
  %v4399 = vor.u32 %v4397, %v4395
  %v4401 = vshll.u32 %v4352, 16
  %v4403 = vrot.slane %v4401, 1
  %v4404 = vsel %vm4360, %v4399, %v4403
  %v4405 = vshrl.u32 %v4352, 16
  %v4407 = vor.u32 %v4405, %v4403
  %v4409 = vshll.u32 %v4353, 16
  %v4411 = vrot.slane %v4409, 1
  %v4412 = vsel %vm4360, %v4407, %v4411
  %v4413 = vshrl.u32 %v4353, 16
  %v4415 = vor.u32 %v4413, %v4411
  %v4417 = vshll.u32 %v4354, 16
  %v4419 = vrot.slane %v4417, 1
  %v4420 = vsel %vm4360, %v4415, %v4419
  %v4421 = vshrl.u32 %v4354, 16
  %v4423 = vor.u32 %v4421, %v4419
  %v4425 = vshll.u32 %v4355, 16
  %v4427 = vrot.slane %v4425, 1
  %v4428 = vsel %vm4360, %v4423, %v4427
  %v4429 = vshrl.u32 %v4355, 16
  %v4431 = vor.u32 %v4429, %v4427
  %v4433 = vshll.u32 %v4356, 16
  %v4435 = vrot.slane %v4433, 1
  %v4436 = vsel %vm4360, %v4431, %v4435
  %v4437 = vshrl.u32 %v4356, 16
  %v4439 = vor.u32 %v4437, %v4435
  %v4441 = vshll.u32 %v4357, 16
  %v4443 = vrot.slane %v4441, 1
  %v4444 = vsel %vm4360, %v4439, %v4443
  %v4445 = vshrl.u32 %v4357, 16
  %v4447 = vor.u32 %v4445, %v4443
  %v4449 = vshll.u32 %v4358, 16
  %v4451 = vrot.slane %v4449, 1
  %v4452 = vsel %vm4360, %v4447, %v4451
  %v4453 = vshrl.u32 %v4358, 16
  %v4455 = vor.u32 %v4453, %v4451
  %v4457 = vshll.u32 %v4359, 16
  %v4459 = vrot.slane %v4457, 1
  %v4460 = vsel %vm4360, %v4455, %v4459
  %v4461 = vshrl.u32 %v4359, 16
  %v4463 = vor.u32 %v4461, %v4459
  %v4468 = vunpack.c.l.b16 %v4293
  %v4469 = vunpack.c.l.b16 %v4294
  %v4470 = vunpack.c.l.b16 %v4295
  %v4471 = vunpack.c.l.b16 %v4296
  %v4472 = vpack.c.b16 %v4469, %v4468
  %v4473 = vpack.c.b16 %v4471, %v4470
  %v4477 = vsel %vm1228, %v4372, 0
  %v4480 = vsel %vm1228, %v4380, 0
  %v4483 = vsel %vm1228, %v4388, 0
  %v4486 = vsel %vm1228, %v4396, 0
  %v4489 = vsel %vm1228, %v4404, 0
  %v4492 = vsel %vm1228, %v4412, 0
  %v4495 = vsel %vm1228, %v4420, 0
  %v4498 = vsel %vm1228, %v4428, 0
  %v4501 = vsel %vm1228, %v4436, 0
  %v4504 = vsel %vm1228, %v4444, 0
  %v4507 = vsel %vm1228, %v4452, 0
  %v4510 = vsel %vm1228, %v4460, 0
  %v4513 = vsel %vm1228, %v4463, 0
  %4515 = vmatprep.subr.bf16.mxu0 0
  %4516 = vmatpush1.bf16.msra.mxu0 %v4472
  %4517 = vmatprep.subr.bf16.mxu0 0
  %4518 = vmatpush1.bf16.msra.mxu0 %v4473
  %4519 = vmatprep.subr.bf16.mxu0 0
  %4520 = vmatpush1.bf16.msra.mxu0 0
  %4521 = vmatprep.subr.bf16.mxu0 0
  %4522 = vmatpush1.bf16.msra.mxu0 0
  %4523 = vmatprep.subr.bf16.mxu0 0
  %4524 = vmatpush1.bf16.msra.mxu0 0
  %4525 = vmatprep.subr.bf16.mxu0 0
  %4526 = vmatpush1.bf16.msra.mxu0 0
  %4527 = vmatprep.subr.bf16.mxu0 0
  %4528 = vmatpush1.bf16.msra.mxu0 0
  %4529 = vmatprep.subr.bf16.mxu0 0
  %4530 = vmatpush1.bf16.msra.mxu0 0
  %4531 = vmatprep.subr.bf16.mxu0 0
  %4532 = vmatpush1.bf16.msra.mxu0 0
  %4533 = vmatprep.subr.bf16.mxu0 0
  %4534 = vmatpush1.bf16.msra.mxu0 0
  %4535 = vmatprep.subr.bf16.mxu0 0
  %4536 = vmatpush1.bf16.msra.mxu0 0
  %4537 = vmatprep.subr.bf16.mxu0 0
  %4538 = vmatpush1.bf16.msra.mxu0 0
  %4539 = vmatprep.subr.bf16.mxu0 0
  %4540 = vmatpush1.bf16.msra.mxu0 0
  %4541 = vmatprep.subr.bf16.mxu0 0
  %4542 = vmatpush1.bf16.msra.mxu0 0
  %4543 = vmatprep.subr.bf16.mxu0 0
  %4544 = vmatpush1.bf16.msra.mxu0 0
  %4545 = vmatprep.subr.bf16.mxu0 0
  %4546 = vmatpush1.bf16.msra.mxu0 0
  %4547 = vmatprep.mubr.bf16.mxu0 0
  %4548 = vmatmul.mubr.bf16.gmra.mrb[0].mxu0 %v4477
  %v4549 = vpop.f32.mrb[0].mxu0
  %v4550 = vadd.f32 0.0, %v4549
  %v4551 = vpop.f32.mrb[0].mxu0
  %v4552 = vpop.f32.mrb[0].mxu0
  %v4553 = vadd.f32 0.0, %v4552
  %v4554 = vpop.f32.mrb[0].mxu0
  %4555 = vmatprep.mubr.bf16.mxu0 0
  %4556 = vmatmul.mubr.bf16.gmra.mrb[0].mxu0 %v4480
  %v4557 = vpop.f32.mrb[0].mxu0
  %v4558 = vadd.f32 0.0, %v4557
  %v4559 = vpop.f32.mrb[0].mxu0
  %v4560 = vpop.f32.mrb[0].mxu0
  %v4561 = vadd.f32 0.0, %v4560
  %v4562 = vpop.f32.mrb[0].mxu0
  %4563 = vmatprep.mubr.bf16.mxu0 0
  %4564 = vmatmul.mubr.bf16.gmra.mrb[0].mxu0 %v4483
  %v4565 = vpop.f32.mrb[0].mxu0
  %v4566 = vadd.f32 0.0, %v4565
  %v4567 = vpop.f32.mrb[0].mxu0
  %v4568 = vpop.f32.mrb[0].mxu0
  %v4569 = vadd.f32 0.0, %v4568
  %v4570 = vpop.f32.mrb[0].mxu0
  %4571 = vmatprep.mubr.bf16.mxu0 0
  %4572 = vmatmul.mubr.bf16.gmra.mrb[0].mxu0 %v4486
  %v4573 = vpop.f32.mrb[0].mxu0
  %v4574 = vadd.f32 0.0, %v4573
  %v4575 = vpop.f32.mrb[0].mxu0
  %v4576 = vpop.f32.mrb[0].mxu0
  %v4577 = vadd.f32 0.0, %v4576
  %v4578 = vpop.f32.mrb[0].mxu0
  %4579 = vmatprep.mubr.bf16.mxu0 0
  %4580 = vmatmul.mubr.bf16.gmra.mrb[0].mxu0 %v4489
  %v4581 = vpop.f32.mrb[0].mxu0
  %v4582 = vadd.f32 0.0, %v4581
  %v4583 = vpop.f32.mrb[0].mxu0
  %v4584 = vpop.f32.mrb[0].mxu0
  %v4585 = vadd.f32 0.0, %v4584
  %v4586 = vpop.f32.mrb[0].mxu0
  %4587 = vmatprep.mubr.bf16.mxu0 0
  %4588 = vmatmul.mubr.bf16.gmra.mrb[0].mxu0 %v4492
  %v4589 = vpop.f32.mrb[0].mxu0
  %v4590 = vadd.f32 0.0, %v4589
  %v4591 = vpop.f32.mrb[0].mxu0
  %v4592 = vpop.f32.mrb[0].mxu0
  %v4593 = vadd.f32 0.0, %v4592
  %v4594 = vpop.f32.mrb[0].mxu0
  %4595 = vmatprep.mubr.bf16.mxu0 0
  %4596 = vmatmul.mubr.bf16.gmra.mrb[0].mxu0 %v4495
  %v4597 = vpop.f32.mrb[0].mxu0
  %v4598 = vadd.f32 0.0, %v4597
  %v4599 = vpop.f32.mrb[0].mxu0
  %v4600 = vpop.f32.mrb[0].mxu0
  %v4601 = vadd.f32 0.0, %v4600
  %v4602 = vpop.f32.mrb[0].mxu0
  %4603 = vmatprep.mubr.bf16.mxu0 0
  %4604 = vmatmul.mubr.bf16.gmra.mrb[0].mxu0 %v4498
  %v4605 = vpop.f32.mrb[0].mxu0
  %v4606 = vadd.f32 0.0, %v4605
  %v4607 = vpop.f32.mrb[0].mxu0
  %v4608 = vpop.f32.mrb[0].mxu0
  %v4609 = vadd.f32 0.0, %v4608
  %v4610 = vpop.f32.mrb[0].mxu0
  %4611 = vmatprep.mubr.bf16.mxu0 0
  %4612 = vmatmul.mubr.bf16.gmra.mrb[0].mxu0 %v4501
  %v4613 = vpop.f32.mrb[0].mxu0
  %v4614 = vadd.f32 0.0, %v4613
  %v4615 = vpop.f32.mrb[0].mxu0
  %v4616 = vpop.f32.mrb[0].mxu0
  %v4617 = vadd.f32 0.0, %v4616
  %v4618 = vpop.f32.mrb[0].mxu0
  %4619 = vmatprep.mubr.bf16.mxu0 0
  %4620 = vmatmul.mubr.bf16.gmra.mrb[0].mxu0 %v4504
  %v4621 = vpop.f32.mrb[0].mxu0
  %v4622 = vadd.f32 0.0, %v4621
  %v4623 = vpop.f32.mrb[0].mxu0
  %v4624 = vpop.f32.mrb[0].mxu0
  %v4625 = vadd.f32 0.0, %v4624
  %v4626 = vpop.f32.mrb[0].mxu0
  %4627 = vmatprep.mubr.bf16.mxu0 0
  %4628 = vmatmul.mubr.bf16.gmra.mrb[0].mxu0 %v4507
  %v4629 = vpop.f32.mrb[0].mxu0
  %v4630 = vadd.f32 0.0, %v4629
  %v4631 = vpop.f32.mrb[0].mxu0
  %v4632 = vpop.f32.mrb[0].mxu0
  %v4633 = vadd.f32 0.0, %v4632
  %v4634 = vpop.f32.mrb[0].mxu0
  %4635 = vmatprep.mubr.bf16.mxu0 0
  %4636 = vmatmul.mubr.bf16.gmra.mrb[0].mxu0 %v4510
  %v4637 = vpop.f32.mrb[0].mxu0
  %v4638 = vadd.f32 0.0, %v4637
  %v4639 = vpop.f32.mrb[0].mxu0
  %v4640 = vpop.f32.mrb[0].mxu0
  %v4641 = vadd.f32 0.0, %v4640
  %v4642 = vpop.f32.mrb[0].mxu0
  %4643 = vmatprep.mubr.bf16.mxu0 0
  %4644 = vmatmul.mubr.bf16.gmra.mrb[0].mxu0 %v4513
  %v4645 = vpop.f32.mrb[0].mxu0
  %v4646 = vadd.f32 0.0, %v4645
  %v4647 = vpop.f32.mrb[0].mxu0
  %v4648 = vpop.f32.mrb[0].mxu0
  %v4649 = vpop.f32.mrb[0].mxu0
  %4650 = vdwg.mxu0
  %v4651 = vadd.f32 %v4092, %v4550
  %v4652 = vadd.f32 %v4093, %v4553
  %v4653 = vadd.f32 %v4094, %v4558
  %v4654 = vadd.f32 %v4095, %v4561
  %v4655 = vadd.f32 %v4096, %v4566
  %v4656 = vadd.f32 %v4097, %v4569
  %v4657 = vadd.f32 %v4098, %v4574
  %v4658 = vadd.f32 %v4099, %v4577
  %v4659 = vadd.f32 %v4100, %v4582
  %v4660 = vadd.f32 %v4101, %v4585
  %v4661 = vadd.f32 %v4102, %v4590
  %v4662 = vadd.f32 %v4103, %v4593
  %v4663 = vadd.f32 %v4104, %v4598
  %v4664 = vadd.f32 %v4105, %v4601
  %v4665 = vadd.f32 %v4106, %v4606
  %v4666 = vadd.f32 %v4107, %v4609
  %v4667 = vadd.f32 %v4108, %v4614
  %v4668 = vadd.f32 %v4109, %v4617
  %v4669 = vadd.f32 %v4110, %v4622
  %v4670 = vadd.f32 %v4111, %v4625
  %v4671 = vadd.f32 %v4112, %v4630
  %v4672 = vadd.f32 %v4113, %v4633
  %v4673 = vadd.f32 %v4114, %v4638
  %v4674 = vadd.f32 %v4115, %v4641
  %v4675 = vadd.f32 %v4116, %v4646
  %v4676 = vld [vmem:[%s0 + $0x14] sm:$0xe]
  %v4677 = vld [vmem:[%s1 + $0x70] sm:$0xf]
  %v4678 = vld [vmem:[%s1 + $0x74] sm:$0xf]
  %v4679 = vld [vmem:[%s1 + $0x78] sm:$0xf]
  %v4680 = vld [vmem:[%s1 + $0x7c] sm:$0xf]
  %v4706 = vunpack.c.l.b16 %v4676
  %v4707 = vunpack.c.l.b16 %v4118
  %v4708 = vunpack.c.l.b16 %v4119
  %v4709 = vunpack.c.l.b16 %v4120
  %v4710 = vunpack.c.l.b16 %v4121
  %v4711 = vunpack.c.l.b16 %v4122
  %v4712 = vunpack.c.l.b16 %v4123
  %v4713 = vunpack.c.l.b16 %v4124
  %v4714 = vunpack.c.l.b16 %v4125
  %v4715 = vunpack.c.l.b16 %v4126
  %v4716 = vunpack.c.l.b16 %v4127
  %v4717 = vunpack.c.l.b16 %v4128
  %v4718 = vunpack.c.l.b16 %v4129
  %v4719 = vunpack.c.l.b16 %v4130
  %v4720 = vunpack.c.l.b16 %v4131
  %v4721 = vunpack.c.l.b16 %v4132
  %v4722 = vunpack.c.l.b16 %v4133
  %v4723 = vunpack.c.l.b16 %v4134
  %v4724 = vunpack.c.l.b16 %v4135
  %v4725 = vunpack.c.l.b16 %v4136
  %v4726 = vunpack.c.l.b16 %v4137
  %v4727 = vunpack.c.l.b16 %v4138
  %v4728 = vunpack.c.l.b16 %v4139
  %v4729 = vunpack.c.l.b16 %v4140
  %v4730 = vunpack.c.l.b16 %v4141
  %v4731 = vpack.c.b16 %v4707, %v4706
  %v4732 = vpack.c.b16 %v4709, %v4708
  %v4733 = vpack.c.b16 %v4711, %v4710
  %v4734 = vpack.c.b16 %v4713, %v4712
  %v4735 = vpack.c.b16 %v4715, %v4714
  %v4736 = vpack.c.b16 %v4717, %v4716
  %v4737 = vpack.c.b16 %v4719, %v4718
  %v4738 = vpack.c.b16 %v4721, %v4720
  %v4739 = vpack.c.b16 %v4723, %v4722
  %v4740 = vpack.c.b16 %v4725, %v4724
  %v4741 = vpack.c.b16 %v4727, %v4726
  %v4742 = vpack.c.b16 %v4729, %v4728
  %v4743 = vpack.c.b16 %v4730, %v4730
  %vm4744 = vcmask 1046528
  %v4745 = vrot.slane %v4731, 1
  %v4746 = vrot.slane %v4732, 1
  %v4747 = vsel %vm4744, %v4745, %v4746
  %v4748 = vrot.slane %v4733, 1
  %v4749 = vsel %vm4744, %v4746, %v4748
  %v4750 = vrot.slane %v4734, 1
  %v4751 = vsel %vm4744, %v4748, %v4750
  %v4752 = vrot.slane %v4735, 1
  %v4753 = vsel %vm4744, %v4750, %v4752
  %v4754 = vrot.slane %v4736, 1
  %v4755 = vsel %vm4744, %v4752, %v4754
  %v4756 = vrot.slane %v4737, 1
  %v4757 = vsel %vm4744, %v4754, %v4756
  %v4758 = vrot.slane %v4738, 1
  %v4759 = vsel %vm4744, %v4756, %v4758
  %v4760 = vrot.slane %v4739, 1
  %v4761 = vsel %vm4744, %v4758, %v4760
  %v4762 = vrot.slane %v4740, 1
  %v4763 = vsel %vm4744, %v4760, %v4762
  %v4764 = vrot.slane %v4741, 1
  %v4765 = vsel %vm4744, %v4762, %v4764
  %v4766 = vrot.slane %v4742, 1
  %v4767 = vsel %vm4744, %v4764, %v4766
  %v4768 = vrot.slane %v4743, 1
  %v4769 = vsel %vm4744, %v4766, %v4768
  %v4774 = vunpack.c.l.b16 %v4677
  %v4775 = vunpack.c.l.b16 %v4678
  %v4776 = vunpack.c.l.b16 %v4679
  %v4777 = vunpack.c.l.b16 %v4680
  %v4778 = vpack.c.b16 %v4775, %v4774
  %v4779 = vpack.c.b16 %v4777, %v4776
  %v4783 = vsel %vm1228, %v4747, 0
  %v4786 = vsel %vm1228, %v4749, 0
  %v4789 = vsel %vm1228, %v4751, 0
  %v4792 = vsel %vm1228, %v4753, 0
  %v4795 = vsel %vm1228, %v4755, 0
  %v4798 = vsel %vm1228, %v4757, 0
  %v4801 = vsel %vm1228, %v4759, 0
  %v4804 = vsel %vm1228, %v4761, 0
  %v4807 = vsel %vm1228, %v4763, 0
  %v4810 = vsel %vm1228, %v4765, 0
  %v4813 = vsel %vm1228, %v4767, 0
  %v4816 = vsel %vm1228, %v4769, 0
  %v4819 = vsel %vm1228, %v4768, 0
  %4821 = vmatprep.subr.bf16.mxu0 0
  %4822 = vmatpush1.bf16.msra.mxu0 %v4778
  %4823 = vmatprep.subr.bf16.mxu0 0
  %4824 = vmatpush1.bf16.msra.mxu0 %v4779
  %4825 = vmatprep.subr.bf16.mxu0 0
  %4826 = vmatpush1.bf16.msra.mxu0 0
  %4827 = vmatprep.subr.bf16.mxu0 0
  %4828 = vmatpush1.bf16.msra.mxu0 0
  %4829 = vmatprep.subr.bf16.mxu0 0
  %4830 = vmatpush1.bf16.msra.mxu0 0
  %4831 = vmatprep.subr.bf16.mxu0 0
  %4832 = vmatpush1.bf16.msra.mxu0 0
  %4833 = vmatprep.subr.bf16.mxu0 0
  %4834 = vmatpush1.bf16.msra.mxu0 0
  %4835 = vmatprep.subr.bf16.mxu0 0
  %4836 = vmatpush1.bf16.msra.mxu0 0
  %4837 = vmatprep.subr.bf16.mxu0 0
  %4838 = vmatpush1.bf16.msra.mxu0 0
  %4839 = vmatprep.subr.bf16.mxu0 0
  %4840 = vmatpush1.bf16.msra.mxu0 0
  %4841 = vmatprep.subr.bf16.mxu0 0
  %4842 = vmatpush1.bf16.msra.mxu0 0
  %4843 = vmatprep.subr.bf16.mxu0 0
  %4844 = vmatpush1.bf16.msra.mxu0 0
  %4845 = vmatprep.subr.bf16.mxu0 0
  %4846 = vmatpush1.bf16.msra.mxu0 0
  %4847 = vmatprep.subr.bf16.mxu0 0
  %4848 = vmatpush1.bf16.msra.mxu0 0
  %4849 = vmatprep.subr.bf16.mxu0 0
  %4850 = vmatpush1.bf16.msra.mxu0 0
  %4851 = vmatprep.subr.bf16.mxu0 0
  %4852 = vmatpush1.bf16.msra.mxu0 0
  %4853 = vmatprep.mubr.bf16.mxu0 0
  %4854 = vmatmul.mubr.bf16.gmra.mrb[0].mxu0 %v4783
  %v4855 = vpop.f32.mrb[0].mxu0
  %v4856 = vadd.f32 0.0, %v4855
  %v4857 = vpop.f32.mrb[0].mxu0
  %v4858 = vpop.f32.mrb[0].mxu0
  %v4859 = vadd.f32 0.0, %v4858
  %v4860 = vpop.f32.mrb[0].mxu0
  %4861 = vmatprep.mubr.bf16.mxu0 0
  %4862 = vmatmul.mubr.bf16.gmra.mrb[0].mxu0 %v4786
  %v4863 = vpop.f32.mrb[0].mxu0
  %v4864 = vadd.f32 0.0, %v4863
  %v4865 = vpop.f32.mrb[0].mxu0
  %v4866 = vpop.f32.mrb[0].mxu0
  %v4867 = vadd.f32 0.0, %v4866
  %v4868 = vpop.f32.mrb[0].mxu0
  %4869 = vmatprep.mubr.bf16.mxu0 0
  %4870 = vmatmul.mubr.bf16.gmra.mrb[0].mxu0 %v4789
  %v4871 = vpop.f32.mrb[0].mxu0
  %v4872 = vadd.f32 0.0, %v4871
  %v4873 = vpop.f32.mrb[0].mxu0
  %v4874 = vpop.f32.mrb[0].mxu0
  %v4875 = vadd.f32 0.0, %v4874
  %v4876 = vpop.f32.mrb[0].mxu0
  %4877 = vmatprep.mubr.bf16.mxu0 0
  %4878 = vmatmul.mubr.bf16.gmra.mrb[0].mxu0 %v4792
  %v4879 = vpop.f32.mrb[0].mxu0
  %v4880 = vadd.f32 0.0, %v4879
  %v4881 = vpop.f32.mrb[0].mxu0
  %v4882 = vpop.f32.mrb[0].mxu0
  %v4883 = vadd.f32 0.0, %v4882
  %v4884 = vpop.f32.mrb[0].mxu0
  %4885 = vmatprep.mubr.bf16.mxu0 0
  %4886 = vmatmul.mubr.bf16.gmra.mrb[0].mxu0 %v4795
  %v4887 = vpop.f32.mrb[0].mxu0
  %v4888 = vadd.f32 0.0, %v4887
  %v4889 = vpop.f32.mrb[0].mxu0
  %v4890 = vpop.f32.mrb[0].mxu0
  %v4891 = vadd.f32 0.0, %v4890
  %v4892 = vpop.f32.mrb[0].mxu0
  %4893 = vmatprep.mubr.bf16.mxu0 0
  %4894 = vmatmul.mubr.bf16.gmra.mrb[0].mxu0 %v4798
  %v4895 = vpop.f32.mrb[0].mxu0
  %v4896 = vadd.f32 0.0, %v4895
  %v4897 = vpop.f32.mrb[0].mxu0
  %v4898 = vpop.f32.mrb[0].mxu0
  %v4899 = vadd.f32 0.0, %v4898
  %v4900 = vpop.f32.mrb[0].mxu0
  %4901 = vmatprep.mubr.bf16.mxu0 0
  %4902 = vmatmul.mubr.bf16.gmra.mrb[0].mxu0 %v4801
  %v4903 = vpop.f32.mrb[0].mxu0
  %v4904 = vadd.f32 0.0, %v4903
  %v4905 = vpop.f32.mrb[0].mxu0
  %v4906 = vpop.f32.mrb[0].mxu0
  %v4907 = vadd.f32 0.0, %v4906
  %v4908 = vpop.f32.mrb[0].mxu0
  %4909 = vmatprep.mubr.bf16.mxu0 0
  %4910 = vmatmul.mubr.bf16.gmra.mrb[0].mxu0 %v4804
  %v4911 = vpop.f32.mrb[0].mxu0
  %v4912 = vadd.f32 0.0, %v4911
  %v4913 = vpop.f32.mrb[0].mxu0
  %v4914 = vpop.f32.mrb[0].mxu0
  %v4915 = vadd.f32 0.0, %v4914
  %v4916 = vpop.f32.mrb[0].mxu0
  %4917 = vmatprep.mubr.bf16.mxu0 0
  %4918 = vmatmul.mubr.bf16.gmra.mrb[0].mxu0 %v4807
  %v4919 = vpop.f32.mrb[0].mxu0
  %v4920 = vadd.f32 0.0, %v4919
  %v4921 = vpop.f32.mrb[0].mxu0
  %v4922 = vpop.f32.mrb[0].mxu0
  %v4923 = vadd.f32 0.0, %v4922
  %v4924 = vpop.f32.mrb[0].mxu0
  %4925 = vmatprep.mubr.bf16.mxu0 0
  %4926 = vmatmul.mubr.bf16.gmra.mrb[0].mxu0 %v4810
  %v4927 = vpop.f32.mrb[0].mxu0
  %v4928 = vadd.f32 0.0, %v4927
  %v4929 = vpop.f32.mrb[0].mxu0
  %v4930 = vpop.f32.mrb[0].mxu0
  %v4931 = vadd.f32 0.0, %v4930
  %v4932 = vpop.f32.mrb[0].mxu0
  %4933 = vmatprep.mubr.bf16.mxu0 0
  %4934 = vmatmul.mubr.bf16.gmra.mrb[0].mxu0 %v4813
  %v4935 = vpop.f32.mrb[0].mxu0
  %v4936 = vadd.f32 0.0, %v4935
  %v4937 = vpop.f32.mrb[0].mxu0
  %v4938 = vpop.f32.mrb[0].mxu0
  %v4939 = vadd.f32 0.0, %v4938
  %v4940 = vpop.f32.mrb[0].mxu0
  %4941 = vmatprep.mubr.bf16.mxu0 0
  %4942 = vmatmul.mubr.bf16.gmra.mrb[0].mxu0 %v4816
  %v4943 = vpop.f32.mrb[0].mxu0
  %v4944 = vadd.f32 0.0, %v4943
  %v4945 = vpop.f32.mrb[0].mxu0
  %v4946 = vpop.f32.mrb[0].mxu0
  %v4947 = vadd.f32 0.0, %v4946
  %v4948 = vpop.f32.mrb[0].mxu0
  %4949 = vmatprep.mubr.bf16.mxu0 0
  %4950 = vmatmul.mubr.bf16.gmra.mrb[0].mxu0 %v4819
  %v4951 = vpop.f32.mrb[0].mxu0
  %v4952 = vadd.f32 0.0, %v4951
  %v4953 = vpop.f32.mrb[0].mxu0
  %v4954 = vpop.f32.mrb[0].mxu0
  %v4955 = vpop.f32.mrb[0].mxu0
  %4956 = vdwg.mxu0
  %v4957 = vadd.f32 %v4651, %v4856
  %v4958 = vadd.f32 %v4652, %v4859
  %v4959 = vadd.f32 %v4653, %v4864
  %v4960 = vadd.f32 %v4654, %v4867
  %v4961 = vadd.f32 %v4655, %v4872
  %v4962 = vadd.f32 %v4656, %v4875
  %v4963 = vadd.f32 %v4657, %v4880
  %v4964 = vadd.f32 %v4658, %v4883
  %v4965 = vadd.f32 %v4659, %v4888
  %v4966 = vadd.f32 %v4660, %v4891
  %v4967 = vadd.f32 %v4661, %v4896
  %v4968 = vadd.f32 %v4662, %v4899
  %v4969 = vadd.f32 %v4663, %v4904
  %v4970 = vadd.f32 %v4664, %v4907
  %v4971 = vadd.f32 %v4665, %v4912
  %v4972 = vadd.f32 %v4666, %v4915
  %v4973 = vadd.f32 %v4667, %v4920
  %v4974 = vadd.f32 %v4668, %v4923
  %v4975 = vadd.f32 %v4669, %v4928
  %v4976 = vadd.f32 %v4670, %v4931
  %v4977 = vadd.f32 %v4671, %v4936
  %v4978 = vadd.f32 %v4672, %v4939
  %v4979 = vadd.f32 %v4673, %v4944
  %v4980 = vadd.f32 %v4674, %v4947
  %v4981 = vadd.f32 %v4675, %v4952
  %v4982 = vld [vmem:[%s0 + $0x74] sm:$0xf]
  %v4983 = vrot.slane %v1920, 6
  %v4984 = vrot.slane %v1917, 7
  %v4985 = vor.u32 %v4983, %v4984
  %v4986 = vrot.slane %v4985, 4
  %v4987 = vrot.slane %v1930, 6
  %v4988 = vrot.slane %v1926, 7
  %v4989 = vor.u32 %v4987, %v4988
  %v4990 = vsel %vm2642, %v4986, %v4989
  %v4991 = vrot.slane %v4989, 4
  %v4992 = vrot.slane %v1940, 6
  %v4993 = vrot.slane %v1936, 7
  %v4994 = vor.u32 %v4992, %v4993
  %v4995 = vsel %vm2642, %v4991, %v4994
  %v4996 = vrot.slane %v4994, 4
  %v4997 = vrot.slane %v1950, 6
  %v4998 = vrot.slane %v1946, 7
  %v4999 = vor.u32 %v4997, %v4998
  %v5000 = vsel %vm2642, %v4996, %v4999
  %v5001 = vrot.slane %v4999, 4
  %v5002 = vrot.slane %v1960, 6
  %v5003 = vrot.slane %v1956, 7
  %v5004 = vor.u32 %v5002, %v5003
  %v5005 = vsel %vm2642, %v5001, %v5004
  %v5006 = vrot.slane %v5004, 4
  %v5007 = vrot.slane %v1970, 6
  %v5008 = vrot.slane %v1966, 7
  %v5009 = vor.u32 %v5007, %v5008
  %v5010 = vsel %vm2642, %v5006, %v5009
  %v5011 = vrot.slane %v5009, 4
  %v5012 = vrot.slane %v1980, 6
  %v5013 = vrot.slane %v1976, 7
  %v5014 = vor.u32 %v5012, %v5013
  %v5015 = vsel %vm2642, %v5011, %v5014
  %v5016 = vrot.slane %v5014, 4
  %v5017 = vrot.slane %v1990, 6
  %v5018 = vrot.slane %v1986, 7
  %v5019 = vor.u32 %v5017, %v5018
  %v5020 = vsel %vm2642, %v5016, %v5019
  %v5021 = vrot.slane %v5019, 4
  %v5022 = vrot.slane %v2000, 6
  %v5023 = vrot.slane %v1996, 7
  %v5024 = vor.u32 %v5022, %v5023
  %v5025 = vsel %vm2642, %v5021, %v5024
  %v5026 = vrot.slane %v5024, 4
  %v5027 = vrot.slane %v2010, 6
  %v5028 = vrot.slane %v2006, 7
  %v5029 = vor.u32 %v5027, %v5028
  %v5030 = vsel %vm2642, %v5026, %v5029
  %v5031 = vrot.slane %v5029, 4
  %v5032 = vrot.slane %v2020, 6
  %v5033 = vrot.slane %v2016, 7
  %v5034 = vor.u32 %v5032, %v5033
  %v5035 = vsel %vm2642, %v5031, %v5034
  %v5036 = vrot.slane %v5034, 4
  %v5037 = vrot.slane %v2030, 6
  %v5038 = vrot.slane %v2026, 7
  %v5039 = vor.u32 %v5037, %v5038
  %v5040 = vsel %vm2642, %v5036, %v5039
  %v5041 = vrot.slane %v5039, 4
  %v5042 = vrot.slane %v2040, 6
  %v5043 = vrot.slane %v2036, 7
  %v5044 = vor.u32 %v5042, %v5043
  %v5045 = vsel %vm2642, %v5041, %v5044
  %v5046 = vrot.slane %v5044, 4
  %v5047 = vrot.slane %v2050, 6
  %v5048 = vrot.slane %v2046, 7
  %v5049 = vor.u32 %v5047, %v5048
  %v5050 = vsel %vm2642, %v5046, %v5049
  %v5051 = vrot.slane %v5049, 4
  %v5052 = vrot.slane %v2060, 6
  %v5053 = vrot.slane %v2056, 7
  %v5054 = vor.u32 %v5052, %v5053
  %v5055 = vsel %vm2642, %v5051, %v5054
  %v5056 = vrot.slane %v5054, 4
  %v5057 = vrot.slane %v2070, 6
  %v5058 = vrot.slane %v2066, 7
  %v5059 = vor.u32 %v5057, %v5058
  %v5060 = vsel %vm2642, %v5056, %v5059
  %v5061 = vrot.slane %v5059, 4
  %v5062 = vrot.slane %v2080, 6
  %v5063 = vrot.slane %v2076, 7
  %v5064 = vor.u32 %v5062, %v5063
  %v5065 = vsel %vm2642, %v5061, %v5064
  %v5066 = vrot.slane %v5064, 4
  %v5067 = vrot.slane %v2090, 6
  %v5068 = vrot.slane %v2086, 7
  %v5069 = vor.u32 %v5067, %v5068
  %v5070 = vsel %vm2642, %v5066, %v5069
  %v5071 = vrot.slane %v5069, 4
  %v5072 = vrot.slane %v2100, 6
  %v5073 = vrot.slane %v2096, 7
  %v5074 = vor.u32 %v5072, %v5073
  %v5075 = vsel %vm2642, %v5071, %v5074
  %v5076 = vrot.slane %v5074, 4
  %v5077 = vrot.slane %v2110, 6
  %v5078 = vrot.slane %v2106, 7
  %v5079 = vor.u32 %v5077, %v5078
  %v5080 = vsel %vm2642, %v5076, %v5079
  %v5081 = vrot.slane %v5079, 4
  %v5082 = vrot.slane %v2120, 6
  %v5083 = vrot.slane %v2116, 7
  %v5084 = vor.u32 %v5082, %v5083
  %v5085 = vsel %vm2642, %v5081, %v5084
  %v5086 = vrot.slane %v5084, 4
  %v5087 = vrot.slane %v2130, 6
  %v5088 = vrot.slane %v2126, 7
  %v5089 = vor.u32 %v5087, %v5088
  %v5090 = vsel %vm2642, %v5086, %v5089
  %v5091 = vrot.slane %v5089, 4
  %v5092 = vrot.slane %v2140, 6
  %v5093 = vrot.slane %v2136, 7
  %v5094 = vor.u32 %v5092, %v5093
  %v5095 = vsel %vm2642, %v5091, %v5094
  %v5096 = vrot.slane %v5094, 4
  %v5097 = vrot.slane %v2150, 6
  %v5098 = vrot.slane %v2146, 7
  %v5099 = vor.u32 %v5097, %v5098
  %v5100 = vsel %vm2642, %v5096, %v5099
  %v5101 = vrot.slane %v5099, 4
  %v5102 = vrot.slane %v2160, 6
  %v5103 = vrot.slane %v2156, 7
  %v5104 = vor.u32 %v5102, %v5103
  %v5105 = vsel %vm2642, %v5101, %v5104
  %vm5106 = vcmp.ne.s16.totalorder %v4985, 0
  %vm5107 = vcmp.ne.s16.totalorder %v4990, 0
  %vm5108 = vcmp.ne.s16.totalorder %v4995, 0
  %vm5109 = vcmp.ne.s16.totalorder %v5000, 0
  %vm5110 = vcmp.ne.s16.totalorder %v5005, 0
  %vm5111 = vcmp.ne.s16.totalorder %v5010, 0
  %vm5112 = vcmp.ne.s16.totalorder %v5015, 0
  %vm5113 = vcmp.ne.s16.totalorder %v5020, 0
  %vm5114 = vcmp.ne.s16.totalorder %v5025, 0
  %vm5115 = vcmp.ne.s16.totalorder %v5030, 0
  %vm5116 = vcmp.ne.s16.totalorder %v5035, 0
  %vm5117 = vcmp.ne.s16.totalorder %v5040, 0
  %vm5118 = vcmp.ne.s16.totalorder %v5045, 0
  %vm5119 = vcmp.ne.s16.totalorder %v5050, 0
  %vm5120 = vcmp.ne.s16.totalorder %v5055, 0
  %vm5121 = vcmp.ne.s16.totalorder %v5060, 0
  %vm5122 = vcmp.ne.s16.totalorder %v5065, 0
  %vm5123 = vcmp.ne.s16.totalorder %v5070, 0
  %vm5124 = vcmp.ne.s16.totalorder %v5075, 0
  %vm5125 = vcmp.ne.s16.totalorder %v5080, 0
  %vm5126 = vcmp.ne.s16.totalorder %v5085, 0
  %vm5127 = vcmp.ne.s16.totalorder %v5090, 0
  %vm5128 = vcmp.ne.s16.totalorder %v5095, 0
  %vm5129 = vcmp.ne.s16.totalorder %v5100, 0
  %vm5130 = vcmp.ne.s16.totalorder %v5105, 0
  %v5131 = vsel %vm5106, %v4676, 0
  %v5132 = vsel %vm5107, %v4118, 0
  %v5133 = vsel %vm5108, %v4119, 0
  %v5134 = vsel %vm5109, %v4120, 0
  %v5135 = vsel %vm5110, %v4121, 0
  %v5136 = vsel %vm5111, %v4122, 0
  %v5137 = vsel %vm5112, %v4123, 0
  %v5138 = vsel %vm5113, %v4124, 0
  %v5139 = vsel %vm5114, %v4125, 0
  %v5140 = vsel %vm5115, %v4126, 0
  %v5141 = vsel %vm5116, %v4127, 0
  %v5142 = vsel %vm5117, %v4128, 0
  %v5143 = vsel %vm5118, %v4129, 0
  %v5144 = vsel %vm5119, %v4130, 0
  %v5145 = vsel %vm5120, %v4131, 0
  %v5146 = vsel %vm5121, %v4132, 0
  %v5147 = vsel %vm5122, %v4133, 0
  %v5148 = vsel %vm5123, %v4134, 0
  %v5149 = vsel %vm5124, %v4135, 0
  %v5150 = vsel %vm5125, %v4136, 0
  %v5151 = vsel %vm5126, %v4137, 0
  %v5152 = vsel %vm5127, %v4138, 0
  %v5153 = vsel %vm5128, %v4139, 0
  %v5154 = vsel %vm5129, %v4140, 0
  %v5155 = vsel %vm5130, %v4982, 0
  %v5156 = vld [vmem:[%s1 + $0x80] sm:$0xf]
  %v5157 = vld [vmem:[%s1 + $0x84] sm:$0xf]
  %v5158 = vld [vmem:[%s1 + $0x88] sm:$0xf]
  %v5159 = vld [vmem:[%s1 + $0x8c] sm:$0xf]
  %v5185 = vunpack.c.l.b16 %v5131
  %v5186 = vunpack.c.l.b16 %v5132
  %v5187 = vunpack.c.l.b16 %v5133
  %v5188 = vunpack.c.l.b16 %v5134
  %v5189 = vunpack.c.l.b16 %v5135
  %v5190 = vunpack.c.l.b16 %v5136
  %v5191 = vunpack.c.l.b16 %v5137
  %v5192 = vunpack.c.l.b16 %v5138
  %v5193 = vunpack.c.l.b16 %v5139
  %v5194 = vunpack.c.l.b16 %v5140
  %v5195 = vunpack.c.l.b16 %v5141
  %v5196 = vunpack.c.l.b16 %v5142
  %v5197 = vunpack.c.l.b16 %v5143
  %v5198 = vunpack.c.l.b16 %v5144
  %v5199 = vunpack.c.l.b16 %v5145
  %v5200 = vunpack.c.l.b16 %v5146
  %v5201 = vunpack.c.l.b16 %v5147
  %v5202 = vunpack.c.l.b16 %v5148
  %v5203 = vunpack.c.l.b16 %v5149
  %v5204 = vunpack.c.l.b16 %v5150
  %v5205 = vunpack.c.l.b16 %v5151
  %v5206 = vunpack.c.l.b16 %v5152
  %v5207 = vunpack.c.l.b16 %v5153
  %v5208 = vunpack.c.l.b16 %v5154
  %v5209 = vunpack.c.l.b16 %v5155
  %v5210 = vpack.c.b16 %v5186, %v5185
  %v5211 = vpack.c.b16 %v5188, %v5187
  %v5212 = vpack.c.b16 %v5190, %v5189
  %v5213 = vpack.c.b16 %v5192, %v5191
  %v5214 = vpack.c.b16 %v5194, %v5193
  %v5215 = vpack.c.b16 %v5196, %v5195
  %v5216 = vpack.c.b16 %v5198, %v5197
  %v5217 = vpack.c.b16 %v5200, %v5199
  %v5218 = vpack.c.b16 %v5202, %v5201
  %v5219 = vpack.c.b16 %v5204, %v5203
  %v5220 = vpack.c.b16 %v5206, %v5205
  %v5221 = vpack.c.b16 %v5208, %v5207
  %v5222 = vpack.c.b16 %v5209, %v5209
  %v5224 = vshrl.u32 %v5210, 16
  %v5226 = vrot.slane %v5224, 1
  %v5227 = vshll.u32 %v5210, 16
  %v5229 = vrot.slane %v5227, 2
  %v5230 = vor.u32 %v5226, %v5229
  %v5232 = vshrl.u32 %v5211, 16
  %v5234 = vrot.slane %v5232, 1
  %v5235 = vshll.u32 %v5211, 16
  %v5237 = vrot.slane %v5235, 2
  %v5238 = vor.u32 %v5234, %v5237
  %v5239 = vsel %vm2883, %v5230, %v5238
  %v5241 = vshrl.u32 %v5212, 16
  %v5243 = vrot.slane %v5241, 1
  %v5244 = vshll.u32 %v5212, 16
  %v5246 = vrot.slane %v5244, 2
  %v5247 = vor.u32 %v5243, %v5246
  %v5248 = vsel %vm2883, %v5238, %v5247
  %v5250 = vshrl.u32 %v5213, 16
  %v5252 = vrot.slane %v5250, 1
  %v5253 = vshll.u32 %v5213, 16
  %v5255 = vrot.slane %v5253, 2
  %v5256 = vor.u32 %v5252, %v5255
  %v5257 = vsel %vm2883, %v5247, %v5256
  %v5259 = vshrl.u32 %v5214, 16
  %v5261 = vrot.slane %v5259, 1
  %v5262 = vshll.u32 %v5214, 16
  %v5264 = vrot.slane %v5262, 2
  %v5265 = vor.u32 %v5261, %v5264
  %v5266 = vsel %vm2883, %v5256, %v5265
  %v5268 = vshrl.u32 %v5215, 16
  %v5270 = vrot.slane %v5268, 1
  %v5271 = vshll.u32 %v5215, 16
  %v5273 = vrot.slane %v5271, 2
  %v5274 = vor.u32 %v5270, %v5273
  %v5275 = vsel %vm2883, %v5265, %v5274
  %v5277 = vshrl.u32 %v5216, 16
  %v5279 = vrot.slane %v5277, 1
  %v5280 = vshll.u32 %v5216, 16
  %v5282 = vrot.slane %v5280, 2
  %v5283 = vor.u32 %v5279, %v5282
  %v5284 = vsel %vm2883, %v5274, %v5283
  %v5286 = vshrl.u32 %v5217, 16
  %v5288 = vrot.slane %v5286, 1
  %v5289 = vshll.u32 %v5217, 16
  %v5291 = vrot.slane %v5289, 2
  %v5292 = vor.u32 %v5288, %v5291
  %v5293 = vsel %vm2883, %v5283, %v5292
  %v5295 = vshrl.u32 %v5218, 16
  %v5297 = vrot.slane %v5295, 1
  %v5298 = vshll.u32 %v5218, 16
  %v5300 = vrot.slane %v5298, 2
  %v5301 = vor.u32 %v5297, %v5300
  %v5302 = vsel %vm2883, %v5292, %v5301
  %v5304 = vshrl.u32 %v5219, 16
  %v5306 = vrot.slane %v5304, 1
  %v5307 = vshll.u32 %v5219, 16
  %v5309 = vrot.slane %v5307, 2
  %v5310 = vor.u32 %v5306, %v5309
  %v5311 = vsel %vm2883, %v5301, %v5310
  %v5313 = vshrl.u32 %v5220, 16
  %v5315 = vrot.slane %v5313, 1
  %v5316 = vshll.u32 %v5220, 16
  %v5318 = vrot.slane %v5316, 2
  %v5319 = vor.u32 %v5315, %v5318
  %v5320 = vsel %vm2883, %v5310, %v5319
  %v5322 = vshrl.u32 %v5221, 16
  %v5324 = vrot.slane %v5322, 1
  %v5325 = vshll.u32 %v5221, 16
  %v5327 = vrot.slane %v5325, 2
  %v5328 = vor.u32 %v5324, %v5327
  %v5329 = vsel %vm2883, %v5319, %v5328
  %v5331 = vshrl.u32 %v5222, 16
  %v5333 = vrot.slane %v5331, 1
  %v5334 = vshll.u32 %v5222, 16
  %v5336 = vrot.slane %v5334, 2
  %v5337 = vor.u32 %v5333, %v5336
  %v5338 = vsel %vm2883, %v5328, %v5337
  %v5343 = vunpack.c.l.b16 %v5156
  %v5344 = vunpack.c.l.b16 %v5157
  %v5345 = vunpack.c.l.b16 %v5158
  %v5346 = vunpack.c.l.b16 %v5159
  %v5347 = vpack.c.b16 %v5344, %v5343
  %v5348 = vpack.c.b16 %v5346, %v5345
  %v5352 = vsel %vm1228, %v5239, 0
  %v5355 = vsel %vm1228, %v5248, 0
  %v5358 = vsel %vm1228, %v5257, 0
  %v5361 = vsel %vm1228, %v5266, 0
  %v5364 = vsel %vm1228, %v5275, 0
  %v5367 = vsel %vm1228, %v5284, 0
  %v5370 = vsel %vm1228, %v5293, 0
  %v5373 = vsel %vm1228, %v5302, 0
  %v5376 = vsel %vm1228, %v5311, 0
  %v5379 = vsel %vm1228, %v5320, 0
  %v5382 = vsel %vm1228, %v5329, 0
  %v5385 = vsel %vm1228, %v5338, 0
  %v5388 = vsel %vm1228, %v5337, 0
  %5390 = vmatprep.subr.bf16.mxu0 0
  %5391 = vmatpush1.bf16.msra.mxu0 %v5347
  %5392 = vmatprep.subr.bf16.mxu0 0
  %5393 = vmatpush1.bf16.msra.mxu0 %v5348
  %5394 = vmatprep.subr.bf16.mxu0 0
  %5395 = vmatpush1.bf16.msra.mxu0 0
  %5396 = vmatprep.subr.bf16.mxu0 0
  %5397 = vmatpush1.bf16.msra.mxu0 0
  %5398 = vmatprep.subr.bf16.mxu0 0
  %5399 = vmatpush1.bf16.msra.mxu0 0
  %5400 = vmatprep.subr.bf16.mxu0 0
  %5401 = vmatpush1.bf16.msra.mxu0 0
  %5402 = vmatprep.subr.bf16.mxu0 0
  %5403 = vmatpush1.bf16.msra.mxu0 0
  %5404 = vmatprep.subr.bf16.mxu0 0
  %5405 = vmatpush1.bf16.msra.mxu0 0
  %5406 = vmatprep.subr.bf16.mxu0 0
  %5407 = vmatpush1.bf16.msra.mxu0 0
  %5408 = vmatprep.subr.bf16.mxu0 0
  %5409 = vmatpush1.bf16.msra.mxu0 0
  %5410 = vmatprep.subr.bf16.mxu0 0
  %5411 = vmatpush1.bf16.msra.mxu0 0
  %5412 = vmatprep.subr.bf16.mxu0 0
  %5413 = vmatpush1.bf16.msra.mxu0 0
  %5414 = vmatprep.subr.bf16.mxu0 0
  %5415 = vmatpush1.bf16.msra.mxu0 0
  %5416 = vmatprep.subr.bf16.mxu0 0
  %5417 = vmatpush1.bf16.msra.mxu0 0
  %5418 = vmatprep.subr.bf16.mxu0 0
  %5419 = vmatpush1.bf16.msra.mxu0 0
  %5420 = vmatprep.subr.bf16.mxu0 0
  %5421 = vmatpush1.bf16.msra.mxu0 0
  %5422 = vmatprep.mubr.bf16.mxu0 0
  %5423 = vmatmul.mubr.bf16.gmra.mrb[0].mxu0 %v5352
  %v5424 = vpop.f32.mrb[0].mxu0
  %v5425 = vadd.f32 0.0, %v5424
  %v5426 = vpop.f32.mrb[0].mxu0
  %v5427 = vpop.f32.mrb[0].mxu0
  %v5428 = vadd.f32 0.0, %v5427
  %v5429 = vpop.f32.mrb[0].mxu0
  %5430 = vmatprep.mubr.bf16.mxu0 0
  %5431 = vmatmul.mubr.bf16.gmra.mrb[0].mxu0 %v5355
  %v5432 = vpop.f32.mrb[0].mxu0
  %v5433 = vadd.f32 0.0, %v5432
  %v5434 = vpop.f32.mrb[0].mxu0
  %v5435 = vpop.f32.mrb[0].mxu0
  %v5436 = vadd.f32 0.0, %v5435
  %v5437 = vpop.f32.mrb[0].mxu0
  %5438 = vmatprep.mubr.bf16.mxu0 0
  %5439 = vmatmul.mubr.bf16.gmra.mrb[0].mxu0 %v5358
  %v5440 = vpop.f32.mrb[0].mxu0
  %v5441 = vadd.f32 0.0, %v5440
  %v5442 = vpop.f32.mrb[0].mxu0
  %v5443 = vpop.f32.mrb[0].mxu0
  %v5444 = vadd.f32 0.0, %v5443
  %v5445 = vpop.f32.mrb[0].mxu0
  %5446 = vmatprep.mubr.bf16.mxu0 0
  %5447 = vmatmul.mubr.bf16.gmra.mrb[0].mxu0 %v5361
  %v5448 = vpop.f32.mrb[0].mxu0
  %v5449 = vadd.f32 0.0, %v5448
  %v5450 = vpop.f32.mrb[0].mxu0
  %v5451 = vpop.f32.mrb[0].mxu0
  %v5452 = vadd.f32 0.0, %v5451
  %v5453 = vpop.f32.mrb[0].mxu0
  %5454 = vmatprep.mubr.bf16.mxu0 0
  %5455 = vmatmul.mubr.bf16.gmra.mrb[0].mxu0 %v5364
  %v5456 = vpop.f32.mrb[0].mxu0
  %v5457 = vadd.f32 0.0, %v5456
  %v5458 = vpop.f32.mrb[0].mxu0
  %v5459 = vpop.f32.mrb[0].mxu0
  %v5460 = vadd.f32 0.0, %v5459
  %v5461 = vpop.f32.mrb[0].mxu0
  %5462 = vmatprep.mubr.bf16.mxu0 0
  %5463 = vmatmul.mubr.bf16.gmra.mrb[0].mxu0 %v5367
  %v5464 = vpop.f32.mrb[0].mxu0
  %v5465 = vadd.f32 0.0, %v5464
  %v5466 = vpop.f32.mrb[0].mxu0
  %v5467 = vpop.f32.mrb[0].mxu0
  %v5468 = vadd.f32 0.0, %v5467
  %v5469 = vpop.f32.mrb[0].mxu0
  %5470 = vmatprep.mubr.bf16.mxu0 0
  %5471 = vmatmul.mubr.bf16.gmra.mrb[0].mxu0 %v5370
  %v5472 = vpop.f32.mrb[0].mxu0
  %v5473 = vadd.f32 0.0, %v5472
  %v5474 = vpop.f32.mrb[0].mxu0
  %v5475 = vpop.f32.mrb[0].mxu0
  %v5476 = vadd.f32 0.0, %v5475
  %v5477 = vpop.f32.mrb[0].mxu0
  %5478 = vmatprep.mubr.bf16.mxu0 0
  %5479 = vmatmul.mubr.bf16.gmra.mrb[0].mxu0 %v5373
  %v5480 = vpop.f32.mrb[0].mxu0
  %v5481 = vadd.f32 0.0, %v5480
  %v5482 = vpop.f32.mrb[0].mxu0
  %v5483 = vpop.f32.mrb[0].mxu0
  %v5484 = vadd.f32 0.0, %v5483
  %v5485 = vpop.f32.mrb[0].mxu0
  %5486 = vmatprep.mubr.bf16.mxu0 0
  %5487 = vmatmul.mubr.bf16.gmra.mrb[0].mxu0 %v5376
  %v5488 = vpop.f32.mrb[0].mxu0
  %v5489 = vadd.f32 0.0, %v5488
  %v5490 = vpop.f32.mrb[0].mxu0
  %v5491 = vpop.f32.mrb[0].mxu0
  %v5492 = vadd.f32 0.0, %v5491
  %v5493 = vpop.f32.mrb[0].mxu0
  %5494 = vmatprep.mubr.bf16.mxu0 0
  %5495 = vmatmul.mubr.bf16.gmra.mrb[0].mxu0 %v5379
  %v5496 = vpop.f32.mrb[0].mxu0
  %v5497 = vadd.f32 0.0, %v5496
  %v5498 = vpop.f32.mrb[0].mxu0
  %v5499 = vpop.f32.mrb[0].mxu0
  %v5500 = vadd.f32 0.0, %v5499
  %v5501 = vpop.f32.mrb[0].mxu0
  %5502 = vmatprep.mubr.bf16.mxu0 0
  %5503 = vmatmul.mubr.bf16.gmra.mrb[0].mxu0 %v5382
  %v5504 = vpop.f32.mrb[0].mxu0
  %v5505 = vadd.f32 0.0, %v5504
  %v5506 = vpop.f32.mrb[0].mxu0
  %v5507 = vpop.f32.mrb[0].mxu0
  %v5508 = vadd.f32 0.0, %v5507
  %v5509 = vpop.f32.mrb[0].mxu0
  %5510 = vmatprep.mubr.bf16.mxu0 0
  %5511 = vmatmul.mubr.bf16.gmra.mrb[0].mxu0 %v5385
  %v5512 = vpop.f32.mrb[0].mxu0
  %v5513 = vadd.f32 0.0, %v5512
  %v5514 = vpop.f32.mrb[0].mxu0
  %v5515 = vpop.f32.mrb[0].mxu0
  %v5516 = vadd.f32 0.0, %v5515
  %v5517 = vpop.f32.mrb[0].mxu0
  %5518 = vmatprep.mubr.bf16.mxu0 0
  %5519 = vmatmul.mubr.bf16.gmra.mrb[0].mxu0 %v5388
  %v5520 = vpop.f32.mrb[0].mxu0
  %v5521 = vadd.f32 0.0, %v5520
  %v5522 = vpop.f32.mrb[0].mxu0
  %v5523 = vpop.f32.mrb[0].mxu0
  %v5524 = vpop.f32.mrb[0].mxu0
  %5525 = vdwg.mxu0
  %v5526 = vadd.f32 %v4957, %v5425
  %v5527 = vadd.f32 %v4958, %v5428
  %v5528 = vadd.f32 %v4959, %v5433
  %v5529 = vadd.f32 %v4960, %v5436
  %v5530 = vadd.f32 %v4961, %v5441
  %v5531 = vadd.f32 %v4962, %v5444
  %v5532 = vadd.f32 %v4963, %v5449
  %v5533 = vadd.f32 %v4964, %v5452
  %v5534 = vadd.f32 %v4965, %v5457
  %v5535 = vadd.f32 %v4966, %v5460
  %v5536 = vadd.f32 %v4967, %v5465
  %v5537 = vadd.f32 %v4968, %v5468
  %v5538 = vadd.f32 %v4969, %v5473
  %v5539 = vadd.f32 %v4970, %v5476
  %v5540 = vadd.f32 %v4971, %v5481
  %v5541 = vadd.f32 %v4972, %v5484
  %v5542 = vadd.f32 %v4973, %v5489
  %v5543 = vadd.f32 %v4974, %v5492
  %v5544 = vadd.f32 %v4975, %v5497
  %v5545 = vadd.f32 %v4976, %v5500
  %v5546 = vadd.f32 %v4977, %v5505
  %v5547 = vadd.f32 %v4978, %v5508
  %v5548 = vadd.f32 %v4979, %v5513
  %v5549 = vadd.f32 %v4980, %v5516
  %v5550 = vadd.f32 %v4981, %v5521
  %v5551 = vmax.f32 %v5526, 0.0
  %v5552 = vmax.f32 %v5527, 0.0
  %v5553 = vmax.f32 %v5528, 0.0
  %v5554 = vmax.f32 %v5529, 0.0
  %v5555 = vmax.f32 %v5530, 0.0
  %v5556 = vmax.f32 %v5531, 0.0
  %v5557 = vmax.f32 %v5532, 0.0
  %v5558 = vmax.f32 %v5533, 0.0
  %v5559 = vmax.f32 %v5534, 0.0
  %v5560 = vmax.f32 %v5535, 0.0
  %v5561 = vmax.f32 %v5536, 0.0
  %v5562 = vmax.f32 %v5537, 0.0
  %v5563 = vmax.f32 %v5538, 0.0
  %v5564 = vmax.f32 %v5539, 0.0
  %v5565 = vmax.f32 %v5540, 0.0
  %v5566 = vmax.f32 %v5541, 0.0
  %v5567 = vmax.f32 %v5542, 0.0
  %v5568 = vmax.f32 %v5543, 0.0
  %v5569 = vmax.f32 %v5544, 0.0
  %v5570 = vmax.f32 %v5545, 0.0
  %v5571 = vmax.f32 %v5546, 0.0
  %v5572 = vmax.f32 %v5547, 0.0
  %v5573 = vmax.f32 %v5548, 0.0
  %v5574 = vmax.f32 %v5549, 0.0
  %v5575 = vmax.f32 %v5550, 0.0
  %v5576 = vpack.c.bf16 %v5552, %v5551
  %v5577 = vpack.c.bf16 %v5554, %v5553
  %v5578 = vpack.c.bf16 %v5556, %v5555
  %v5579 = vpack.c.bf16 %v5558, %v5557
  %v5580 = vpack.c.bf16 %v5560, %v5559
  %v5581 = vpack.c.bf16 %v5562, %v5561
  %v5582 = vpack.c.bf16 %v5564, %v5563
  %v5583 = vpack.c.bf16 %v5566, %v5565
  %v5584 = vpack.c.bf16 %v5568, %v5567
  %v5585 = vpack.c.bf16 %v5570, %v5569
  %v5586 = vpack.c.bf16 %v5572, %v5571
  %v5587 = vpack.c.bf16 %v5574, %v5573
  %v5588 = vpack.c.bf16 %v5575, %v5575
  %v5602 = vunpack.c.l.b16 %v5576
  %v5603 = vunpack.c.h.b16 %v5576
  %v5604 = vunpack.c.l.b16 %v5577
  %v5605 = vunpack.c.h.b16 %v5577
  %v5606 = vunpack.c.l.b16 %v5578
  %v5607 = vunpack.c.h.b16 %v5578
  %v5608 = vunpack.c.l.b16 %v5579
  %v5609 = vunpack.c.h.b16 %v5579
  %v5610 = vunpack.c.l.b16 %v5580
  %v5611 = vunpack.c.h.b16 %v5580
  %v5612 = vunpack.c.l.b16 %v5581
  %v5613 = vunpack.c.h.b16 %v5581
  %v5614 = vunpack.c.l.b16 %v5582
  %v5615 = vunpack.c.h.b16 %v5582
  %v5616 = vunpack.c.l.b16 %v5583
  %v5617 = vunpack.c.h.b16 %v5583
  %v5618 = vunpack.c.l.b16 %v5584
  %v5619 = vunpack.c.h.b16 %v5584
  %v5620 = vunpack.c.l.b16 %v5585
  %v5621 = vunpack.c.h.b16 %v5585
  %v5622 = vunpack.c.l.b16 %v5586
  %v5623 = vunpack.c.h.b16 %v5586
  %v5624 = vunpack.c.l.b16 %v5587
  %v5625 = vunpack.c.h.b16 %v5587
  %v5626 = vunpack.c.l.b16 %v5588
  %v5627 = vpack.c.b16 %v5602, %v5602
  %v5628 = vpack.c.b16 %v5603, %v5603
  %v5629 = vpack.c.b16 %v5604, %v5604
  %v5630 = vpack.c.b16 %v5605, %v5605
  %v5631 = vpack.c.b16 %v5606, %v5606
  %v5632 = vpack.c.b16 %v5607, %v5607
  %v5633 = vpack.c.b16 %v5608, %v5608
  %v5634 = vpack.c.b16 %v5609, %v5609
  %v5635 = vpack.c.b16 %v5610, %v5610
  %v5636 = vpack.c.b16 %v5611, %v5611
  %v5637 = vpack.c.b16 %v5612, %v5612
  %v5638 = vpack.c.b16 %v5613, %v5613
  %v5639 = vpack.c.b16 %v5614, %v5614
  %v5640 = vpack.c.b16 %v5615, %v5615
  %v5641 = vpack.c.b16 %v5616, %v5616
  %v5642 = vpack.c.b16 %v5617, %v5617
  %v5643 = vpack.c.b16 %v5618, %v5618
  %v5644 = vpack.c.b16 %v5619, %v5619
  %v5645 = vpack.c.b16 %v5620, %v5620
  %v5646 = vpack.c.b16 %v5621, %v5621
  %v5647 = vpack.c.b16 %v5622, %v5622
  %v5648 = vpack.c.b16 %v5623, %v5623
  %v5649 = vpack.c.b16 %v5624, %v5624
  %v5650 = vpack.c.b16 %v5625, %v5625
  %v5651 = vpack.c.b16 %v5626, %v5626
  %vm5677 = vcmask 388096
  %5678 = vst.msk [vmem:[%s3] sm:$0xf] %vm5677, %v5627
  %5679 = vst.msk [vmem:[%s3 + $0x4] sm:$0xf] %vm5677, %v5628
  %5680 = vst.msk [vmem:[%s3 + $0x8] sm:$0xf] %vm5677, %v5629
  %5681 = vst.msk [vmem:[%s3 + $0xc] sm:$0xf] %vm5677, %v5630
  %5682 = vst.msk [vmem:[%s3 + $0x10] sm:$0xf] %vm5677, %v5631
  %5683 = vst.msk [vmem:[%s3 + $0x14] sm:$0xf] %vm5677, %v5632
  %5684 = vst.msk [vmem:[%s3 + $0x18] sm:$0xf] %vm5677, %v5633
  %5685 = vst.msk [vmem:[%s3 + $0x1c] sm:$0xf] %vm5677, %v5634
  %5686 = vst.msk [vmem:[%s3 + $0x20] sm:$0xf] %vm5677, %v5635
  %5687 = vst.msk [vmem:[%s3 + $0x24] sm:$0xf] %vm5677, %v5636
  %5688 = vst.msk [vmem:[%s3 + $0x28] sm:$0xf] %vm5677, %v5637
  %5689 = vst.msk [vmem:[%s3 + $0x2c] sm:$0xf] %vm5677, %v5638
  %5690 = vst.msk [vmem:[%s3 + $0x30] sm:$0xf] %vm5677, %v5639
  %5691 = vst.msk [vmem:[%s3 + $0x34] sm:$0xf] %vm5677, %v5640
  %5692 = vst.msk [vmem:[%s3 + $0x38] sm:$0xf] %vm5677, %v5641
  %5693 = vst.msk [vmem:[%s3 + $0x3c] sm:$0xf] %vm5677, %v5642
  %5694 = vst.msk [vmem:[%s3 + $0x40] sm:$0xf] %vm5677, %v5643
  %5695 = vst.msk [vmem:[%s3 + $0x44] sm:$0xf] %vm5677, %v5644
  %5696 = vst.msk [vmem:[%s3 + $0x48] sm:$0xf] %vm5677, %v5645
  %5697 = vst.msk [vmem:[%s3 + $0x4c] sm:$0xf] %vm5677, %v5646
  %5698 = vst.msk [vmem:[%s3 + $0x50] sm:$0xf] %vm5677, %v5647
  %5699 = vst.msk [vmem:[%s3 + $0x54] sm:$0xf] %vm5677, %v5648
  %5700 = vst.msk [vmem:[%s3 + $0x58] sm:$0xf] %vm5677, %v5649
  %5701 = vst.msk [vmem:[%s3 + $0x5c] sm:$0xf] %vm5677, %v5650
  %vm5702 = vcmask 386048
  %5703 = vst.msk [vmem:[%s3 + $0x60] sm:$0x3] %vm5702, %v5651
  // Predicated region
  $region14: #{tpu_custom_call.1} parent=0 // pred_check
    _
  $region15: #{tpu_custom_call.1} parent=0 // pred_check_branch
    %5705 = sbr.rel (0) target = $region17
  $region16: #{tpu_custom_call.1} parent=0 // pred_region
    _
  $region17: #{tpu_custom_call.1} parent=0 // pred_fallthru
    _
  // Predicated region
  $region18: #{tpu_custom_call.1} parent=0 // pred_check
    _
  $region19: #{tpu_custom_call.1} parent=0 // pred_check_branch
    %5707 = sbr.rel (0) target = $region21
  $region20: #{tpu_custom_call.1} parent=0 // pred_region
    _
  $region21: #{tpu_custom_call.1} parent=0 // pred_fallthru
    _

</llo_original>
